<compile_context>
chip_gen: v7x
topology: tpu7x:2x2x1
jax: 0.10.0
libtpu: 0.0.40
codegen_flags: <defaults>
</compile_context>

<pallas_src>
import jax
import jax.numpy as jnp
from jax.experimental import pallas as pl
from jax.experimental.pallas import tpu as pltpu

# ---------------- model dims (match DeepFakeDetector defaults) ----------------
LATENT = 2048          # latent_dim
HIDDEN = 64            # hidden_dim
NUM_CLASSES = 2
GATE_DIM = 4 * HIDDEN  # i, f, o, g after offline re-layout


# ------- kernel 1: stand-in CNN + avgpool + fused LSTM input projection -------
def _feat_proj_kernel(x_ref, wc_ref, bc_ref, wih_ref, b_ref, o_ref, pooled_sc):
    # x_ref:     (S, HW, C)     bf16  one batch element, all its frames
    # wc_ref:    (C, LATENT)    bf16
    # bc_ref:    (1, LATENT)    f32
    # wih_ref:   (LATENT, 4H)   f32   gate columns ordered (i, f, o, g)
    # b_ref:     (1, 4H)        f32   b_ih + b_hh, gate order (i, f, o, g)
    # o_ref:     (S, 4H)        f32   per-timestep gate pre-activations
    # pooled_sc: (S, LATENT)    f32   scratch (pooled features of this batch elt)
    n_frames = x_ref.shape[0]

    @pl.loop(0, n_frames)
    def _(s):
        x_s = x_ref[s]                                         # (HW, C)
        act = jnp.dot(x_s, wc_ref[...],
                      preferred_element_type=jnp.float32) + bc_ref[...]
        act = jnp.maximum(act, 0.0)                            # ReLU (stand-in CNN)
        # AdaptiveAvgPool2d((1, 1)) == mean over the HW axis.
        pooled_sc[pl.ds(s, 1), :] = jnp.mean(act, axis=0, keepdims=True)

    # LSTM input projection, hoisted out of the recurrence: one batched
    # (S, LATENT) @ (LATENT, 4H) matmul per batch element.
    o_ref[...] = (jnp.dot(pooled_sc[...], wih_ref[...],
                          preferred_element_type=jnp.float32) + b_ref[...])


def feature_projection(x_cl, wc, bc, wih, b_lstm):
    """x_cl: (B, S, HW, C) -> gate pre-activations (B, S, GATE_DIM)."""
    B, S, HW, C = x_cl.shape
    return pl.pallas_call(
        _feat_proj_kernel,
        out_shape=jax.ShapeDtypeStruct((B, S, GATE_DIM), jnp.float32),
        grid_spec=pltpu.PrefetchScalarGridSpec(
            num_scalar_prefetch=0,
            grid=(B,),
            in_specs=[
                pl.BlockSpec((None, S, HW, C), lambda i: (i, 0, 0, 0)),
                pl.BlockSpec((C, LATENT), lambda i: (0, 0)),
                pl.BlockSpec((1, LATENT), lambda i: (0, 0)),
                pl.BlockSpec((LATENT, GATE_DIM), lambda i: (0, 0)),
                pl.BlockSpec((1, GATE_DIM), lambda i: (0, 0)),
            ],
            out_specs=pl.BlockSpec((None, S, GATE_DIM), lambda i: (i, 0, 0)),
            scratch_shapes=[pltpu.VMEM((S, LATENT), jnp.float32)],
        ),
        compiler_params=pltpu.CompilerParams(
            dimension_semantics=("parallel",)),   # shards over v7x's 2 TCs
    )(x_cl, wc, bc, wih, b_lstm)


# ------- kernel 2: LSTM recurrence + temporal mean + dropout(eval) + FC -------
def _lstm_head_kernel(gates_ref, whh_ref, wfc_ref, bfc_ref, o_ref):
    # gates_ref: (S, B, 4H) f32  time-major precomputed x_t @ W_ih + bias
    # whh_ref:   (H, 4H)    f32  gate columns ordered (i, f, o, g)
    # wfc_ref:   (H, NUM_CLASSES), bfc_ref: (1, NUM_CLASSES)
    s_len, bsz, _ = gates_ref.shape

    def step(t, carry):
        h, c, h_sum = carry
        g = gates_ref[t] + jnp.dot(h, whh_ref[...],
                                   preferred_element_type=jnp.float32)
        sig = jax.nn.sigmoid(g[:, :3 * HIDDEN])      # [ i | f | o ] in one slice
        i_g = sig[:, 0 * HIDDEN:1 * HIDDEN]
        f_g = sig[:, 1 * HIDDEN:2 * HIDDEN]
        o_g = sig[:, 2 * HIDDEN:3 * HIDDEN]
        c_g = jnp.tanh(g[:, 3 * HIDDEN:4 * HIDDEN])  # cell candidate
        c_new = f_g * c + i_g * c_g
        h_new = o_g * jnp.tanh(c_new)
        return h_new, c_new, h_sum + h_new

    zeros = jnp.zeros((bsz, HIDDEN), jnp.float32)
    _, _, h_sum = jax.lax.fori_loop(0, s_len, step, (zeros, zeros, zeros),
                                    unroll=True)
    mean_h = h_sum * (1.0 / s_len)                   # torch.mean(lstm_out, dim=1)
    # Dropout(p=0.8): inference-mode identity.
    o_ref[...] = (jnp.dot(mean_h, wfc_ref[...],
                          preferred_element_type=jnp.float32) + bfc_ref[...])


def lstm_head(gates_sb, whh, wfc, bfc):
    """gates_sb: (S, B, GATE_DIM) -> logits (B, NUM_CLASSES)."""
    _, b, _ = gates_sb.shape
    # Single grid-less invocation: all operands (~80 KB) live fully in VMEM.
    return pl.pallas_call(
        _lstm_head_kernel,
        out_shape=jax.ShapeDtypeStruct((b, NUM_CLASSES), jnp.float32),
    )(gates_sb, whh, wfc, bfc)


# ---------------- full forward (glue in plain JAX) ----------------
def _reorder_gate_cols(w):
    """PyTorch LSTM gate order (i, f, g, o) -> kernel order (i, f, o, g)."""
    return jnp.concatenate(
        [w[:, :2 * HIDDEN], w[:, 3 * HIDDEN:], w[:, 2 * HIDDEN:3 * HIDDEN]],
        axis=1)


def deepfake_detector_forward(x, params):
    """x: (B, S, C, H, W) float32 (PyTorch NCHW per frame) -> (B, NUM_CLASSES)."""
    B, S, C, H, W = x.shape
    # Channels-last + flattened spatial, bf16 for the MXU feature matmul.
    # TODO(synk): at real image sizes fold this relayout into the input pipeline
    # (or contract over C in-kernel) to avoid the extra HBM pass.
    x_cl = jnp.transpose(x, (0, 1, 3, 4, 2)).reshape(B, S, H * W, C)
    x_cl = x_cl.astype(jnp.bfloat16)

    # One-time weight re-layout so the recurrent kernel uses 2 gate slices.
    wih = _reorder_gate_cols(params["wih"])
    whh = _reorder_gate_cols(params["whh"])
    b_l = _reorder_gate_cols(params["b_lstm"])

    gates_bs = feature_projection(x_cl, params["wc"].astype(jnp.bfloat16),
                                  params["bc"], wih, b_l)        # (B, S, 4H)
    gates_sb = jnp.swapaxes(gates_bs, 0, 1)                      # (S, B, 4H), tiny
    return lstm_head(gates_sb, whh, params["wfc"], params["bfc"])


def init_params(key, c):
    ks = jax.random.split(key, 6)
    scale = 0.02
    # LSTM weights kept in the PyTorch contract: columns ordered (i, f, g, o),
    # b_lstm = b_ih + b_hh.  (Re-layout to (i, f, o, g) happens in the wrapper.)
    return {
        "wc":     scale * jax.random.normal(ks[0], (c, LATENT), jnp.float32),
        "bc":     scale * jax.random.normal(ks[1], (1, LATENT), jnp.float32),
        "wih":    scale * jax.random.normal(ks[2], (LATENT, GATE_DIM), jnp.float32),
        "whh":    scale * jax.random.normal(ks[3], (HIDDEN, GATE_DIM), jnp.float32),
        "b_lstm": jnp.zeros((1, GATE_DIM), jnp.float32),
        "wfc":    scale * jax.random.normal(ks[4], (HIDDEN, NUM_CLASSES), jnp.float32),
        "bfc":    scale * jax.random.normal(ks[5], (1, NUM_CLASSES), jnp.float32),
    }


if __name__ == "__main__":
    key = jax.random.PRNGKey(0)
    k_x, k_p = jax.random.split(key)

    B, S, C, H, W = 2, 8, 4, 16, 16
    x = jax.random.normal(k_x, (B, S, C, H, W), jnp.float32)
    params = init_params(k_p, C)

    logits = jax.jit(deepfake_detector_forward)(x, params)
    jax.block_until_ready(logits)
    assert logits.shape == (B, NUM_CLASSES)
    print("KERNEL_OK")
</pallas_src>

<mosaic_0001>
module attributes {stable_mosaic.version = 11 : i64} {
  func.func @_feat_proj_kernel(%arg0: i32, %arg1: memref<1x8x256x4xbf16, #tpu.memory_space<vmem>>, %arg2: memref<4x2048xbf16, #tpu.memory_space<vmem>>, %arg3: memref<1x2048xf32, #tpu.memory_space<vmem>>, %arg4: memref<2048x256xf32, #tpu.memory_space<vmem>>, %arg5: memref<1x256xf32, #tpu.memory_space<vmem>>, %arg6: memref<1x8x256xf32, #tpu.memory_space<vmem>>, %arg7: memref<8x2048xf32, #tpu.memory_space<vmem>>) attributes {dimension_semantics = [#tpu.dimension_semantics<parallel>], iteration_bounds = array<i64: 2>, scalar_prefetch = 0 : i64, scratch_operands = 1 : i64, tpu.core_type = #tpu.core_type<tc>, window_params = [{transform_indices = @transform_0, window_bounds = array<i64: 1, 8, 256, 4>}, {pipeline_mode = #tpu.pipeline_mode<synchronous>, transform_indices = @transform_1, window_bounds = array<i64: 4, 2048>}, {pipeline_mode = #tpu.pipeline_mode<synchronous>, transform_indices = @transform_2, window_bounds = array<i64: 1, 2048>}, {pipeline_mode = #tpu.pipeline_mode<synchronous>, transform_indices = @transform_3, window_bounds = array<i64: 2048, 256>}, {pipeline_mode = #tpu.pipeline_mode<synchronous>, transform_indices = @transform_4, window_bounds = array<i64: 1, 256>}, {transform_indices = @transform_5, window_bounds = array<i64: 1, 8, 256>}]} {
    %c0_i32 = arith.constant 0 : i32
    %c8_i32 = arith.constant 8 : i32
    %0 = arith.addi %c0_i32, %c8_i32 : i32
    %c1_i32 = arith.constant 1 : i32
    scf.for %arg8 = %c0_i32 to %0 step %c1_i32  : i32 {
      %c1_i32_9 = arith.constant 1 : i32
      %10 = arith.muli %arg8, %c1_i32_9 : i32
      %c0_i32_10 = arith.constant 0 : i32
      %11 = arith.addi %c0_i32_10, %10 : i32
      %c0_11 = arith.constant 0 : index
      %12 = arith.index_cast %11 : i32 to index
      %c0_12 = arith.constant 0 : index
      %c0_13 = arith.constant 0 : index
      %13 = vector.load %arg1[%c0_11, %12, %c0_12, %c0_13] : memref<1x8x256x4xbf16, #tpu.memory_space<vmem>>, vector<1x1x256x4xbf16>
      %14 = vector.shape_cast %13 : vector<1x1x256x4xbf16> to vector<256x4xbf16>
      %c0_14 = arith.constant 0 : index
      %c0_15 = arith.constant 0 : index
      %15 = vector.load %arg2[%c0_14, %c0_15] : memref<4x2048xbf16, #tpu.memory_space<vmem>>, vector<4x2048xbf16>
      %cst_16 = arith.constant dense<0.000000e+00> : vector<256x2048xf32>
      %16 = tpu.matmul %14, %15, %cst_16 {dimension_numbers = #tpu.dot_dimension_numbers<[1], [0], [0], [1], [0, 0, 1, 1], [], []>} : vector<256x4xbf16>, vector<4x2048xbf16>, vector<256x2048xf32> -> vector<256x2048xf32>
      %c0_17 = arith.constant 0 : index
      %c0_18 = arith.constant 0 : index
      %17 = vector.load %arg3[%c0_17, %c0_18] : memref<1x2048xf32, #tpu.memory_space<vmem>>, vector<1x2048xf32>
      %18 = vector.broadcast %17 : vector<1x2048xf32> to vector<256x2048xf32>
      %19 = arith.addf %16, %18 : vector<256x2048xf32>
      %cst_19 = arith.constant 0.000000e+00 : f32
      %20 = vector.broadcast %cst_19 : f32 to vector<256x2048xf32>
      %21 = arith.maximumf %19, %20 : vector<256x2048xf32>
      %cst_20 = arith.constant dense<0.000000e+00> : vector<2048xf32>
      %22 = vector.multi_reduction <add>, %21, %cst_20 [0] : vector<256x2048xf32> to vector<2048xf32>
      %23 = vector.shape_cast %22 : vector<2048xf32> to vector<1x2048xf32>
      %cst_21 = arith.constant 2.560000e+02 : f32
      %24 = vector.broadcast %cst_21 : f32 to vector<1x2048xf32>
      %25 = arith.divf %23, %24 : vector<1x2048xf32>
      %26 = arith.index_cast %11 : i32 to index
      %c0_22 = arith.constant 0 : index
      %27 = vector.load %arg7[%26, %c0_22] : memref<8x2048xf32, #tpu.memory_space<vmem>>, vector<1x2048xf32>
      tpu.vector_store %arg7[%26, %c0_22], %25 {strides = array<i32>} : memref<8x2048xf32, #tpu.memory_space<vmem>>, vector<1x2048xf32>,
    }
    %c8_i32_0 = arith.constant 8 : i32
    %c0 = arith.constant 0 : index
    %c0_1 = arith.constant 0 : index
    %1 = vector.load %arg7[%c0, %c0_1] : memref<8x2048xf32, #tpu.memory_space<vmem>>, vector<8x2048xf32>
    %c0_2 = arith.constant 0 : index
    %c0_3 = arith.constant 0 : index
    %2 = vector.load %arg4[%c0_2, %c0_3] : memref<2048x256xf32, #tpu.memory_space<vmem>>, vector<2048x256xf32>
    %cst = arith.constant dense<0.000000e+00> : vector<8x256xf32>
    %3 = tpu.matmul %1, %2, %cst {dimension_numbers = #tpu.dot_dimension_numbers<[1], [0], [0], [1], [0, 0, 1, 1], [], []>} : vector<8x2048xf32>, vector<2048x256xf32>, vector<8x256xf32> -> vector<8x256xf32>
    %c0_4 = arith.constant 0 : index
    %c0_5 = arith.constant 0 : index
    %4 = vector.load %arg5[%c0_4, %c0_5] : memref<1x256xf32, #tpu.memory_space<vmem>>, vector<1x256xf32>
    %5 = vector.broadcast %4 : vector<1x256xf32> to vector<8x256xf32>
    %6 = arith.addf %3, %5 : vector<8x256xf32>
    %c0_6 = arith.constant 0 : index
    %c0_7 = arith.constant 0 : index
    %c0_8 = arith.constant 0 : index
    %7 = vector.load %arg6[%c0_6, %c0_7, %c0_8] : memref<1x8x256xf32, #tpu.memory_space<vmem>>, vector<1x8x256xf32>
    %8 = vector.shape_cast %7 : vector<1x8x256xf32> to vector<8x256xf32>
    %9 = vector.shape_cast %6 : vector<8x256xf32> to vector<1x8x256xf32>
    tpu.vector_store %arg6[%c0_6, %c0_7, %c0_8], %9 {strides = array<i32>} : memref<1x8x256xf32, #tpu.memory_space<vmem>>, vector<1x8x256xf32>,
    return
  }
  func.func @transform_0(%arg0: i32) -> (i32, i32, i32, i32) {
    %c0_i32 = arith.constant 0 : i32
    %c0_i32_0 = arith.constant 0 : i32
    %c0_i32_1 = arith.constant 0 : i32
    %c0_i32_2 = arith.constant 0 : i32
    return %arg0, %c0_i32, %c0_i32_0, %c0_i32_1 : i32, i32, i32, i32
  }
  func.func @transform_1(%arg0: i32) -> (i32, i32) {
    %c0_i32 = arith.constant 0 : i32
    %c0_i32_0 = arith.constant 0 : i32
    %c0_i32_1 = arith.constant 0 : i32
    return %c0_i32, %c0_i32_0 : i32, i32
  }
  func.func @transform_2(%arg0: i32) -> (i32, i32) {
    %c0_i32 = arith.constant 0 : i32
    %c0_i32_0 = arith.constant 0 : i32
    %c0_i32_1 = arith.constant 0 : i32
    return %c0_i32, %c0_i32_0 : i32, i32
  }
  func.func @transform_3(%arg0: i32) -> (i32, i32) {
    %c0_i32 = arith.constant 0 : i32
    %c0_i32_0 = arith.constant 0 : i32
    %c0_i32_1 = arith.constant 0 : i32
    return %c0_i32, %c0_i32_0 : i32, i32
  }
  func.func @transform_4(%arg0: i32) -> (i32, i32) {
    %c0_i32 = arith.constant 0 : i32
    %c0_i32_0 = arith.constant 0 : i32
    %c0_i32_1 = arith.constant 0 : i32
    return %c0_i32, %c0_i32_0 : i32, i32
  }
  func.func @transform_5(%arg0: i32) -> (i32, i32, i32) {
    %c0_i32 = arith.constant 0 : i32
    %c0_i32_0 = arith.constant 0 : i32
    %c0_i32_1 = arith.constant 0 : i32
    return %arg0, %c0_i32, %c0_i32_0 : i32, i32, i32
  }
}

module attributes {stable_mosaic.version = 11 : i64} {
  func.func @_lstm_head_kernel(%arg0: memref<8x2x256xf32, #tpu.memory_space<vmem>>, %arg1: memref<64x256xf32, #tpu.memory_space<vmem>>, %arg2: memref<64x2xf32, #tpu.memory_space<vmem>>, %arg3: memref<1x2xf32, #tpu.memory_space<vmem>>, %arg4: memref<2x2xf32, #tpu.memory_space<vmem>>) attributes {dimension_semantics = [], scalar_prefetch = 0 : i64, scratch_operands = 0 : i64, tpu.core_type = #tpu.core_type<tc>} {
    %cst = arith.constant 0.000000e+00 : f32
    %0 = vector.broadcast %cst : f32 to vector<2x64xf32>
    %c0_i32 = arith.constant 0 : i32
    %1 = arith.index_cast %c0_i32 : i32 to index
    %c0 = arith.constant 0 : index
    %c0_0 = arith.constant 0 : index
    %2 = vector.load %arg0[%1, %c0, %c0_0] : memref<8x2x256xf32, #tpu.memory_space<vmem>>, vector<1x2x256xf32>
    %3 = vector.shape_cast %2 : vector<1x2x256xf32> to vector<2x256xf32>
    %c0_1 = arith.constant 0 : index
    %c0_2 = arith.constant 0 : index
    %4 = vector.load %arg1[%c0_1, %c0_2] : memref<64x256xf32, #tpu.memory_space<vmem>>, vector<64x256xf32>
    %cst_3 = arith.constant dense<0.000000e+00> : vector<2x256xf32>
    %5 = tpu.matmul %0, %4, %cst_3 {dimension_numbers = #tpu.dot_dimension_numbers<[1], [0], [0], [1], [0, 0, 1, 1], [], []>} : vector<2x64xf32>, vector<64x256xf32>, vector<2x256xf32> -> vector<2x256xf32>
    %6 = arith.addf %3, %5 : vector<2x256xf32>
    %7 = vector.extract_strided_slice %6 {offsets = [0, 0], sizes = [2, 192], strides = [1, 1]} : vector<2x256xf32> to vector<2x192xf32>
    %8 = arith.negf %7 : vector<2x192xf32>
    %9 = math.exp %8 : vector<2x192xf32>
    %cst_4 = arith.constant 1.000000e+00 : f32
    %10 = vector.broadcast %cst_4 : f32 to vector<2x192xf32>
    %11 = arith.addf %10, %9 : vector<2x192xf32>
    %12 = arith.divf %10, %11 : vector<2x192xf32>
    %13 = vector.extract_strided_slice %12 {offsets = [0, 0], sizes = [2, 64], strides = [1, 1]} : vector<2x192xf32> to vector<2x64xf32>
    %14 = vector.extract_strided_slice %12 {offsets = [0, 64], sizes = [2, 64], strides = [1, 1]} : vector<2x192xf32> to vector<2x64xf32>
    %15 = vector.extract_strided_slice %12 {offsets = [0, 128], sizes = [2, 64], strides = [1, 1]} : vector<2x192xf32> to vector<2x64xf32>
    %16 = vector.extract_strided_slice %6 {offsets = [0, 192], sizes = [2, 64], strides = [1, 1]} : vector<2x256xf32> to vector<2x64xf32>
    %17 = math.tanh %16 : vector<2x64xf32>
    %18 = arith.mulf %14, %0 : vector<2x64xf32>
    %19 = arith.mulf %13, %17 : vector<2x64xf32>
    %20 = arith.addf %18, %19 : vector<2x64xf32>
    %21 = math.tanh %20 : vector<2x64xf32>
    %22 = arith.mulf %15, %21 : vector<2x64xf32>
    %23 = arith.addf %0, %22 : vector<2x64xf32>
    %c1_i32 = arith.constant 1 : i32
    %24 = arith.index_cast %c1_i32 : i32 to index
    %c0_5 = arith.constant 0 : index
    %c0_6 = arith.constant 0 : index
    %25 = vector.load %arg0[%24, %c0_5, %c0_6] : memref<8x2x256xf32, #tpu.memory_space<vmem>>, vector<1x2x256xf32>
    %26 = vector.shape_cast %25 : vector<1x2x256xf32> to vector<2x256xf32>
    %c0_7 = arith.constant 0 : index
    %c0_8 = arith.constant 0 : index
    %27 = vector.load %arg1[%c0_7, %c0_8] : memref<64x256xf32, #tpu.memory_space<vmem>>, vector<64x256xf32>
    %cst_9 = arith.constant dense<0.000000e+00> : vector<2x256xf32>
    %28 = tpu.matmul %22, %27, %cst_9 {dimension_numbers = #tpu.dot_dimension_numbers<[1], [0], [0], [1], [0, 0, 1, 1], [], []>} : vector<2x64xf32>, vector<64x256xf32>, vector<2x256xf32> -> vector<2x256xf32>
    %29 = arith.addf %26, %28 : vector<2x256xf32>
    %30 = vector.extract_strided_slice %29 {offsets = [0, 0], sizes = [2, 192], strides = [1, 1]} : vector<2x256xf32> to vector<2x192xf32>
    %31 = arith.negf %30 : vector<2x192xf32>
    %32 = math.exp %31 : vector<2x192xf32>
    %cst_10 = arith.constant 1.000000e+00 : f32
    %33 = vector.broadcast %cst_10 : f32 to vector<2x192xf32>
    %34 = arith.addf %33, %32 : vector<2x192xf32>
    %35 = arith.divf %33, %34 : vector<2x192xf32>
    %36 = vector.extract_strided_slice %35 {offsets = [0, 0], sizes = [2, 64], strides = [1, 1]} : vector<2x192xf32> to vector<2x64xf32>
    %37 = vector.extract_strided_slice %35 {offsets = [0, 64], sizes = [2, 64], strides = [1, 1]} : vector<2x192xf32> to vector<2x64xf32>
    %38 = vector.extract_strided_slice %35 {offsets = [0, 128], sizes = [2, 64], strides = [1, 1]} : vector<2x192xf32> to vector<2x64xf32>
    %39 = vector.extract_strided_slice %29 {offsets = [0, 192], sizes = [2, 64], strides = [1, 1]} : vector<2x256xf32> to vector<2x64xf32>
    %40 = math.tanh %39 : vector<2x64xf32>
    %41 = arith.mulf %37, %20 : vector<2x64xf32>
    %42 = arith.mulf %36, %40 : vector<2x64xf32>
    %43 = arith.addf %41, %42 : vector<2x64xf32>
    %44 = math.tanh %43 : vector<2x64xf32>
    %45 = arith.mulf %38, %44 : vector<2x64xf32>
    %46 = arith.addf %23, %45 : vector<2x64xf32>
    %c2_i32 = arith.constant 2 : i32
    %47 = arith.index_cast %c2_i32 : i32 to index
    %c0_11 = arith.constant 0 : index
    %c0_12 = arith.constant 0 : index
    %48 = vector.load %arg0[%47, %c0_11, %c0_12] : memref<8x2x256xf32, #tpu.memory_space<vmem>>, vector<1x2x256xf32>
    %49 = vector.shape_cast %48 : vector<1x2x256xf32> to vector<2x256xf32>
    %c0_13 = arith.constant 0 : index
    %c0_14 = arith.constant 0 : index
    %50 = vector.load %arg1[%c0_13, %c0_14] : memref<64x256xf32, #tpu.memory_space<vmem>>, vector<64x256xf32>
    %cst_15 = arith.constant dense<0.000000e+00> : vector<2x256xf32>
    %51 = tpu.matmul %45, %50, %cst_15 {dimension_numbers = #tpu.dot_dimension_numbers<[1], [0], [0], [1], [0, 0, 1, 1], [], []>} : vector<2x64xf32>, vector<64x256xf32>, vector<2x256xf32> -> vector<2x256xf32>
    %52 = arith.addf %49, %51 : vector<2x256xf32>
    %53 = vector.extract_strided_slice %52 {offsets = [0, 0], sizes = [2, 192], strides = [1, 1]} : vector<2x256xf32> to vector<2x192xf32>
    %54 = arith.negf %53 : vector<2x192xf32>
    %55 = math.exp %54 : vector<2x192xf32>
    %cst_16 = arith.constant 1.000000e+00 : f32
    %56 = vector.broadcast %cst_16 : f32 to vector<2x192xf32>
    %57 = arith.addf %56, %55 : vector<2x192xf32>
    %58 = arith.divf %56, %57 : vector<2x192xf32>
    %59 = vector.extract_strided_slice %58 {offsets = [0, 0], sizes = [2, 64], strides = [1, 1]} : vector<2x192xf32> to vector<2x64xf32>
    %60 = vector.extract_strided_slice %58 {offsets = [0, 64], sizes = [2, 64], strides = [1, 1]} : vector<2x192xf32> to vector<2x64xf32>
    %61 = vector.extract_strided_slice %58 {offsets = [0, 128], sizes = [2, 64], strides = [1, 1]} : vector<2x192xf32> to vector<2x64xf32>
    %62 = vector.extract_strided_slice %52 {offsets = [0, 192], sizes = [2, 64], strides = [1, 1]} : vector<2x256xf32> to vector<2x64xf32>
    %63 = math.tanh %62 : vector<2x64xf32>
    %64 = arith.mulf %60, %43 : vector<2x64xf32>
    %65 = arith.mulf %59, %63 : vector<2x64xf32>
    %66 = arith.addf %64, %65 : vector<2x64xf32>
    %67 = math.tanh %66 : vector<2x64xf32>
    %68 = arith.mulf %61, %67 : vector<2x64xf32>
    %69 = arith.addf %46, %68 : vector<2x64xf32>
    %c3_i32 = arith.constant 3 : i32
    %70 = arith.index_cast %c3_i32 : i32 to index
    %c0_17 = arith.constant 0 : index
    %c0_18 = arith.constant 0 : index
    %71 = vector.load %arg0[%70, %c0_17, %c0_18] : memref<8x2x256xf32, #tpu.memory_space<vmem>>, vector<1x2x256xf32>
    %72 = vector.shape_cast %71 : vector<1x2x256xf32> to vector<2x256xf32>
    %c0_19 = arith.constant 0 : index
    %c0_20 = arith.constant 0 : index
    %73 = vector.load %arg1[%c0_19, %c0_20] : memref<64x256xf32, #tpu.memory_space<vmem>>, vector<64x256xf32>
    %cst_21 = arith.constant dense<0.000000e+00> : vector<2x256xf32>
    %74 = tpu.matmul %68, %73, %cst_21 {dimension_numbers = #tpu.dot_dimension_numbers<[1], [0], [0], [1], [0, 0, 1, 1], [], []>} : vector<2x64xf32>, vector<64x256xf32>, vector<2x256xf32> -> vector<2x256xf32>
    %75 = arith.addf %72, %74 : vector<2x256xf32>
    %76 = vector.extract_strided_slice %75 {offsets = [0, 0], sizes = [2, 192], strides = [1, 1]} : vector<2x256xf32> to vector<2x192xf32>
    %77 = arith.negf %76 : vector<2x192xf32>
    %78 = math.exp %77 : vector<2x192xf32>
    %cst_22 = arith.constant 1.000000e+00 : f32
    %79 = vector.broadcast %cst_22 : f32 to vector<2x192xf32>
    %80 = arith.addf %79, %78 : vector<2x192xf32>
    %81 = arith.divf %79, %80 : vector<2x192xf32>
    %82 = vector.extract_strided_slice %81 {offsets = [0, 0], sizes = [2, 64], strides = [1, 1]} : vector<2x192xf32> to vector<2x64xf32>
    %83 = vector.extract_strided_slice %81 {offsets = [0, 64], sizes = [2, 64], strides = [1, 1]} : vector<2x192xf32> to vector<2x64xf32>
    %84 = vector.extract_strided_slice %81 {offsets = [0, 128], sizes = [2, 64], strides = [1, 1]} : vector<2x192xf32> to vector<2x64xf32>
    %85 = vector.extract_strided_slice %75 {offsets = [0, 192], sizes = [2, 64], strides = [1, 1]} : vector<2x256xf32> to vector<2x64xf32>
    %86 = math.tanh %85 : vector<2x64xf32>
    %87 = arith.mulf %83, %66 : vector<2x64xf32>
    %88 = arith.mulf %82, %86 : vector<2x64xf32>
    %89 = arith.addf %87, %88 : vector<2x64xf32>
    %90 = math.tanh %89 : vector<2x64xf32>
    %91 = arith.mulf %84, %90 : vector<2x64xf32>
    %92 = arith.addf %69, %91 : vector<2x64xf32>
    %c4_i32 = arith.constant 4 : i32
    %93 = arith.index_cast %c4_i32 : i32 to index
    %c0_23 = arith.constant 0 : index
    %c0_24 = arith.constant 0 : index
    %94 = vector.load %arg0[%93, %c0_23, %c0_24] : memref<8x2x256xf32, #tpu.memory_space<vmem>>, vector<1x2x256xf32>
    %95 = vector.shape_cast %94 : vector<1x2x256xf32> to vector<2x256xf32>
    %c0_25 = arith.constant 0 : index
    %c0_26 = arith.constant 0 : index
    %96 = vector.load %arg1[%c0_25, %c0_26] : memref<64x256xf32, #tpu.memory_space<vmem>>, vector<64x256xf32>
    %cst_27 = arith.constant dense<0.000000e+00> : vector<2x256xf32>
    %97 = tpu.matmul %91, %96, %cst_27 {dimension_numbers = #tpu.dot_dimension_numbers<[1], [0], [0], [1], [0, 0, 1, 1], [], []>} : vector<2x64xf32>, vector<64x256xf32>, vector<2x256xf32> -> vector<2x256xf32>
    %98 = arith.addf %95, %97 : vector<2x256xf32>
    %99 = vector.extract_strided_slice %98 {offsets = [0, 0], sizes = [2, 192], strides = [1, 1]} : vector<2x256xf32> to vector<2x192xf32>
    %100 = arith.negf %99 : vector<2x192xf32>
    %101 = math.exp %100 : vector<2x192xf32>
    %cst_28 = arith.constant 1.000000e+00 : f32
    %102 = vector.broadcast %cst_28 : f32 to vector<2x192xf32>
    %103 = arith.addf %102, %101 : vector<2x192xf32>
    %104 = arith.divf %102, %103 : vector<2x192xf32>
    %105 = vector.extract_strided_slice %104 {offsets = [0, 0], sizes = [2, 64], strides = [1, 1]} : vector<2x192xf32> to vector<2x64xf32>
    %106 = vector.extract_strided_slice %104 {offsets = [0, 64], sizes = [2, 64], strides = [1, 1]} : vector<2x192xf32> to vector<2x64xf32>
    %107 = vector.extract_strided_slice %104 {offsets = [0, 128], sizes = [2, 64], strides = [1, 1]} : vector<2x192xf32> to vector<2x64xf32>
    %108 = vector.extract_strided_slice %98 {offsets = [0, 192], sizes = [2, 64], strides = [1, 1]} : vector<2x256xf32> to vector<2x64xf32>
    %109 = math.tanh %108 : vector<2x64xf32>
    %110 = arith.mulf %106, %89 : vector<2x64xf32>
    %111 = arith.mulf %105, %109 : vector<2x64xf32>
    %112 = arith.addf %110, %111 : vector<2x64xf32>
    %113 = math.tanh %112 : vector<2x64xf32>
    %114 = arith.mulf %107, %113 : vector<2x64xf32>
    %115 = arith.addf %92, %114 : vector<2x64xf32>
    %c5_i32 = arith.constant 5 : i32
    %116 = arith.index_cast %c5_i32 : i32 to index
    %c0_29 = arith.constant 0 : index
    %c0_30 = arith.constant 0 : index
    %117 = vector.load %arg0[%116, %c0_29, %c0_30] : memref<8x2x256xf32, #tpu.memory_space<vmem>>, vector<1x2x256xf32>
    %118 = vector.shape_cast %117 : vector<1x2x256xf32> to vector<2x256xf32>
    %c0_31 = arith.constant 0 : index
    %c0_32 = arith.constant 0 : index
    %119 = vector.load %arg1[%c0_31, %c0_32] : memref<64x256xf32, #tpu.memory_space<vmem>>, vector<64x256xf32>
    %cst_33 = arith.constant dense<0.000000e+00> : vector<2x256xf32>
    %120 = tpu.matmul %114, %119, %cst_33 {dimension_numbers = #tpu.dot_dimension_numbers<[1], [0], [0], [1], [0, 0, 1, 1], [], []>} : vector<2x64xf32>, vector<64x256xf32>, vector<2x256xf32> -> vector<2x256xf32>
    %121 = arith.addf %118, %120 : vector<2x256xf32>
    %122 = vector.extract_strided_slice %121 {offsets = [0, 0], sizes = [2, 192], strides = [1, 1]} : vector<2x256xf32> to vector<2x192xf32>
    %123 = arith.negf %122 : vector<2x192xf32>
    %124 = math.exp %123 : vector<2x192xf32>
    %cst_34 = arith.constant 1.000000e+00 : f32
    %125 = vector.broadcast %cst_34 : f32 to vector<2x192xf32>
    %126 = arith.addf %125, %124 : vector<2x192xf32>
    %127 = arith.divf %125, %126 : vector<2x192xf32>
    %128 = vector.extract_strided_slice %127 {offsets = [0, 0], sizes = [2, 64], strides = [1, 1]} : vector<2x192xf32> to vector<2x64xf32>
    %129 = vector.extract_strided_slice %127 {offsets = [0, 64], sizes = [2, 64], strides = [1, 1]} : vector<2x192xf32> to vector<2x64xf32>
    %130 = vector.extract_strided_slice %127 {offsets = [0, 128], sizes = [2, 64], strides = [1, 1]} : vector<2x192xf32> to vector<2x64xf32>
    %131 = vector.extract_strided_slice %121 {offsets = [0, 192], sizes = [2, 64], strides = [1, 1]} : vector<2x256xf32> to vector<2x64xf32>
    %132 = math.tanh %131 : vector<2x64xf32>
    %133 = arith.mulf %129, %112 : vector<2x64xf32>
    %134 = arith.mulf %128, %132 : vector<2x64xf32>
    %135 = arith.addf %133, %134 : vector<2x64xf32>
    %136 = math.tanh %135 : vector<2x64xf32>
    %137 = arith.mulf %130, %136 : vector<2x64xf32>
    %138 = arith.addf %115, %137 : vector<2x64xf32>
    %c6_i32 = arith.constant 6 : i32
    %139 = arith.index_cast %c6_i32 : i32 to index
    %c0_35 = arith.constant 0 : index
    %c0_36 = arith.constant 0 : index
    %140 = vector.load %arg0[%139, %c0_35, %c0_36] : memref<8x2x256xf32, #tpu.memory_space<vmem>>, vector<1x2x256xf32>
    %141 = vector.shape_cast %140 : vector<1x2x256xf32> to vector<2x256xf32>
    %c0_37 = arith.constant 0 : index
    %c0_38 = arith.constant 0 : index
    %142 = vector.load %arg1[%c0_37, %c0_38] : memref<64x256xf32, #tpu.memory_space<vmem>>, vector<64x256xf32>
    %cst_39 = arith.constant dense<0.000000e+00> : vector<2x256xf32>
    %143 = tpu.matmul %137, %142, %cst_39 {dimension_numbers = #tpu.dot_dimension_numbers<[1], [0], [0], [1], [0, 0, 1, 1], [], []>} : vector<2x64xf32>, vector<64x256xf32>, vector<2x256xf32> -> vector<2x256xf32>
    %144 = arith.addf %141, %143 : vector<2x256xf32>
    %145 = vector.extract_strided_slice %144 {offsets = [0, 0], sizes = [2, 192], strides = [1, 1]} : vector<2x256xf32> to vector<2x192xf32>
    %146 = arith.negf %145 : vector<2x192xf32>
    %147 = math.exp %146 : vector<2x192xf32>
    %cst_40 = arith.constant 1.000000e+00 : f32
    %148 = vector.broadcast %cst_40 : f32 to vector<2x192xf32>
    %149 = arith.addf %148, %147 : vector<2x192xf32>
    %150 = arith.divf %148, %149 : vector<2x192xf32>
    %151 = vector.extract_strided_slice %150 {offsets = [0, 0], sizes = [2, 64], strides = [1, 1]} : vector<2x192xf32> to vector<2x64xf32>
    %152 = vector.extract_strided_slice %150 {offsets = [0, 64], sizes = [2, 64], strides = [1, 1]} : vector<2x192xf32> to vector<2x64xf32>
    %153 = vector.extract_strided_slice %150 {offsets = [0, 128], sizes = [2, 64], strides = [1, 1]} : vector<2x192xf32> to vector<2x64xf32>
    %154 = vector.extract_strided_slice %144 {offsets = [0, 192], sizes = [2, 64], strides = [1, 1]} : vector<2x256xf32> to vector<2x64xf32>
    %155 = math.tanh %154 : vector<2x64xf32>
    %156 = arith.mulf %152, %135 : vector<2x64xf32>
    %157 = arith.mulf %151, %155 : vector<2x64xf32>
    %158 = arith.addf %156, %157 : vector<2x64xf32>
    %159 = math.tanh %158 : vector<2x64xf32>
    %160 = arith.mulf %153, %159 : vector<2x64xf32>
    %161 = arith.addf %138, %160 : vector<2x64xf32>
    %c7_i32 = arith.constant 7 : i32
    %162 = arith.index_cast %c7_i32 : i32 to index
    %c0_41 = arith.constant 0 : index
    %c0_42 = arith.constant 0 : index
    %163 = vector.load %arg0[%162, %c0_41, %c0_42] : memref<8x2x256xf32, #tpu.memory_space<vmem>>, vector<1x2x256xf32>
    %164 = vector.shape_cast %163 : vector<1x2x256xf32> to vector<2x256xf32>
    %c0_43 = arith.constant 0 : index
    %c0_44 = arith.constant 0 : index
    %165 = vector.load %arg1[%c0_43, %c0_44] : memref<64x256xf32, #tpu.memory_space<vmem>>, vector<64x256xf32>
    %cst_45 = arith.constant dense<0.000000e+00> : vector<2x256xf32>
    %166 = tpu.matmul %160, %165, %cst_45 {dimension_numbers = #tpu.dot_dimension_numbers<[1], [0], [0], [1], [0, 0, 1, 1], [], []>} : vector<2x64xf32>, vector<64x256xf32>, vector<2x256xf32> -> vector<2x256xf32>
    %167 = arith.addf %164, %166 : vector<2x256xf32>
    %168 = vector.extract_strided_slice %167 {offsets = [0, 0], sizes = [2, 192], strides = [1, 1]} : vector<2x256xf32> to vector<2x192xf32>
    %169 = arith.negf %168 : vector<2x192xf32>
    %170 = math.exp %169 : vector<2x192xf32>
    %cst_46 = arith.constant 1.000000e+00 : f32
    %171 = vector.broadcast %cst_46 : f32 to vector<2x192xf32>
    %172 = arith.addf %171, %170 : vector<2x192xf32>
    %173 = arith.divf %171, %172 : vector<2x192xf32>
    %174 = vector.extract_strided_slice %173 {offsets = [0, 0], sizes = [2, 64], strides = [1, 1]} : vector<2x192xf32> to vector<2x64xf32>
    %175 = vector.extract_strided_slice %173 {offsets = [0, 64], sizes = [2, 64], strides = [1, 1]} : vector<2x192xf32> to vector<2x64xf32>
    %176 = vector.extract_strided_slice %173 {offsets = [0, 128], sizes = [2, 64], strides = [1, 1]} : vector<2x192xf32> to vector<2x64xf32>
    %177 = vector.extract_strided_slice %167 {offsets = [0, 192], sizes = [2, 64], strides = [1, 1]} : vector<2x256xf32> to vector<2x64xf32>
    %178 = math.tanh %177 : vector<2x64xf32>
    %179 = arith.mulf %175, %158 : vector<2x64xf32>
    %180 = arith.mulf %174, %178 : vector<2x64xf32>
    %181 = arith.addf %179, %180 : vector<2x64xf32>
    %182 = math.tanh %181 : vector<2x64xf32>
    %183 = arith.mulf %176, %182 : vector<2x64xf32>
    %184 = arith.addf %161, %183 : vector<2x64xf32>
    %c8_i32 = arith.constant 8 : i32
    %cst_47 = arith.constant 1.250000e-01 : f32
    %185 = vector.broadcast %cst_47 : f32 to vector<2x64xf32>
    %186 = arith.mulf %184, %185 : vector<2x64xf32>
    %c0_48 = arith.constant 0 : index
    %c0_49 = arith.constant 0 : index
    %187 = vector.load %arg2[%c0_48, %c0_49] : memref<64x2xf32, #tpu.memory_space<vmem>>, vector<64x2xf32>
    %cst_50 = arith.constant dense<0.000000e+00> : vector<2x2xf32>
    %188 = tpu.matmul %186, %187, %cst_50 {dimension_numbers = #tpu.dot_dimension_numbers<[1], [0], [0], [1], [0, 0, 1, 1], [], []>} : vector<2x64xf32>, vector<64x2xf32>, vector<2x2xf32> -> vector<2x2xf32>
    %c0_51 = arith.constant 0 : index
    %c0_52 = arith.constant 0 : index
    %189 = vector.load %arg3[%c0_51, %c0_52] : memref<1x2xf32, #tpu.memory_space<vmem>>, vector<1x2xf32>
    %190 = vector.broadcast %189 : vector<1x2xf32> to vector<2x2xf32>
    %191 = arith.addf %188, %190 : vector<2x2xf32>
    %c0_53 = arith.constant 0 : index
    %c0_54 = arith.constant 0 : index
    %192 = vector.load %arg4[%c0_53, %c0_54] : memref<2x2xf32, #tpu.memory_space<vmem>>, vector<2x2xf32>
    tpu.vector_store %arg4[%c0_53, %c0_54], %191 {strides = array<i32>} : memref<2x2xf32, #tpu.memory_space<vmem>>, vector<2x2xf32>,
    return
  }
}

</mosaic_0001>

<llo_original>
// kernel: deepfake_detector_forward.3
$region0: #{deepfake_detector_forward.3}
  #allocation0 [shape = 'u32[]', space=smem, size = 0x4, offset = 0x4, fixed_abs, tag = 'smem constant byte address 0x4 - core index']
  #allocation1 [shape = 'u32[144,128]{1,0:T(1,128)}', space=vmem, size = 0x12000, scoped, tag = 'internal scratch']
  %s0 = inlined_call_operand.vmem [shape: f32[8,2,256], index: 0, kind: input, shape index: {}]
  %s1 = inlined_call_operand.vmem [shape: f32[64,256], index: 1, kind: input, shape index: {}]
  %s2 = inlined_call_operand.vmem [shape: f32[64,2], index: 2, kind: input, shape index: {}]
  %s3 = inlined_call_operand.vmem [shape: f32[1,2], index: 3, kind: input, shape index: {}]
  %s4 = inlined_call_operand.hbm [shape: f32[2,2], index: 4, kind: output, shape index: {}]
  %s5 = sld [smem:[#allocation0]]
  $region26: #{deepfake_detector_forward.3} parent=0
    _
  %s7 = ssub.s32 1, %s5
  %s8 = scalar_select 0, %s7, %s5
  $region1: #{deepfake_detector_forward.3} parent=0
    #allocation2 [shape = 'u8[1024]{0}', space=vmem, size = 0x400, scoped, tag = 'output window, operand 0, single buffered']
    #allocation3 [shape = 's32[1]{0}', space=sflag, size = 0x4, scoped, tag = 'scoped memory for deepfake_detector_forward.3']
    %9 = vsyncpa [#allocation3], 0
    // Predicated region
    $region2: #{deepfake_detector_forward.3} parent=1 // pred_check
      _
    $region3: #{deepfake_detector_forward.3} parent=1 // pred_check_branch
      %11 = sbr.rel (0) target = $region5
    $region4: #{deepfake_detector_forward.3} parent=1 // pred_region
      _
    $region5: #{deepfake_detector_forward.3} parent=1 // pred_fallthru
      _
    // Predicated region
    $region6: #{deepfake_detector_forward.3} parent=1 // pred_check
      _
    $region7: #{deepfake_detector_forward.3} parent=1 // pred_check_branch
      %13 = sbr.rel (0) target = $region9
    $region8: #{deepfake_detector_forward.3} parent=1 // pred_region
      _
    $region9: #{deepfake_detector_forward.3} parent=1 // pred_fallthru
      _
    // Predicated region
    $region10: #{deepfake_detector_forward.3} parent=1 // pred_check
      _
    $region11: #{deepfake_detector_forward.3} parent=1 // pred_check_branch
      %15 = sbr.rel (0) target = $region13
    $region12: #{deepfake_detector_forward.3} parent=1 // pred_region
      _
    $region13: #{deepfake_detector_forward.3} parent=1 // pred_fallthru
      _
    // Predicated region
    $region14: #{deepfake_detector_forward.3} parent=1 // pred_check
      _
    $region15: #{deepfake_detector_forward.3} parent=1 // pred_check_branch
      %17 = sbr.rel (0) target = $region17
    $region16: #{deepfake_detector_forward.3} parent=1 // pred_region
      _
    $region17: #{deepfake_detector_forward.3} parent=1 // pred_fallthru
      _
    %v18 = vld [vmem:[%s0] sm:$0xf]
    %v19 = vld [vmem:[%s1] sm:$0xff]
    %v20 = vld [vmem:[%s1 + $0x8] sm:$0xff]
    %v21 = vld [vmem:[%s1 + $0x10] sm:$0xff]
    %v22 = vld [vmem:[%s1 + $0x18] sm:$0xff]
    %v23 = vld [vmem:[%s1 + $0x20] sm:$0xff]
    %v24 = vld [vmem:[%s1 + $0x28] sm:$0xff]
    %v25 = vld [vmem:[%s1 + $0x30] sm:$0xff]
    %v26 = vld [vmem:[%s1 + $0x38] sm:$0xff]
    %v27 = vld [vmem:[%s1 + $0x40] sm:$0xff]
    %v28 = vld [vmem:[%s1 + $0x48] sm:$0xff]
    %v29 = vld [vmem:[%s1 + $0x50] sm:$0xff]
    %v30 = vld [vmem:[%s1 + $0x58] sm:$0xff]
    %v31 = vld [vmem:[%s1 + $0x60] sm:$0xff]
    %v32 = vld [vmem:[%s1 + $0x68] sm:$0xff]
    %v33 = vld [vmem:[%s1 + $0x70] sm:$0xff]
    %v34 = vld [vmem:[%s1 + $0x78] sm:$0xff]
    %vm35 = vcmask 523264
    %v37 = vsel %vm35, 0.0, 0
    %39 = vmatprep.subr.mxu0 %v20
    %40 = vmatpush1.msra.mxu0 %v19
    %41 = vmatprep.subr.mxu0 %v22
    %42 = vmatpush1.msra.mxu0 %v21
    %43 = vmatprep.subr.mxu0 %v24
    %44 = vmatpush1.msra.mxu0 %v23
    %45 = vmatprep.subr.mxu0 %v26
    %46 = vmatpush1.msra.mxu0 %v25
    %47 = vmatprep.subr.mxu0 %v28
    %48 = vmatpush1.msra.mxu0 %v27
    %49 = vmatprep.subr.mxu0 %v30
    %50 = vmatpush1.msra.mxu0 %v29
    %51 = vmatprep.subr.mxu0 %v32
    %52 = vmatpush1.msra.mxu0 %v31
    %53 = vmatprep.subr.mxu0 %v34
    %54 = vmatpush1.msra.mxu0 %v33
    %55 = vmatprep.subr.mxu0 0.0
    %56 = vmatpush1.msra.mxu0 0.0
    %57 = vmatprep.subr.mxu0 0.0
    %58 = vmatpush1.msra.mxu0 0.0
    %59 = vmatprep.subr.mxu0 0.0
    %60 = vmatpush1.msra.mxu0 0.0
    %61 = vmatprep.subr.mxu0 0.0
    %62 = vmatpush1.msra.mxu0 0.0
    %63 = vmatprep.subr.mxu0 0.0
    %64 = vmatpush1.msra.mxu0 0.0
    %65 = vmatprep.subr.mxu0 0.0
    %66 = vmatpush1.msra.mxu0 0.0
    %67 = vmatprep.subr.mxu0 0.0
    %68 = vmatpush1.msra.mxu0 0.0
    %69 = vmatprep.subr.mxu0 0.0
    %70 = vmatpush1.msra.mxu0 0.0
    %71 = vmatprep.subr.mxu0 0.0
    %72 = vmatpush1.msra.mxu0 0.0
    %73 = vmatprep.subr.mxu0 0.0
    %74 = vmatpush1.msra.mxu0 0.0
    %75 = vmatprep.subr.mxu0 0.0
    %76 = vmatpush1.msra.mxu0 0.0
    %77 = vmatprep.subr.mxu0 0.0
    %78 = vmatpush1.msra.mxu0 0.0
    %79 = vmatprep.subr.mxu0 0.0
    %80 = vmatpush1.msra.mxu0 0.0
    %81 = vmatprep.subr.mxu0 0.0
    %82 = vmatpush1.msra.mxu0 0.0
    %83 = vmatprep.subr.mxu0 0.0
    %84 = vmatpush1.msra.mxu0 0.0
    %85 = vmatprep.subr.mxu0 0.0
    %86 = vmatpush1.msra.mxu0 0.0
    %87 = vmatprep.subr.mxu0 0.0
    %88 = vmatpush1.msra.mxu0 0.0
    %89 = vmatprep.subr.mxu0 0.0
    %90 = vmatpush1.msra.mxu0 0.0
    %91 = vmatprep.subr.mxu0 0.0
    %92 = vmatpush1.msra.mxu0 0.0
    %93 = vmatprep.subr.mxu0 0.0
    %94 = vmatpush1.msra.mxu0 0.0
    %95 = vmatprep.subr.mxu0 0.0
    %96 = vmatpush1.msra.mxu0 0.0
    %97 = vmatprep.subr.mxu0 0.0
    %98 = vmatpush1.msra.mxu0 0.0
    %99 = vmatprep.subr.mxu0 0.0
    %100 = vmatpush1.msra.mxu0 0.0
    %101 = vmatprep.subr.mxu0 0.0
    %102 = vmatpush1.msra.mxu0 0.0
    %103 = vmatprep.mubr.f32.mxu0 0.0
    %104 = vmatmul.mubr.f32.gmra.mrb[0].mxu0 %v37
    %v105 = vpop.f32.mrb[0].mxu0
    %v106 = vadd.f32 0.0, %v105
    %v107 = vpop.f32.mrb[0].mxu0
    %v108 = vadd.f32 0.0, %v107
    %109 = vdwg.mxu0
    %v112 = vcombine.low %v106, %v108
    %v114 = vunpack.c.l.s4 1983009808
    %v115 = vunpack.c.0.s8 %v114
    %v116 = vlaneseq
    %v117 = vshrl.u32 %v116, 7
    %v118 = vsub.s32 %v115, %v117
    %v119 = vrot.slane %v112, %v118
    %v121 = vadd.f32 %v18, %v119
    %v122 = vxor.u32 %v121, 2147483648
    %v123 = vmul.f32 %v122, 1.442695
    %v124 = vpow.pop %v123
    %v125 = vadd.f32 %v124, 1.0
    %v126 = vrcp.pop %v125
    %v127 = vmul.f32 1.0, %v126
    %129 = vrot.lane.b32.xlu0 %v121, 64
    %v130 = vpop.permute.xlu0 %129
    %v131 = vrot.slane %v130, 2
    %v133 = vtanh.pop %v131
    %v134 = vmul.f32 %v127, 0.0
    %v135 = vmul.f32 %v127, %v133
    %137 = vrot.lane.b32.xlu0 %v135, 64
    %v138 = vpop.permute.xlu0 %137
    %v140 = vadd.f32 %v134, %v138
    %v141 = vtanh.pop %v140
    %v143 = vrot.slane %v127, 2
    %146 = vrot.lane.b32.xlu0 %v141, 64
    %v147 = vpop.permute.xlu0 %146
    %v149 = vmul.f32 %v143, %v147
    %v150 = vadd.f32 %v149, 0.0
    %s151 = scalar_lea.vmem %s0, 4
    %v152 = vld [vmem:[%s151] sm:$0xf]
    %v154 = vsel %vm35, %v149, 0
    %156 = vmatprep.subr.mxu0 %v20
    %157 = vmatpush1.msra.mxu0 %v19
    %158 = vmatprep.subr.mxu0 %v22
    %159 = vmatpush1.msra.mxu0 %v21
    %160 = vmatprep.subr.mxu0 %v24
    %161 = vmatpush1.msra.mxu0 %v23
    %162 = vmatprep.subr.mxu0 %v26
    %163 = vmatpush1.msra.mxu0 %v25
    %164 = vmatprep.subr.mxu0 %v28
    %165 = vmatpush1.msra.mxu0 %v27
    %166 = vmatprep.subr.mxu0 %v30
    %167 = vmatpush1.msra.mxu0 %v29
    %168 = vmatprep.subr.mxu0 %v32
    %169 = vmatpush1.msra.mxu0 %v31
    %170 = vmatprep.subr.mxu0 %v34
    %171 = vmatpush1.msra.mxu0 %v33
    %172 = vmatprep.subr.mxu0 0.0
    %173 = vmatpush1.msra.mxu0 0.0
    %174 = vmatprep.subr.mxu0 0.0
    %175 = vmatpush1.msra.mxu0 0.0
    %176 = vmatprep.subr.mxu0 0.0
    %177 = vmatpush1.msra.mxu0 0.0
    %178 = vmatprep.subr.mxu0 0.0
    %179 = vmatpush1.msra.mxu0 0.0
    %180 = vmatprep.subr.mxu0 0.0
    %181 = vmatpush1.msra.mxu0 0.0
    %182 = vmatprep.subr.mxu0 0.0
    %183 = vmatpush1.msra.mxu0 0.0
    %184 = vmatprep.subr.mxu0 0.0
    %185 = vmatpush1.msra.mxu0 0.0
    %186 = vmatprep.subr.mxu0 0.0
    %187 = vmatpush1.msra.mxu0 0.0
    %188 = vmatprep.subr.mxu0 0.0
    %189 = vmatpush1.msra.mxu0 0.0
    %190 = vmatprep.subr.mxu0 0.0
    %191 = vmatpush1.msra.mxu0 0.0
    %192 = vmatprep.subr.mxu0 0.0
    %193 = vmatpush1.msra.mxu0 0.0
    %194 = vmatprep.subr.mxu0 0.0
    %195 = vmatpush1.msra.mxu0 0.0
    %196 = vmatprep.subr.mxu0 0.0
    %197 = vmatpush1.msra.mxu0 0.0
    %198 = vmatprep.subr.mxu0 0.0
    %199 = vmatpush1.msra.mxu0 0.0
    %200 = vmatprep.subr.mxu0 0.0
    %201 = vmatpush1.msra.mxu0 0.0
    %202 = vmatprep.subr.mxu0 0.0
    %203 = vmatpush1.msra.mxu0 0.0
    %204 = vmatprep.subr.mxu0 0.0
    %205 = vmatpush1.msra.mxu0 0.0
    %206 = vmatprep.subr.mxu0 0.0
    %207 = vmatpush1.msra.mxu0 0.0
    %208 = vmatprep.subr.mxu0 0.0
    %209 = vmatpush1.msra.mxu0 0.0
    %210 = vmatprep.subr.mxu0 0.0
    %211 = vmatpush1.msra.mxu0 0.0
    %212 = vmatprep.subr.mxu0 0.0
    %213 = vmatpush1.msra.mxu0 0.0
    %214 = vmatprep.subr.mxu0 0.0
    %215 = vmatpush1.msra.mxu0 0.0
    %216 = vmatprep.subr.mxu0 0.0
    %217 = vmatpush1.msra.mxu0 0.0
    %218 = vmatprep.subr.mxu0 0.0
    %219 = vmatpush1.msra.mxu0 0.0
    %220 = vmatprep.mubr.f32.mxu0 0.0
    %221 = vmatmul.mubr.f32.gmra.mrb[0].mxu0 %v154
    %v222 = vpop.f32.mrb[0].mxu0
    %v223 = vadd.f32 0.0, %v222
    %v224 = vpop.f32.mrb[0].mxu0
    %v225 = vadd.f32 0.0, %v224
    %226 = vdwg.mxu0
    %v229 = vcombine.low %v223, %v225
    %v231 = vunpack.c.l.s4 1983009808
    %v232 = vunpack.c.0.s8 %v231
    %v233 = vlaneseq
    %v234 = vshrl.u32 %v233, 7
    %v235 = vsub.s32 %v232, %v234
    %v236 = vrot.slane %v229, %v235
    %v238 = vadd.f32 %v152, %v236
    %v239 = vxor.u32 %v238, 2147483648
    %v240 = vmul.f32 %v239, 1.442695
    %v241 = vpow.pop %v240
    %v242 = vadd.f32 %v241, 1.0
    %v243 = vrcp.pop %v242
    %v244 = vmul.f32 1.0, %v243
    %246 = vrot.lane.b32.xlu0 %v238, 64
    %v247 = vpop.permute.xlu0 %246
    %v248 = vrot.slane %v247, 2
    %v250 = vtanh.pop %v248
    %v251 = vmul.f32 %v244, %v140
    %v252 = vmul.f32 %v244, %v250
    %254 = vrot.lane.b32.xlu0 %v252, 64
    %v255 = vpop.permute.xlu0 %254
    %v257 = vadd.f32 %v251, %v255
    %v258 = vtanh.pop %v257
    %v260 = vrot.slane %v244, 2
    %263 = vrot.lane.b32.xlu0 %v258, 64
    %v264 = vpop.permute.xlu0 %263
    %v266 = vmul.f32 %v260, %v264
    %v267 = vadd.f32 %v150, %v266
    %s268 = scalar_lea.vmem %s0, 8
    %v269 = vld [vmem:[%s268] sm:$0xf]
    %v271 = vsel %vm35, %v266, 0
    %273 = vmatprep.subr.mxu0 %v20
    %274 = vmatpush1.msra.mxu0 %v19
    %275 = vmatprep.subr.mxu0 %v22
    %276 = vmatpush1.msra.mxu0 %v21
    %277 = vmatprep.subr.mxu0 %v24
    %278 = vmatpush1.msra.mxu0 %v23
    %279 = vmatprep.subr.mxu0 %v26
    %280 = vmatpush1.msra.mxu0 %v25
    %281 = vmatprep.subr.mxu0 %v28
    %282 = vmatpush1.msra.mxu0 %v27
    %283 = vmatprep.subr.mxu0 %v30
    %284 = vmatpush1.msra.mxu0 %v29
    %285 = vmatprep.subr.mxu0 %v32
    %286 = vmatpush1.msra.mxu0 %v31
    %287 = vmatprep.subr.mxu0 %v34
    %288 = vmatpush1.msra.mxu0 %v33
    %289 = vmatprep.subr.mxu0 0.0
    %290 = vmatpush1.msra.mxu0 0.0
    %291 = vmatprep.subr.mxu0 0.0
    %292 = vmatpush1.msra.mxu0 0.0
    %293 = vmatprep.subr.mxu0 0.0
    %294 = vmatpush1.msra.mxu0 0.0
    %295 = vmatprep.subr.mxu0 0.0
    %296 = vmatpush1.msra.mxu0 0.0
    %297 = vmatprep.subr.mxu0 0.0
    %298 = vmatpush1.msra.mxu0 0.0
    %299 = vmatprep.subr.mxu0 0.0
    %300 = vmatpush1.msra.mxu0 0.0
    %301 = vmatprep.subr.mxu0 0.0
    %302 = vmatpush1.msra.mxu0 0.0
    %303 = vmatprep.subr.mxu0 0.0
    %304 = vmatpush1.msra.mxu0 0.0
    %305 = vmatprep.subr.mxu0 0.0
    %306 = vmatpush1.msra.mxu0 0.0
    %307 = vmatprep.subr.mxu0 0.0
    %308 = vmatpush1.msra.mxu0 0.0
    %309 = vmatprep.subr.mxu0 0.0
    %310 = vmatpush1.msra.mxu0 0.0
    %311 = vmatprep.subr.mxu0 0.0
    %312 = vmatpush1.msra.mxu0 0.0
    %313 = vmatprep.subr.mxu0 0.0
    %314 = vmatpush1.msra.mxu0 0.0
    %315 = vmatprep.subr.mxu0 0.0
    %316 = vmatpush1.msra.mxu0 0.0
    %317 = vmatprep.subr.mxu0 0.0
    %318 = vmatpush1.msra.mxu0 0.0
    %319 = vmatprep.subr.mxu0 0.0
    %320 = vmatpush1.msra.mxu0 0.0
    %321 = vmatprep.subr.mxu0 0.0
    %322 = vmatpush1.msra.mxu0 0.0
    %323 = vmatprep.subr.mxu0 0.0
    %324 = vmatpush1.msra.mxu0 0.0
    %325 = vmatprep.subr.mxu0 0.0
    %326 = vmatpush1.msra.mxu0 0.0
    %327 = vmatprep.subr.mxu0 0.0
    %328 = vmatpush1.msra.mxu0 0.0
    %329 = vmatprep.subr.mxu0 0.0
    %330 = vmatpush1.msra.mxu0 0.0
    %331 = vmatprep.subr.mxu0 0.0
    %332 = vmatpush1.msra.mxu0 0.0
    %333 = vmatprep.subr.mxu0 0.0
    %334 = vmatpush1.msra.mxu0 0.0
    %335 = vmatprep.subr.mxu0 0.0
    %336 = vmatpush1.msra.mxu0 0.0
    %337 = vmatprep.mubr.f32.mxu0 0.0
    %338 = vmatmul.mubr.f32.gmra.mrb[0].mxu0 %v271
    %v339 = vpop.f32.mrb[0].mxu0
    %v340 = vadd.f32 0.0, %v339
    %v341 = vpop.f32.mrb[0].mxu0
    %v342 = vadd.f32 0.0, %v341
    %343 = vdwg.mxu0
    %v346 = vcombine.low %v340, %v342
    %v348 = vunpack.c.l.s4 1983009808
    %v349 = vunpack.c.0.s8 %v348
    %v350 = vlaneseq
    %v351 = vshrl.u32 %v350, 7
    %v352 = vsub.s32 %v349, %v351
    %v353 = vrot.slane %v346, %v352
    %v355 = vadd.f32 %v269, %v353
    %v356 = vxor.u32 %v355, 2147483648
    %v357 = vmul.f32 %v356, 1.442695
    %v358 = vpow.pop %v357
    %v359 = vadd.f32 %v358, 1.0
    %v360 = vrcp.pop %v359
    %v361 = vmul.f32 1.0, %v360
    %363 = vrot.lane.b32.xlu0 %v355, 64
    %v364 = vpop.permute.xlu0 %363
    %v365 = vrot.slane %v364, 2
    %v367 = vtanh.pop %v365
    %v368 = vmul.f32 %v361, %v257
    %v369 = vmul.f32 %v361, %v367
    %371 = vrot.lane.b32.xlu0 %v369, 64
    %v372 = vpop.permute.xlu0 %371
    %v374 = vadd.f32 %v368, %v372
    %v375 = vtanh.pop %v374
    %v377 = vrot.slane %v361, 2
    %380 = vrot.lane.b32.xlu0 %v375, 64
    %v381 = vpop.permute.xlu0 %380
    %v383 = vmul.f32 %v377, %v381
    %v384 = vadd.f32 %v267, %v383
    %s385 = scalar_lea.vmem %s0, 12
    %v386 = vld [vmem:[%s385] sm:$0xf]
    %v388 = vsel %vm35, %v383, 0
    %390 = vmatprep.subr.mxu0 %v20
    %391 = vmatpush1.msra.mxu0 %v19
    %392 = vmatprep.subr.mxu0 %v22
    %393 = vmatpush1.msra.mxu0 %v21
    %394 = vmatprep.subr.mxu0 %v24
    %395 = vmatpush1.msra.mxu0 %v23
    %396 = vmatprep.subr.mxu0 %v26
    %397 = vmatpush1.msra.mxu0 %v25
    %398 = vmatprep.subr.mxu0 %v28
    %399 = vmatpush1.msra.mxu0 %v27
    %400 = vmatprep.subr.mxu0 %v30
    %401 = vmatpush1.msra.mxu0 %v29
    %402 = vmatprep.subr.mxu0 %v32
    %403 = vmatpush1.msra.mxu0 %v31
    %404 = vmatprep.subr.mxu0 %v34
    %405 = vmatpush1.msra.mxu0 %v33
    %406 = vmatprep.subr.mxu0 0.0
    %407 = vmatpush1.msra.mxu0 0.0
    %408 = vmatprep.subr.mxu0 0.0
    %409 = vmatpush1.msra.mxu0 0.0
    %410 = vmatprep.subr.mxu0 0.0
    %411 = vmatpush1.msra.mxu0 0.0
    %412 = vmatprep.subr.mxu0 0.0
    %413 = vmatpush1.msra.mxu0 0.0
    %414 = vmatprep.subr.mxu0 0.0
    %415 = vmatpush1.msra.mxu0 0.0
    %416 = vmatprep.subr.mxu0 0.0
    %417 = vmatpush1.msra.mxu0 0.0
    %418 = vmatprep.subr.mxu0 0.0
    %419 = vmatpush1.msra.mxu0 0.0
    %420 = vmatprep.subr.mxu0 0.0
    %421 = vmatpush1.msra.mxu0 0.0
    %422 = vmatprep.subr.mxu0 0.0
    %423 = vmatpush1.msra.mxu0 0.0
    %424 = vmatprep.subr.mxu0 0.0
    %425 = vmatpush1.msra.mxu0 0.0
    %426 = vmatprep.subr.mxu0 0.0
    %427 = vmatpush1.msra.mxu0 0.0
    %428 = vmatprep.subr.mxu0 0.0
    %429 = vmatpush1.msra.mxu0 0.0
    %430 = vmatprep.subr.mxu0 0.0
    %431 = vmatpush1.msra.mxu0 0.0
    %432 = vmatprep.subr.mxu0 0.0
    %433 = vmatpush1.msra.mxu0 0.0
    %434 = vmatprep.subr.mxu0 0.0
    %435 = vmatpush1.msra.mxu0 0.0
    %436 = vmatprep.subr.mxu0 0.0
    %437 = vmatpush1.msra.mxu0 0.0
    %438 = vmatprep.subr.mxu0 0.0
    %439 = vmatpush1.msra.mxu0 0.0
    %440 = vmatprep.subr.mxu0 0.0
    %441 = vmatpush1.msra.mxu0 0.0
    %442 = vmatprep.subr.mxu0 0.0
    %443 = vmatpush1.msra.mxu0 0.0
    %444 = vmatprep.subr.mxu0 0.0
    %445 = vmatpush1.msra.mxu0 0.0
    %446 = vmatprep.subr.mxu0 0.0
    %447 = vmatpush1.msra.mxu0 0.0
    %448 = vmatprep.subr.mxu0 0.0
    %449 = vmatpush1.msra.mxu0 0.0
    %450 = vmatprep.subr.mxu0 0.0
    %451 = vmatpush1.msra.mxu0 0.0
    %452 = vmatprep.subr.mxu0 0.0
    %453 = vmatpush1.msra.mxu0 0.0
    %454 = vmatprep.mubr.f32.mxu0 0.0
    %455 = vmatmul.mubr.f32.gmra.mrb[0].mxu0 %v388
    %v456 = vpop.f32.mrb[0].mxu0
    %v457 = vadd.f32 0.0, %v456
    %v458 = vpop.f32.mrb[0].mxu0
    %v459 = vadd.f32 0.0, %v458
    %460 = vdwg.mxu0
    %v463 = vcombine.low %v457, %v459
    %v465 = vunpack.c.l.s4 1983009808
    %v466 = vunpack.c.0.s8 %v465
    %v467 = vlaneseq
    %v468 = vshrl.u32 %v467, 7
    %v469 = vsub.s32 %v466, %v468
    %v470 = vrot.slane %v463, %v469
    %v472 = vadd.f32 %v386, %v470
    %v473 = vxor.u32 %v472, 2147483648
    %v474 = vmul.f32 %v473, 1.442695
    %v475 = vpow.pop %v474
    %v476 = vadd.f32 %v475, 1.0
    %v477 = vrcp.pop %v476
    %v478 = vmul.f32 1.0, %v477
    %480 = vrot.lane.b32.xlu0 %v472, 64
    %v481 = vpop.permute.xlu0 %480
    %v482 = vrot.slane %v481, 2
    %v484 = vtanh.pop %v482
    %v485 = vmul.f32 %v478, %v374
    %v486 = vmul.f32 %v478, %v484
    %488 = vrot.lane.b32.xlu0 %v486, 64
    %v489 = vpop.permute.xlu0 %488
    %v491 = vadd.f32 %v485, %v489
    %v492 = vtanh.pop %v491
    %v494 = vrot.slane %v478, 2
    %497 = vrot.lane.b32.xlu0 %v492, 64
    %v498 = vpop.permute.xlu0 %497
    %v500 = vmul.f32 %v494, %v498
    %v501 = vadd.f32 %v384, %v500
    %s502 = scalar_lea.vmem %s0, 16
    %v503 = vld [vmem:[%s502] sm:$0xf]
    %v505 = vsel %vm35, %v500, 0
    %507 = vmatprep.subr.mxu0 %v20
    %508 = vmatpush1.msra.mxu0 %v19
    %509 = vmatprep.subr.mxu0 %v22
    %510 = vmatpush1.msra.mxu0 %v21
    %511 = vmatprep.subr.mxu0 %v24
    %512 = vmatpush1.msra.mxu0 %v23
    %513 = vmatprep.subr.mxu0 %v26
    %514 = vmatpush1.msra.mxu0 %v25
    %515 = vmatprep.subr.mxu0 %v28
    %516 = vmatpush1.msra.mxu0 %v27
    %517 = vmatprep.subr.mxu0 %v30
    %518 = vmatpush1.msra.mxu0 %v29
    %519 = vmatprep.subr.mxu0 %v32
    %520 = vmatpush1.msra.mxu0 %v31
    %521 = vmatprep.subr.mxu0 %v34
    %522 = vmatpush1.msra.mxu0 %v33
    %523 = vmatprep.subr.mxu0 0.0
    %524 = vmatpush1.msra.mxu0 0.0
    %525 = vmatprep.subr.mxu0 0.0
    %526 = vmatpush1.msra.mxu0 0.0
    %527 = vmatprep.subr.mxu0 0.0
    %528 = vmatpush1.msra.mxu0 0.0
    %529 = vmatprep.subr.mxu0 0.0
    %530 = vmatpush1.msra.mxu0 0.0
    %531 = vmatprep.subr.mxu0 0.0
    %532 = vmatpush1.msra.mxu0 0.0
    %533 = vmatprep.subr.mxu0 0.0
    %534 = vmatpush1.msra.mxu0 0.0
    %535 = vmatprep.subr.mxu0 0.0
    %536 = vmatpush1.msra.mxu0 0.0
    %537 = vmatprep.subr.mxu0 0.0
    %538 = vmatpush1.msra.mxu0 0.0
    %539 = vmatprep.subr.mxu0 0.0
    %540 = vmatpush1.msra.mxu0 0.0
    %541 = vmatprep.subr.mxu0 0.0
    %542 = vmatpush1.msra.mxu0 0.0
    %543 = vmatprep.subr.mxu0 0.0
    %544 = vmatpush1.msra.mxu0 0.0
    %545 = vmatprep.subr.mxu0 0.0
    %546 = vmatpush1.msra.mxu0 0.0
    %547 = vmatprep.subr.mxu0 0.0
    %548 = vmatpush1.msra.mxu0 0.0
    %549 = vmatprep.subr.mxu0 0.0
    %550 = vmatpush1.msra.mxu0 0.0
    %551 = vmatprep.subr.mxu0 0.0
    %552 = vmatpush1.msra.mxu0 0.0
    %553 = vmatprep.subr.mxu0 0.0
    %554 = vmatpush1.msra.mxu0 0.0
    %555 = vmatprep.subr.mxu0 0.0
    %556 = vmatpush1.msra.mxu0 0.0
    %557 = vmatprep.subr.mxu0 0.0
    %558 = vmatpush1.msra.mxu0 0.0
    %559 = vmatprep.subr.mxu0 0.0
    %560 = vmatpush1.msra.mxu0 0.0
    %561 = vmatprep.subr.mxu0 0.0
    %562 = vmatpush1.msra.mxu0 0.0
    %563 = vmatprep.subr.mxu0 0.0
    %564 = vmatpush1.msra.mxu0 0.0
    %565 = vmatprep.subr.mxu0 0.0
    %566 = vmatpush1.msra.mxu0 0.0
    %567 = vmatprep.subr.mxu0 0.0
    %568 = vmatpush1.msra.mxu0 0.0
    %569 = vmatprep.subr.mxu0 0.0
    %570 = vmatpush1.msra.mxu0 0.0
    %571 = vmatprep.mubr.f32.mxu0 0.0
    %572 = vmatmul.mubr.f32.gmra.mrb[0].mxu0 %v505
    %v573 = vpop.f32.mrb[0].mxu0
    %v574 = vadd.f32 0.0, %v573
    %v575 = vpop.f32.mrb[0].mxu0
    %v576 = vadd.f32 0.0, %v575
    %577 = vdwg.mxu0
    %v580 = vcombine.low %v574, %v576
    %v582 = vunpack.c.l.s4 1983009808
    %v583 = vunpack.c.0.s8 %v582
    %v584 = vlaneseq
    %v585 = vshrl.u32 %v584, 7
    %v586 = vsub.s32 %v583, %v585
    %v587 = vrot.slane %v580, %v586
    %v589 = vadd.f32 %v503, %v587
    %v590 = vxor.u32 %v589, 2147483648
    %v591 = vmul.f32 %v590, 1.442695
    %v592 = vpow.pop %v591
    %v593 = vadd.f32 %v592, 1.0
    %v594 = vrcp.pop %v593
    %v595 = vmul.f32 1.0, %v594
    %597 = vrot.lane.b32.xlu0 %v589, 64
    %v598 = vpop.permute.xlu0 %597
    %v599 = vrot.slane %v598, 2
    %v601 = vtanh.pop %v599
    %v602 = vmul.f32 %v595, %v491
    %v603 = vmul.f32 %v595, %v601
    %605 = vrot.lane.b32.xlu0 %v603, 64
    %v606 = vpop.permute.xlu0 %605
    %v608 = vadd.f32 %v602, %v606
    %v609 = vtanh.pop %v608
    %v611 = vrot.slane %v595, 2
    %614 = vrot.lane.b32.xlu0 %v609, 64
    %v615 = vpop.permute.xlu0 %614
    %v617 = vmul.f32 %v611, %v615
    %v618 = vadd.f32 %v501, %v617
    %s619 = scalar_lea.vmem %s0, 20
    %v620 = vld [vmem:[%s619] sm:$0xf]
    %v622 = vsel %vm35, %v617, 0
    %624 = vmatprep.subr.mxu0 %v20
    %625 = vmatpush1.msra.mxu0 %v19
    %626 = vmatprep.subr.mxu0 %v22
    %627 = vmatpush1.msra.mxu0 %v21
    %628 = vmatprep.subr.mxu0 %v24
    %629 = vmatpush1.msra.mxu0 %v23
    %630 = vmatprep.subr.mxu0 %v26
    %631 = vmatpush1.msra.mxu0 %v25
    %632 = vmatprep.subr.mxu0 %v28
    %633 = vmatpush1.msra.mxu0 %v27
    %634 = vmatprep.subr.mxu0 %v30
    %635 = vmatpush1.msra.mxu0 %v29
    %636 = vmatprep.subr.mxu0 %v32
    %637 = vmatpush1.msra.mxu0 %v31
    %638 = vmatprep.subr.mxu0 %v34
    %639 = vmatpush1.msra.mxu0 %v33
    %640 = vmatprep.subr.mxu0 0.0
    %641 = vmatpush1.msra.mxu0 0.0
    %642 = vmatprep.subr.mxu0 0.0
    %643 = vmatpush1.msra.mxu0 0.0
    %644 = vmatprep.subr.mxu0 0.0
    %645 = vmatpush1.msra.mxu0 0.0
    %646 = vmatprep.subr.mxu0 0.0
    %647 = vmatpush1.msra.mxu0 0.0
    %648 = vmatprep.subr.mxu0 0.0
    %649 = vmatpush1.msra.mxu0 0.0
    %650 = vmatprep.subr.mxu0 0.0
    %651 = vmatpush1.msra.mxu0 0.0
    %652 = vmatprep.subr.mxu0 0.0
    %653 = vmatpush1.msra.mxu0 0.0
    %654 = vmatprep.subr.mxu0 0.0
    %655 = vmatpush1.msra.mxu0 0.0
    %656 = vmatprep.subr.mxu0 0.0
    %657 = vmatpush1.msra.mxu0 0.0
    %658 = vmatprep.subr.mxu0 0.0
    %659 = vmatpush1.msra.mxu0 0.0
    %660 = vmatprep.subr.mxu0 0.0
    %661 = vmatpush1.msra.mxu0 0.0
    %662 = vmatprep.subr.mxu0 0.0
    %663 = vmatpush1.msra.mxu0 0.0
    %664 = vmatprep.subr.mxu0 0.0
    %665 = vmatpush1.msra.mxu0 0.0
    %666 = vmatprep.subr.mxu0 0.0
    %667 = vmatpush1.msra.mxu0 0.0
    %668 = vmatprep.subr.mxu0 0.0
    %669 = vmatpush1.msra.mxu0 0.0
    %670 = vmatprep.subr.mxu0 0.0
    %671 = vmatpush1.msra.mxu0 0.0
    %672 = vmatprep.subr.mxu0 0.0
    %673 = vmatpush1.msra.mxu0 0.0
    %674 = vmatprep.subr.mxu0 0.0
    %675 = vmatpush1.msra.mxu0 0.0
    %676 = vmatprep.subr.mxu0 0.0
    %677 = vmatpush1.msra.mxu0 0.0
    %678 = vmatprep.subr.mxu0 0.0
    %679 = vmatpush1.msra.mxu0 0.0
    %680 = vmatprep.subr.mxu0 0.0
    %681 = vmatpush1.msra.mxu0 0.0
    %682 = vmatprep.subr.mxu0 0.0
    %683 = vmatpush1.msra.mxu0 0.0
    %684 = vmatprep.subr.mxu0 0.0
    %685 = vmatpush1.msra.mxu0 0.0
    %686 = vmatprep.subr.mxu0 0.0
    %687 = vmatpush1.msra.mxu0 0.0
    %688 = vmatprep.mubr.f32.mxu0 0.0
    %689 = vmatmul.mubr.f32.gmra.mrb[0].mxu0 %v622
    %v690 = vpop.f32.mrb[0].mxu0
    %v691 = vadd.f32 0.0, %v690
    %v692 = vpop.f32.mrb[0].mxu0
    %v693 = vadd.f32 0.0, %v692
    %694 = vdwg.mxu0
    %v697 = vcombine.low %v691, %v693
    %v699 = vunpack.c.l.s4 1983009808
    %v700 = vunpack.c.0.s8 %v699
    %v701 = vlaneseq
    %v702 = vshrl.u32 %v701, 7
    %v703 = vsub.s32 %v700, %v702
    %v704 = vrot.slane %v697, %v703
    %v706 = vadd.f32 %v620, %v704
    %v707 = vxor.u32 %v706, 2147483648
    %v708 = vmul.f32 %v707, 1.442695
    %v709 = vpow.pop %v708
    %v710 = vadd.f32 %v709, 1.0
    %v711 = vrcp.pop %v710
    %v712 = vmul.f32 1.0, %v711
    %714 = vrot.lane.b32.xlu0 %v706, 64
    %v715 = vpop.permute.xlu0 %714
    %v716 = vrot.slane %v715, 2
    %v718 = vtanh.pop %v716
    %v719 = vmul.f32 %v712, %v608
    %v720 = vmul.f32 %v712, %v718
    %722 = vrot.lane.b32.xlu0 %v720, 64
    %v723 = vpop.permute.xlu0 %722
    %v725 = vadd.f32 %v719, %v723
    %v726 = vtanh.pop %v725
    %v728 = vrot.slane %v712, 2
    %731 = vrot.lane.b32.xlu0 %v726, 64
    %v732 = vpop.permute.xlu0 %731
    %v734 = vmul.f32 %v728, %v732
    %v735 = vadd.f32 %v618, %v734
    %s736 = scalar_lea.vmem %s0, 24
    %v737 = vld [vmem:[%s736] sm:$0xf]
    %v739 = vsel %vm35, %v734, 0
    %741 = vmatprep.subr.mxu0 %v20
    %742 = vmatpush1.msra.mxu0 %v19
    %743 = vmatprep.subr.mxu0 %v22
    %744 = vmatpush1.msra.mxu0 %v21
    %745 = vmatprep.subr.mxu0 %v24
    %746 = vmatpush1.msra.mxu0 %v23
    %747 = vmatprep.subr.mxu0 %v26
    %748 = vmatpush1.msra.mxu0 %v25
    %749 = vmatprep.subr.mxu0 %v28
    %750 = vmatpush1.msra.mxu0 %v27
    %751 = vmatprep.subr.mxu0 %v30
    %752 = vmatpush1.msra.mxu0 %v29
    %753 = vmatprep.subr.mxu0 %v32
    %754 = vmatpush1.msra.mxu0 %v31
    %755 = vmatprep.subr.mxu0 %v34
    %756 = vmatpush1.msra.mxu0 %v33
    %757 = vmatprep.subr.mxu0 0.0
    %758 = vmatpush1.msra.mxu0 0.0
    %759 = vmatprep.subr.mxu0 0.0
    %760 = vmatpush1.msra.mxu0 0.0
    %761 = vmatprep.subr.mxu0 0.0
    %762 = vmatpush1.msra.mxu0 0.0
    %763 = vmatprep.subr.mxu0 0.0
    %764 = vmatpush1.msra.mxu0 0.0
    %765 = vmatprep.subr.mxu0 0.0
    %766 = vmatpush1.msra.mxu0 0.0
    %767 = vmatprep.subr.mxu0 0.0
    %768 = vmatpush1.msra.mxu0 0.0
    %769 = vmatprep.subr.mxu0 0.0
    %770 = vmatpush1.msra.mxu0 0.0
    %771 = vmatprep.subr.mxu0 0.0
    %772 = vmatpush1.msra.mxu0 0.0
    %773 = vmatprep.subr.mxu0 0.0
    %774 = vmatpush1.msra.mxu0 0.0
    %775 = vmatprep.subr.mxu0 0.0
    %776 = vmatpush1.msra.mxu0 0.0
    %777 = vmatprep.subr.mxu0 0.0
    %778 = vmatpush1.msra.mxu0 0.0
    %779 = vmatprep.subr.mxu0 0.0
    %780 = vmatpush1.msra.mxu0 0.0
    %781 = vmatprep.subr.mxu0 0.0
    %782 = vmatpush1.msra.mxu0 0.0
    %783 = vmatprep.subr.mxu0 0.0
    %784 = vmatpush1.msra.mxu0 0.0
    %785 = vmatprep.subr.mxu0 0.0
    %786 = vmatpush1.msra.mxu0 0.0
    %787 = vmatprep.subr.mxu0 0.0
    %788 = vmatpush1.msra.mxu0 0.0
    %789 = vmatprep.subr.mxu0 0.0
    %790 = vmatpush1.msra.mxu0 0.0
    %791 = vmatprep.subr.mxu0 0.0
    %792 = vmatpush1.msra.mxu0 0.0
    %793 = vmatprep.subr.mxu0 0.0
    %794 = vmatpush1.msra.mxu0 0.0
    %795 = vmatprep.subr.mxu0 0.0
    %796 = vmatpush1.msra.mxu0 0.0
    %797 = vmatprep.subr.mxu0 0.0
    %798 = vmatpush1.msra.mxu0 0.0
    %799 = vmatprep.subr.mxu0 0.0
    %800 = vmatpush1.msra.mxu0 0.0
    %801 = vmatprep.subr.mxu0 0.0
    %802 = vmatpush1.msra.mxu0 0.0
    %803 = vmatprep.subr.mxu0 0.0
    %804 = vmatpush1.msra.mxu0 0.0
    %805 = vmatprep.mubr.f32.mxu0 0.0
    %806 = vmatmul.mubr.f32.gmra.mrb[0].mxu0 %v739
    %v807 = vpop.f32.mrb[0].mxu0
    %v808 = vadd.f32 0.0, %v807
    %v809 = vpop.f32.mrb[0].mxu0
    %v810 = vadd.f32 0.0, %v809
    %811 = vdwg.mxu0
    %v814 = vcombine.low %v808, %v810
    %v816 = vunpack.c.l.s4 1983009808
    %v817 = vunpack.c.0.s8 %v816
    %v818 = vlaneseq
    %v819 = vshrl.u32 %v818, 7
    %v820 = vsub.s32 %v817, %v819
    %v821 = vrot.slane %v814, %v820
    %v823 = vadd.f32 %v737, %v821
    %v824 = vxor.u32 %v823, 2147483648
    %v825 = vmul.f32 %v824, 1.442695
    %v826 = vpow.pop %v825
    %v827 = vadd.f32 %v826, 1.0
    %v828 = vrcp.pop %v827
    %v829 = vmul.f32 1.0, %v828
    %831 = vrot.lane.b32.xlu0 %v823, 64
    %v832 = vpop.permute.xlu0 %831
    %v833 = vrot.slane %v832, 2
    %v835 = vtanh.pop %v833
    %v836 = vmul.f32 %v829, %v725
    %v837 = vmul.f32 %v829, %v835
    %839 = vrot.lane.b32.xlu0 %v837, 64
    %v840 = vpop.permute.xlu0 %839
    %v842 = vadd.f32 %v836, %v840
    %v843 = vtanh.pop %v842
    %v845 = vrot.slane %v829, 2
    %848 = vrot.lane.b32.xlu0 %v843, 64
    %v849 = vpop.permute.xlu0 %848
    %v851 = vmul.f32 %v845, %v849
    %v852 = vadd.f32 %v735, %v851
    %s853 = scalar_lea.vmem %s0, 28
    %v854 = vld [vmem:[%s853] sm:$0xf]
    %v856 = vsel %vm35, %v851, 0
    %858 = vmatprep.subr.mxu0 %v20
    %859 = vmatpush1.msra.mxu0 %v19
    %860 = vmatprep.subr.mxu0 %v22
    %861 = vmatpush1.msra.mxu0 %v21
    %862 = vmatprep.subr.mxu0 %v24
    %863 = vmatpush1.msra.mxu0 %v23
    %864 = vmatprep.subr.mxu0 %v26
    %865 = vmatpush1.msra.mxu0 %v25
    %866 = vmatprep.subr.mxu0 %v28
    %867 = vmatpush1.msra.mxu0 %v27
    %868 = vmatprep.subr.mxu0 %v30
    %869 = vmatpush1.msra.mxu0 %v29
    %870 = vmatprep.subr.mxu0 %v32
    %871 = vmatpush1.msra.mxu0 %v31
    %872 = vmatprep.subr.mxu0 %v34
    %873 = vmatpush1.msra.mxu0 %v33
    %874 = vmatprep.subr.mxu0 0.0
    %875 = vmatpush1.msra.mxu0 0.0
    %876 = vmatprep.subr.mxu0 0.0
    %877 = vmatpush1.msra.mxu0 0.0
    %878 = vmatprep.subr.mxu0 0.0
    %879 = vmatpush1.msra.mxu0 0.0
    %880 = vmatprep.subr.mxu0 0.0
    %881 = vmatpush1.msra.mxu0 0.0
    %882 = vmatprep.subr.mxu0 0.0
    %883 = vmatpush1.msra.mxu0 0.0
    %884 = vmatprep.subr.mxu0 0.0
    %885 = vmatpush1.msra.mxu0 0.0
    %886 = vmatprep.subr.mxu0 0.0
    %887 = vmatpush1.msra.mxu0 0.0
    %888 = vmatprep.subr.mxu0 0.0
    %889 = vmatpush1.msra.mxu0 0.0
    %890 = vmatprep.subr.mxu0 0.0
    %891 = vmatpush1.msra.mxu0 0.0
    %892 = vmatprep.subr.mxu0 0.0
    %893 = vmatpush1.msra.mxu0 0.0
    %894 = vmatprep.subr.mxu0 0.0
    %895 = vmatpush1.msra.mxu0 0.0
    %896 = vmatprep.subr.mxu0 0.0
    %897 = vmatpush1.msra.mxu0 0.0
    %898 = vmatprep.subr.mxu0 0.0
    %899 = vmatpush1.msra.mxu0 0.0
    %900 = vmatprep.subr.mxu0 0.0
    %901 = vmatpush1.msra.mxu0 0.0
    %902 = vmatprep.subr.mxu0 0.0
    %903 = vmatpush1.msra.mxu0 0.0
    %904 = vmatprep.subr.mxu0 0.0
    %905 = vmatpush1.msra.mxu0 0.0
    %906 = vmatprep.subr.mxu0 0.0
    %907 = vmatpush1.msra.mxu0 0.0
    %908 = vmatprep.subr.mxu0 0.0
    %909 = vmatpush1.msra.mxu0 0.0
    %910 = vmatprep.subr.mxu0 0.0
    %911 = vmatpush1.msra.mxu0 0.0
    %912 = vmatprep.subr.mxu0 0.0
    %913 = vmatpush1.msra.mxu0 0.0
    %914 = vmatprep.subr.mxu0 0.0
    %915 = vmatpush1.msra.mxu0 0.0
    %916 = vmatprep.subr.mxu0 0.0
    %917 = vmatpush1.msra.mxu0 0.0
    %918 = vmatprep.subr.mxu0 0.0
    %919 = vmatpush1.msra.mxu0 0.0
    %920 = vmatprep.subr.mxu0 0.0
    %921 = vmatpush1.msra.mxu0 0.0
    %922 = vmatprep.mubr.f32.mxu0 0.0
    %923 = vmatmul.mubr.f32.gmra.mrb[0].mxu0 %v856
    %v924 = vpop.f32.mrb[0].mxu0
    %v925 = vadd.f32 0.0, %v924
    %v926 = vpop.f32.mrb[0].mxu0
    %v927 = vadd.f32 0.0, %v926
    %928 = vdwg.mxu0
    %v931 = vcombine.low %v925, %v927
    %v933 = vunpack.c.l.s4 1983009808
    %v934 = vunpack.c.0.s8 %v933
    %v935 = vlaneseq
    %v936 = vshrl.u32 %v935, 7
    %v937 = vsub.s32 %v934, %v936
    %v938 = vrot.slane %v931, %v937
    %v940 = vadd.f32 %v854, %v938
    %v941 = vxor.u32 %v940, 2147483648
    %v942 = vmul.f32 %v941, 1.442695
    %v943 = vpow.pop %v942
    %v944 = vadd.f32 %v943, 1.0
    %v945 = vrcp.pop %v944
    %v946 = vmul.f32 1.0, %v945
    %948 = vrot.lane.b32.xlu0 %v940, 64
    %v949 = vpop.permute.xlu0 %948
    %v950 = vrot.slane %v949, 2
    %v952 = vtanh.pop %v950
    %v953 = vmul.f32 %v946, %v842
    %v954 = vmul.f32 %v946, %v952
    %956 = vrot.lane.b32.xlu0 %v954, 64
    %v957 = vpop.permute.xlu0 %956
    %v959 = vadd.f32 %v953, %v957
    %v960 = vtanh.pop %v959
    %v962 = vrot.slane %v946, 2
    %965 = vrot.lane.b32.xlu0 %v960, 64
    %v966 = vpop.permute.xlu0 %965
    %v968 = vmul.f32 %v962, %v966
    %v969 = vadd.f32 %v852, %v968
    %v970 = vmul.f32 %v969, 0.125
    %v971 = vld [vmem:[%s2] sm:$0xff]
    %v972 = vld [vmem:[%s2 + $0x8] sm:$0xff]
    %v973 = vld [vmem:[%s2 + $0x10] sm:$0xff]
    %v974 = vld [vmem:[%s2 + $0x18] sm:$0xff]
    %v975 = vld [vmem:[%s2 + $0x20] sm:$0xff]
    %v976 = vld [vmem:[%s2 + $0x28] sm:$0xff]
    %v977 = vld [vmem:[%s2 + $0x30] sm:$0xff]
    %v978 = vld [vmem:[%s2 + $0x38] sm:$0xff]
    %v979 = vld [vmem:[%s3] sm:$0x1]
    %v981 = vlaneseq
    %v982 = vshrl.u32 %v981, 7
    %v983 = vsub.s32 0, %v982
    %v984 = vrot.slane %v979, %v983
    %v987 = vsel %vm35, %v970, 0
    %989 = vmatprep.subr.mxu0 0.0
    %990 = vmatpush1.msra.mxu0 %v971
    %991 = vmatprep.subr.mxu0 0.0
    %992 = vmatpush1.msra.mxu0 %v972
    %993 = vmatprep.subr.mxu0 0.0
    %994 = vmatpush1.msra.mxu0 %v973
    %995 = vmatprep.subr.mxu0 0.0
    %996 = vmatpush1.msra.mxu0 %v974
    %997 = vmatprep.subr.mxu0 0.0
    %998 = vmatpush1.msra.mxu0 %v975
    %999 = vmatprep.subr.mxu0 0.0
    %1000 = vmatpush1.msra.mxu0 %v976
    %1001 = vmatprep.subr.mxu0 0.0
    %1002 = vmatpush1.msra.mxu0 %v977
    %1003 = vmatprep.subr.mxu0 0.0
    %1004 = vmatpush1.msra.mxu0 %v978
    %1005 = vmatprep.subr.mxu0 0.0
    %1006 = vmatpush1.msra.mxu0 0.0
    %1007 = vmatprep.subr.mxu0 0.0
    %1008 = vmatpush1.msra.mxu0 0.0
    %1009 = vmatprep.subr.mxu0 0.0
    %1010 = vmatpush1.msra.mxu0 0.0
    %1011 = vmatprep.subr.mxu0 0.0
    %1012 = vmatpush1.msra.mxu0 0.0
    %1013 = vmatprep.subr.mxu0 0.0
    %1014 = vmatpush1.msra.mxu0 0.0
    %1015 = vmatprep.subr.mxu0 0.0
    %1016 = vmatpush1.msra.mxu0 0.0
    %1017 = vmatprep.subr.mxu0 0.0
    %1018 = vmatpush1.msra.mxu0 0.0
    %1019 = vmatprep.subr.mxu0 0.0
    %1020 = vmatpush1.msra.mxu0 0.0
    %1021 = vmatprep.subr.mxu0 0.0
    %1022 = vmatpush1.msra.mxu0 0.0
    %1023 = vmatprep.subr.mxu0 0.0
    %1024 = vmatpush1.msra.mxu0 0.0
    %1025 = vmatprep.subr.mxu0 0.0
    %1026 = vmatpush1.msra.mxu0 0.0
    %1027 = vmatprep.subr.mxu0 0.0
    %1028 = vmatpush1.msra.mxu0 0.0
    %1029 = vmatprep.subr.mxu0 0.0
    %1030 = vmatpush1.msra.mxu0 0.0
    %1031 = vmatprep.subr.mxu0 0.0
    %1032 = vmatpush1.msra.mxu0 0.0
    %1033 = vmatprep.subr.mxu0 0.0
    %1034 = vmatpush1.msra.mxu0 0.0
    %1035 = vmatprep.subr.mxu0 0.0
    %1036 = vmatpush1.msra.mxu0 0.0
    %1037 = vmatprep.subr.mxu0 0.0
    %1038 = vmatpush1.msra.mxu0 0.0
    %1039 = vmatprep.subr.mxu0 0.0
    %1040 = vmatpush1.msra.mxu0 0.0
    %1041 = vmatprep.subr.mxu0 0.0
    %1042 = vmatpush1.msra.mxu0 0.0
    %1043 = vmatprep.subr.mxu0 0.0
    %1044 = vmatpush1.msra.mxu0 0.0
    %1045 = vmatprep.subr.mxu0 0.0
    %1046 = vmatpush1.msra.mxu0 0.0
    %1047 = vmatprep.subr.mxu0 0.0
    %1048 = vmatpush1.msra.mxu0 0.0
    %1049 = vmatprep.subr.mxu0 0.0
    %1050 = vmatpush1.msra.mxu0 0.0
    %1051 = vmatprep.subr.mxu0 0.0
    %1052 = vmatpush1.msra.mxu0 0.0
    %1053 = vmatprep.mubr.f32.mxu0 0.0
    %1054 = vmatmul.mubr.f32.gmra.mrb[0].mxu0 %v987
    %v1055 = vpop.f32.mrb[0].mxu0
    %v1056 = vadd.f32 %v984, %v1055
    %v1057 = vpop.f32.mrb[0].mxu0
    %1058 = vdwg.mxu0
    %vm1059 = vcmask 9216
    %1060 = vst.msk [vmem:[#allocation2] sm:$0x3] %vm1059, %v1056
    // Predicated region
    $region18: #{deepfake_detector_forward.3} parent=1 // pred_check
      _
    $region19: #{deepfake_detector_forward.3} parent=1 // pred_check_branch
      %1062 = sbr.rel (0) target = $region21
    $region20: #{deepfake_detector_forward.3} parent=1 // pred_region
      %s1064 = ssub.s32 32, 32
      %1065 = vsyncadd [#allocation3], %s1064
      %s1067 = sshll.u32 [#allocation2], 4
      %s1068 = int_to_ptr.vmem [resolvable:$true] %s1067
      %1070 = dma.vmem_to_hbm [thread:$0]  %s1068, 32, %s4, [#allocation3]
    $region21: #{deepfake_detector_forward.3} parent=1 // pred_fallthru
      _
    // Predicated region
    $region22: #{deepfake_detector_forward.3} parent=1 // pred_check
      _
    $region23: #{deepfake_detector_forward.3} parent=1 // pred_check_branch
      %1072 = sbr.rel (0) target = $region25
    $region24: #{deepfake_detector_forward.3} parent=1 // pred_region
      %1073 = dma.done [#allocation3], 32
    $region25: #{deepfake_detector_forward.3} parent=1 // pred_fallthru
      _
    %1074 = vsyncpa [#allocation3], 1

// kernel: deepfake_detector_forward.2
$region0: #{deepfake_detector_forward.2}
  #allocation0 [shape = 'u32[]', space=smem, size = 0x4, offset = 0x4, fixed_abs, tag = 'smem constant byte address 0x4 - core index']
  #allocation1 [shape = 'u32[144,128]{1,0:T(1,128)}', space=vmem, size = 0x12000, scoped, tag = 'internal scratch']
  #allocation2 [shape = 'f32[8,2048]{1,0:T(8,128)}', space=vmem, size = 0x10000, scoped, tag = 'scratch operand']
  %s0 = inlined_call_operand.vmem [shape: bf16[2,8,256,4], index: 0, kind: input, shape index: {}]
  %s1 = inlined_call_operand.vmem [shape: bf16[4,2048], index: 1, kind: input, shape index: {}]
  %s2 = inlined_call_operand.vmem [shape: f32[1,2048], index: 2, kind: input, shape index: {}]
  %s3 = inlined_call_operand.vmem [shape: f32[2048,256], index: 3, kind: input, shape index: {}]
  %s4 = inlined_call_operand.vmem [shape: f32[1,256], index: 4, kind: input, shape index: {}]
  %s5 = inlined_call_operand.vmem [shape: f32[2,8,256], index: 5, kind: output, shape index: {}]
  %s6 = sld [smem:[#allocation0]]
  $region60: #{deepfake_detector_forward.2} parent=0
    _
  %s8 = ssub.s32 1, %s6
  %s9 = scalar_select 0, %s8, %s6
  loop: start=0, step=1, limit=4
  $region2: #{deepfake_detector_forward.2} parent=0 // loop_pre_header
    _
  $region3: #{deepfake_detector_forward.2} parent=0 // loop_header
    %s11 = sphi 0, %s15
    %p12 = scmp.ge.s32.totalorder %s11, 4
    %s21 = sphi 0, %s23
    %s24 = sphi 0, %s21
    %s25 = sphi 0, %s24
    %s41 = sphi 0, %s25
    %s45 = sphi 0, %s45
    %s47 = sphi 0, %s45
    %s48 = sphi 0, %s47
    %s62 = sphi 0, %s48
    %s66 = sphi 0, %s66
    %s68 = sphi 0, %s66
    %s69 = sphi 0, %s68
    %s83 = sphi 0, %s69
    %s87 = sphi 0, %s87
    %s89 = sphi 0, %s87
    %s90 = sphi 0, %s89
    %s104 = sphi 0, %s90
    %s108 = sphi 0, %s108
    %s110 = sphi 0, %s108
    %s111 = sphi 0, %s110
    %s125 = sphi 0, %s111
    %s131 = sphi 0, %s133
    %s134 = sphi 0, %s131
    %s135 = sphi 0, %s134
    %s151 = sphi 0, %s135
  $region4: #{deepfake_detector_forward.2} parent=0 // loop_header_branch
    %14 = sbr.rel (%p12) target = $region8
  $region5: #{deepfake_detector_forward.2} parent=0 // loop_body
    %s16 = ssub.s32 %s11, 1
    %s17 = ssub.s32 %s11, 2
    %s18 = sadd.s32 %s11, 1
    %s19 = ssub.s32 %s11, %s18
    %p20 = scmp.eq.s32.totalorder %s19, 0
    %s22 = sadd.s32 %s21, 1
    %s23 = scalar_select %p20, %s21, %s22
    %p26 = pneg %p20
    %p27 = scmp.eq.s32.totalorder %s11, 1
    %p28 = por %p26, %p27
    %p29 = scmp.ne.s32.totalorder %s21, %s24
    %p30 = scmp.eq.s32.totalorder %s11, 0
    %p31 = por %p29, %p30
    %p32 = scmp.ne.s32.totalorder %s21, %s24
    %p33 = scmp.eq.s32.totalorder %s16, 1
    %p34 = por %p32, %p33
    %p35 = scmp.ne.s32.totalorder %s24, %s25
    %p36 = scmp.eq.s32.totalorder %s16, 0
    %p37 = por %p35, %p36
    %p38 = scmp.ne.s32.totalorder %s24, %s25
    %p39 = scmp.eq.s32.totalorder %s17, 1
    %p40 = por %p38, %p39
    %p42 = scmp.ne.s32.totalorder %s25, %s41
    %p43 = scmp.eq.s32.totalorder %s17, 0
    %p44 = por %p42, %p43
    %s46 = sadd.s32 %s45, 1
    %p49 = scmp.eq.s32.totalorder %s11, 1
    %p50 = scmp.ne.s32.totalorder %s45, %s47
    %p51 = scmp.eq.s32.totalorder %s11, 0
    %p52 = por %p50, %p51
    %p53 = scmp.ne.s32.totalorder %s45, %s47
    %p54 = scmp.eq.s32.totalorder %s16, 1
    %p55 = por %p53, %p54
    %p56 = scmp.ne.s32.totalorder %s47, %s48
    %p57 = scmp.eq.s32.totalorder %s16, 0
    %p58 = por %p56, %p57
    %p59 = scmp.ne.s32.totalorder %s47, %s48
    %p60 = scmp.eq.s32.totalorder %s17, 1
    %p61 = por %p59, %p60
    %p63 = scmp.ne.s32.totalorder %s48, %s62
    %p64 = scmp.eq.s32.totalorder %s17, 0
    %p65 = por %p63, %p64
    %s67 = sadd.s32 %s66, 1
    %p70 = scmp.eq.s32.totalorder %s11, 1
    %p71 = scmp.ne.s32.totalorder %s66, %s68
    %p72 = scmp.eq.s32.totalorder %s11, 0
    %p73 = por %p71, %p72
    %p74 = scmp.ne.s32.totalorder %s66, %s68
    %p75 = scmp.eq.s32.totalorder %s16, 1
    %p76 = por %p74, %p75
    %p77 = scmp.ne.s32.totalorder %s68, %s69
    %p78 = scmp.eq.s32.totalorder %s16, 0
    %p79 = por %p77, %p78
    %p80 = scmp.ne.s32.totalorder %s68, %s69
    %p81 = scmp.eq.s32.totalorder %s17, 1
    %p82 = por %p80, %p81
    %p84 = scmp.ne.s32.totalorder %s69, %s83
    %p85 = scmp.eq.s32.totalorder %s17, 0
    %p86 = por %p84, %p85
    %s88 = sadd.s32 %s87, 1
    %p91 = scmp.eq.s32.totalorder %s11, 1
    %p92 = scmp.ne.s32.totalorder %s87, %s89
    %p93 = scmp.eq.s32.totalorder %s11, 0
    %p94 = por %p92, %p93
    %p95 = scmp.ne.s32.totalorder %s87, %s89
    %p96 = scmp.eq.s32.totalorder %s16, 1
    %p97 = por %p95, %p96
    %p98 = scmp.ne.s32.totalorder %s89, %s90
    %p99 = scmp.eq.s32.totalorder %s16, 0
    %p100 = por %p98, %p99
    %p101 = scmp.ne.s32.totalorder %s89, %s90
    %p102 = scmp.eq.s32.totalorder %s17, 1
    %p103 = por %p101, %p102
    %p105 = scmp.ne.s32.totalorder %s90, %s104
    %p106 = scmp.eq.s32.totalorder %s17, 0
    %p107 = por %p105, %p106
    %s109 = sadd.s32 %s108, 1
    %p112 = scmp.eq.s32.totalorder %s11, 1
    %p113 = scmp.ne.s32.totalorder %s108, %s110
    %p114 = scmp.eq.s32.totalorder %s11, 0
    %p115 = por %p113, %p114
    %p116 = scmp.ne.s32.totalorder %s108, %s110
    %p117 = scmp.eq.s32.totalorder %s16, 1
    %p118 = por %p116, %p117
    %p119 = scmp.ne.s32.totalorder %s110, %s111
    %p120 = scmp.eq.s32.totalorder %s16, 0
    %p121 = por %p119, %p120
    %p122 = scmp.ne.s32.totalorder %s110, %s111
    %p123 = scmp.eq.s32.totalorder %s17, 1
    %p124 = por %p122, %p123
    %p126 = scmp.ne.s32.totalorder %s111, %s125
    %p127 = scmp.eq.s32.totalorder %s17, 0
    %p128 = por %p126, %p127
    %s129 = ssub.s32 %s11, %s18
    %p130 = scmp.eq.s32.totalorder %s129, 0
    %s132 = sadd.s32 %s131, 1
    %s133 = scalar_select %p130, %s131, %s132
    %p136 = pneg %p130
    %p137 = scmp.eq.s32.totalorder %s11, 1
    %p138 = por %p136, %p137
    %p139 = scmp.ne.s32.totalorder %s131, %s134
    %p140 = scmp.eq.s32.totalorder %s11, 0
    %p141 = por %p139, %p140
    %p142 = scmp.ne.s32.totalorder %s131, %s134
    %p143 = scmp.eq.s32.totalorder %s16, 1
    %p144 = por %p142, %p143
    %p145 = scmp.ne.s32.totalorder %s134, %s135
    %p146 = scmp.eq.s32.totalorder %s16, 0
    %p147 = por %p145, %p146
    %p148 = scmp.ne.s32.totalorder %s134, %s135
    %p149 = scmp.eq.s32.totalorder %s17, 1
    %p150 = por %p148, %p149
    %p152 = scmp.ne.s32.totalorder %s135, %s151
    %p153 = scmp.eq.s32.totalorder %s17, 0
    %p154 = por %p152, %p153
    %p155 = scmp.le.s32.totalorder 1, %s11
    %p156 = scmp.lt.s32.totalorder %s11, 3
    %p157 = pnand %p155, %p156
    %p158 = pneg %p157
    // Predicated region
    $region9: #{deepfake_detector_forward.2} parent=5 // pred_check
      _
    $region10: #{deepfake_detector_forward.2} parent=5 // pred_check_branch
      %160 = sbr.rel (%p157) target = $region12
    $region11: #{deepfake_detector_forward.2} parent=5 // pred_region
      %s161 = ssub.s32 %s11, 1
      // Predicated region
      $region13: #{deepfake_detector_forward.2} parent=11 // pred_check
        %p162 = pneg %p58
      $region14: #{deepfake_detector_forward.2} parent=11 // pred_check_branch
        %164 = sbr.rel (%p162) target = $region16
      $region15: #{deepfake_detector_forward.2} parent=11 // pred_region
        _
      $region16: #{deepfake_detector_forward.2} parent=11 // pred_fallthru
        _
      // Predicated region
      $region17: #{deepfake_detector_forward.2} parent=11 // pred_check
        %p165 = pneg %p79
      $region18: #{deepfake_detector_forward.2} parent=11 // pred_check_branch
        %167 = sbr.rel (%p165) target = $region20
      $region19: #{deepfake_detector_forward.2} parent=11 // pred_region
        _
      $region20: #{deepfake_detector_forward.2} parent=11 // pred_fallthru
        _
      // Predicated region
      $region21: #{deepfake_detector_forward.2} parent=11 // pred_check
        %p168 = pneg %p100
      $region22: #{deepfake_detector_forward.2} parent=11 // pred_check_branch
        %170 = sbr.rel (%p168) target = $region24
      $region23: #{deepfake_detector_forward.2} parent=11 // pred_region
        _
      $region24: #{deepfake_detector_forward.2} parent=11 // pred_fallthru
        _
      // Predicated region
      $region25: #{deepfake_detector_forward.2} parent=11 // pred_check
        %p171 = pneg %p121
      $region26: #{deepfake_detector_forward.2} parent=11 // pred_check_branch
        %173 = sbr.rel (%p171) target = $region28
      $region27: #{deepfake_detector_forward.2} parent=11 // pred_region
        _
      $region28: #{deepfake_detector_forward.2} parent=11 // pred_fallthru
        _
    $region12: #{deepfake_detector_forward.2} parent=5 // pred_fallthru
      _
    %p174 = scmp.lt.s32.totalorder %s11, 2
    // Predicated region
    $region29: #{deepfake_detector_forward.2} parent=5 // pred_check
      %p175 = pneg %p174
    $region30: #{deepfake_detector_forward.2} parent=5 // pred_check_branch
      %177 = sbr.rel (%p175) target = $region32
    $region31: #{deepfake_detector_forward.2} parent=5 // pred_region
      // Predicated region
      $region33: #{deepfake_detector_forward.2} parent=31 // pred_check
        %p178 = pneg %p31
      $region34: #{deepfake_detector_forward.2} parent=31 // pred_check_branch
        %180 = sbr.rel (%p178) target = $region36
      $region35: #{deepfake_detector_forward.2} parent=31 // pred_region
        %p181 = scmp.lt.s32.totalorder %s11, 1
        %s182 = scalar_select %p181, %s11, 1
        %s183 = smul.addr %s182, 256
        %s184 = smul.addr %s183, 4
        %s185 = scalar_lea.vmem %s0, %s184
      $region36: #{deepfake_detector_forward.2} parent=31 // pred_fallthru
        _
    $region32: #{deepfake_detector_forward.2} parent=5 // pred_fallthru
      _
    %p186 = scmp.le.s32.totalorder 1, %s11
    %p187 = scmp.lt.s32.totalorder %s11, 3
    %p188 = pnand %p186, %p187
    %p189 = pneg %p188
    // Predicated region
    $region37: #{deepfake_detector_forward.2} parent=5 // pred_check
      _
    $region38: #{deepfake_detector_forward.2} parent=5 // pred_check_branch
      %191 = sbr.rel (%p188) target = $region40
    $region39: #{deepfake_detector_forward.2} parent=5 // pred_region
      %s192 = ssub.s32 %s11, 1
      %p193 = scmp.lt.s32.totalorder %s16, 1
      %s194 = scalar_select %p193, %s16, 1
      %s195 = smul.addr %s194, 256
      %s196 = smul.addr %s195, 4
      %s197 = scalar_lea.vmem %s0, %s196
      %p198 = pneg %p37
      %p199 = pneg %p34
      %p200 = pneg %p58
      %p201 = pneg %p55
      %p202 = pneg %p79
      %p203 = pneg %p76
      %p204 = pneg %p100
      %p205 = pneg %p97
      %p206 = pneg %p121
      %p207 = pneg %p118
      %p208 = pneg %p147
      %p209 = pneg %p144
      %p210 = scmp.lt.s32.totalorder %s16, 1
      %s211 = scalar_select %p210, %s16, 1
      %s212 = smul.addr %s211, 2
      %s213 = smul.addr %s212, 8
      %s214 = scalar_lea.vmem %s5, %s213
      %p215 = scmp.lt.s32.totalorder %s16, 1
      %s216 = scalar_select %p215, %s16, 1
      %s217 = smul.addr %s216, 256
      %s218 = smul.addr %s217, 4
      %s219 = scalar_lea.vmem %s0, %s218
      %p220 = scmp.lt.s32.totalorder %s16, 1
      %s221 = scalar_select %p220, %s16, 1
      %s222 = smul.addr %s221, 2
      %s223 = smul.addr %s222, 8
      %s224 = scalar_lea.vmem %s5, %s223
      loop: start=0, step=1, limit=8
      $region41: #{deepfake_detector_forward.2} parent=39 // loop_pre_header
        _
      $region42: #{deepfake_detector_forward.2} parent=39 // loop_header
        %s227 = sphi 0, %s231
        %p228 = scmp.ge.s32.totalorder %s227, 8
      $region43: #{deepfake_detector_forward.2} parent=39 // loop_header_branch
        %230 = sbr.rel (%p228) target = $region47
      $region44: #{deepfake_detector_forward.2} parent=39 // loop_body
        %s232 = smul.u32 %s227, 32
        %s233 = smul.addr %s232, 4
        %s234 = scalar_lea.vmem %s219, %s233
        %v235 = vld [vmem:[%s234] sm:$0xf]
        %v236 = vld [vmem:[%s234 + $0x4] sm:$0xf]
        %v237 = vld [vmem:[%s234 + $0x8] sm:$0xf]
        %v238 = vld [vmem:[%s234 + $0xc] sm:$0xf]
        %v239 = vld [vmem:[%s234 + $0x10] sm:$0xf]
        %v240 = vld [vmem:[%s234 + $0x14] sm:$0xf]
        %v241 = vld [vmem:[%s234 + $0x18] sm:$0xf]
        %v242 = vld [vmem:[%s234 + $0x1c] sm:$0xf]
        %v243 = vld [vmem:[%s234 + $0x20] sm:$0xf]
        %v244 = vld [vmem:[%s234 + $0x24] sm:$0xf]
        %v245 = vld [vmem:[%s234 + $0x28] sm:$0xf]
        %v246 = vld [vmem:[%s234 + $0x2c] sm:$0xf]
        %v247 = vld [vmem:[%s234 + $0x30] sm:$0xf]
        %v248 = vld [vmem:[%s234 + $0x34] sm:$0xf]
        %v249 = vld [vmem:[%s234 + $0x38] sm:$0xf]
        %v250 = vld [vmem:[%s234 + $0x3c] sm:$0xf]
        %v251 = vld [vmem:[%s234 + $0x40] sm:$0xf]
        %v252 = vld [vmem:[%s234 + $0x44] sm:$0xf]
        %v253 = vld [vmem:[%s234 + $0x48] sm:$0xf]
        %v254 = vld [vmem:[%s234 + $0x4c] sm:$0xf]
        %v255 = vld [vmem:[%s234 + $0x50] sm:$0xf]
        %v256 = vld [vmem:[%s234 + $0x54] sm:$0xf]
        %v257 = vld [vmem:[%s234 + $0x58] sm:$0xf]
        %v258 = vld [vmem:[%s234 + $0x5c] sm:$0xf]
        %v259 = vld [vmem:[%s234 + $0x60] sm:$0xf]
        %v260 = vld [vmem:[%s234 + $0x64] sm:$0xf]
        %v261 = vld [vmem:[%s234 + $0x68] sm:$0xf]
        %v262 = vld [vmem:[%s234 + $0x6c] sm:$0xf]
        %v263 = vld [vmem:[%s234 + $0x70] sm:$0xf]
        %v264 = vld [vmem:[%s234 + $0x74] sm:$0xf]
        %v265 = vld [vmem:[%s234 + $0x78] sm:$0xf]
        %v266 = vld [vmem:[%s234 + $0x7c] sm:$0xf]
        %v267 = vld [vmem:[%s1] sm:$0xff]
        %v268 = vld [vmem:[%s1 + $0x8] sm:$0xff]
        %v269 = vld [vmem:[%s1 + $0x10] sm:$0xff]
        %v270 = vld [vmem:[%s1 + $0x18] sm:$0xff]
        %v271 = vld [vmem:[%s2] sm:$0xff]
        %v272 = vld [vmem:[%s2 + $0x8] sm:$0xff]
        %v275 = vlaneseq
        %v276 = vshrl.u32 %v275, 7
        %v277 = vsub.s32 0, %v276
        %v278 = vrot.slane %v271, %v277
        %v279 = vlaneseq
        %v280 = vshrl.u32 %v279, 7
        %v281 = vsub.s32 1, %v280
        %v282 = vrot.slane %v271, %v281
        %v283 = vlaneseq
        %v284 = vshrl.u32 %v283, 7
        %v285 = vsub.s32 2, %v284
        %v286 = vrot.slane %v271, %v285
        %v287 = vlaneseq
        %v288 = vshrl.u32 %v287, 7
        %v289 = vsub.s32 3, %v288
        %v290 = vrot.slane %v271, %v289
        %v291 = vlaneseq
        %v292 = vshrl.u32 %v291, 7
        %v293 = vsub.s32 4, %v292
        %v294 = vrot.slane %v271, %v293
        %v295 = vlaneseq
        %v296 = vshrl.u32 %v295, 7
        %v297 = vsub.s32 5, %v296
        %v298 = vrot.slane %v271, %v297
        %v299 = vlaneseq
        %v300 = vshrl.u32 %v299, 7
        %v301 = vsub.s32 6, %v300
        %v302 = vrot.slane %v271, %v301
        %v303 = vlaneseq
        %v304 = vshrl.u32 %v303, 7
        %v305 = vsub.s32 7, %v304
        %v306 = vrot.slane %v271, %v305
        %v307 = vlaneseq
        %v308 = vshrl.u32 %v307, 7
        %v309 = vsub.s32 0, %v308
        %v310 = vrot.slane %v272, %v309
        %v311 = vlaneseq
        %v312 = vshrl.u32 %v311, 7
        %v313 = vsub.s32 1, %v312
        %v314 = vrot.slane %v272, %v313
        %v315 = vlaneseq
        %v316 = vshrl.u32 %v315, 7
        %v317 = vsub.s32 2, %v316
        %v318 = vrot.slane %v272, %v317
        %v319 = vlaneseq
        %v320 = vshrl.u32 %v319, 7
        %v321 = vsub.s32 3, %v320
        %v322 = vrot.slane %v272, %v321
        %v323 = vlaneseq
        %v324 = vshrl.u32 %v323, 7
        %v325 = vsub.s32 4, %v324
        %v326 = vrot.slane %v272, %v325
        %v327 = vlaneseq
        %v328 = vshrl.u32 %v327, 7
        %v329 = vsub.s32 5, %v328
        %v330 = vrot.slane %v272, %v329
        %v331 = vlaneseq
        %v332 = vshrl.u32 %v331, 7
        %v333 = vsub.s32 6, %v332
        %v334 = vrot.slane %v272, %v333
        %v335 = vlaneseq
        %v336 = vshrl.u32 %v335, 7
        %v337 = vsub.s32 7, %v336
        %v338 = vrot.slane %v272, %v337
        %v387 = vunpack.c.l.b16 %v235
        %v388 = vunpack.c.l.b16 %v236
        %v389 = vunpack.c.l.b16 %v237
        %v390 = vunpack.c.l.b16 %v238
        %v391 = vunpack.c.l.b16 %v239
        %v392 = vunpack.c.l.b16 %v240
        %v393 = vunpack.c.l.b16 %v241
        %v394 = vunpack.c.l.b16 %v242
        %v395 = vunpack.c.l.b16 %v243
        %v396 = vunpack.c.l.b16 %v244
        %v397 = vunpack.c.l.b16 %v245
        %v398 = vunpack.c.l.b16 %v246
        %v399 = vunpack.c.l.b16 %v247
        %v400 = vunpack.c.l.b16 %v248
        %v401 = vunpack.c.l.b16 %v249
        %v402 = vunpack.c.l.b16 %v250
        %v403 = vunpack.c.l.b16 %v251
        %v404 = vunpack.c.l.b16 %v252
        %v405 = vunpack.c.l.b16 %v253
        %v406 = vunpack.c.l.b16 %v254
        %v407 = vunpack.c.l.b16 %v255
        %v408 = vunpack.c.l.b16 %v256
        %v409 = vunpack.c.l.b16 %v257
        %v410 = vunpack.c.l.b16 %v258
        %v411 = vunpack.c.l.b16 %v259
        %v412 = vunpack.c.l.b16 %v260
        %v413 = vunpack.c.l.b16 %v261
        %v414 = vunpack.c.l.b16 %v262
        %v415 = vunpack.c.l.b16 %v263
        %v416 = vunpack.c.l.b16 %v264
        %v417 = vunpack.c.l.b16 %v265
        %v418 = vunpack.c.l.b16 %v266
        %v419 = vpack.c.b16 %v388, %v387
        %v420 = vpack.c.b16 %v390, %v389
        %v421 = vpack.c.b16 %v392, %v391
        %v422 = vpack.c.b16 %v394, %v393
        %v423 = vpack.c.b16 %v396, %v395
        %v424 = vpack.c.b16 %v398, %v397
        %v425 = vpack.c.b16 %v400, %v399
        %v426 = vpack.c.b16 %v402, %v401
        %v427 = vpack.c.b16 %v404, %v403
        %v428 = vpack.c.b16 %v406, %v405
        %v429 = vpack.c.b16 %v408, %v407
        %v430 = vpack.c.b16 %v410, %v409
        %v431 = vpack.c.b16 %v412, %v411
        %v432 = vpack.c.b16 %v414, %v413
        %v433 = vpack.c.b16 %v416, %v415
        %v434 = vpack.c.b16 %v418, %v417
        %v439 = vcombine.high %v267, %v267
        %v441 = vunpack.c.l.s4 1983009808
        %v442 = vunpack.c.0.s8 %v441
        %v443 = vlaneseq
        %v444 = vshrl.u32 %v443, 7
        %v445 = vsub.s32 %v442, %v444
        %v446 = vrot.slane %v267, %v445
        %v448 = vunpack.c.l.s4 1983009808
        %v449 = vunpack.c.0.s8 %v448
        %v450 = vlaneseq
        %v451 = vshrl.u32 %v450, 7
        %v452 = vsub.s32 %v449, %v451
        %v453 = vrot.slane %v439, %v452
        %v454 = vcombine.high %v446, %v446
        %v455 = vcombine.high %v453, %v453
        %v456 = vcombine.high %v268, %v268
        %v458 = vunpack.c.l.s4 1983009808
        %v459 = vunpack.c.0.s8 %v458
        %v460 = vlaneseq
        %v461 = vshrl.u32 %v460, 7
        %v462 = vsub.s32 %v459, %v461
        %v463 = vrot.slane %v268, %v462
        %v465 = vunpack.c.l.s4 1983009808
        %v466 = vunpack.c.0.s8 %v465
        %v467 = vlaneseq
        %v468 = vshrl.u32 %v467, 7
        %v469 = vsub.s32 %v466, %v468
        %v470 = vrot.slane %v456, %v469
        %v471 = vcombine.high %v463, %v463
        %v472 = vcombine.high %v470, %v470
        %v473 = vcombine.high %v269, %v269
        %v475 = vunpack.c.l.s4 1983009808
        %v476 = vunpack.c.0.s8 %v475
        %v477 = vlaneseq
        %v478 = vshrl.u32 %v477, 7
        %v479 = vsub.s32 %v476, %v478
        %v480 = vrot.slane %v269, %v479
        %v482 = vunpack.c.l.s4 1983009808
        %v483 = vunpack.c.0.s8 %v482
        %v484 = vlaneseq
        %v485 = vshrl.u32 %v484, 7
        %v486 = vsub.s32 %v483, %v485
        %v487 = vrot.slane %v473, %v486
        %v488 = vcombine.high %v480, %v480
        %v489 = vcombine.high %v487, %v487
        %v490 = vcombine.high %v270, %v270
        %v492 = vunpack.c.l.s4 1983009808
        %v493 = vunpack.c.0.s8 %v492
        %v494 = vlaneseq
        %v495 = vshrl.u32 %v494, 7
        %v496 = vsub.s32 %v493, %v495
        %v497 = vrot.slane %v270, %v496
        %v499 = vunpack.c.l.s4 1983009808
        %v500 = vunpack.c.0.s8 %v499
        %v501 = vlaneseq
        %v502 = vshrl.u32 %v501, 7
        %v503 = vsub.s32 %v500, %v502
        %v504 = vrot.slane %v490, %v503
        %v505 = vcombine.high %v497, %v497
        %v506 = vcombine.high %v504, %v504
        %vm507 = vcmask 31744
        %v509 = vsel %vm507, %v419, 0
        %v512 = vsel %vm507, %v420, 0
        %v515 = vsel %vm507, %v421, 0
        %v518 = vsel %vm507, %v422, 0
        %v521 = vsel %vm507, %v423, 0
        %v524 = vsel %vm507, %v424, 0
        %v527 = vsel %vm507, %v425, 0
        %v530 = vsel %vm507, %v426, 0
        %v533 = vsel %vm507, %v427, 0
        %v536 = vsel %vm507, %v428, 0
        %v539 = vsel %vm507, %v429, 0
        %v542 = vsel %vm507, %v430, 0
        %v545 = vsel %vm507, %v431, 0
        %v548 = vsel %vm507, %v432, 0
        %v551 = vsel %vm507, %v433, 0
        %v554 = vsel %vm507, %v434, 0
        %vm556 = vcmask 1041408
        %v558 = vsel %vm556, %v446, 0
        %v561 = vsel %vm556, %v454, 0
        %v564 = vsel %vm556, %v453, 0
        %v567 = vsel %vm556, %v455, 0
        %v570 = vsel %vm556, %v463, 0
        %v573 = vsel %vm556, %v471, 0
        %v576 = vsel %vm556, %v470, 0
        %v579 = vsel %vm556, %v472, 0
        %v582 = vsel %vm556, %v480, 0
        %v585 = vsel %vm556, %v488, 0
        %v588 = vsel %vm556, %v487, 0
        %v591 = vsel %vm556, %v489, 0
        %v594 = vsel %vm556, %v497, 0
        %v597 = vsel %vm556, %v505, 0
        %v600 = vsel %vm556, %v504, 0
        %v603 = vsel %vm556, %v506, 0
        %605 = vmatprep.subr.bf16.mxu0 %v561
        %606 = vmatpush1.bf16.msra.mxu0 %v558
        %607 = vmatprep.subr.bf16.mxu0 0
        %608 = vmatpush1.bf16.msra.mxu0 0
        %609 = vmatprep.subr.bf16.mxu0 0
        %610 = vmatpush1.bf16.msra.mxu0 0
        %611 = vmatprep.subr.bf16.mxu0 0
        %612 = vmatpush1.bf16.msra.mxu0 0
        %613 = vmatprep.subr.bf16.mxu0 0
        %614 = vmatpush1.bf16.msra.mxu0 0
        %615 = vmatprep.subr.bf16.mxu0 0
        %616 = vmatpush1.bf16.msra.mxu0 0
        %617 = vmatprep.subr.bf16.mxu0 0
        %618 = vmatpush1.bf16.msra.mxu0 0
        %619 = vmatprep.subr.bf16.mxu0 0
        %620 = vmatpush1.bf16.msra.mxu0 0
        %621 = vmatprep.subr.bf16.mxu0 0
        %622 = vmatpush1.bf16.msra.mxu0 0
        %623 = vmatprep.subr.bf16.mxu0 0
        %624 = vmatpush1.bf16.msra.mxu0 0
        %625 = vmatprep.subr.bf16.mxu0 0
        %626 = vmatpush1.bf16.msra.mxu0 0
        %627 = vmatprep.subr.bf16.mxu0 0
        %628 = vmatpush1.bf16.msra.mxu0 0
        %629 = vmatprep.subr.bf16.mxu0 0
        %630 = vmatpush1.bf16.msra.mxu0 0
        %631 = vmatprep.subr.bf16.mxu0 0
        %632 = vmatpush1.bf16.msra.mxu0 0
        %633 = vmatprep.subr.bf16.mxu0 0
        %634 = vmatpush1.bf16.msra.mxu0 0
        %635 = vmatprep.subr.bf16.mxu0 0
        %636 = vmatpush1.bf16.msra.mxu0 0
        %637 = vmatprep.mubr.bf16.mxu0 0
        %638 = vmatmul.mubr.bf16.gmra.mrb[0].mxu0 %v509
        %v639 = vpop.f32.mrb[0].mxu0
        %v640 = vadd.f32 %v278, %v639
        %v641 = vpop.f32.mrb[0].mxu0
        %v642 = vadd.f32 %v282, %v641
        %v643 = vpop.f32.mrb[0].mxu0
        %v644 = vadd.f32 %v278, %v643
        %v645 = vpop.f32.mrb[0].mxu0
        %v646 = vadd.f32 %v282, %v645
        %647 = vmatprep.mubr.bf16.mxu0 0
        %648 = vmatmul.mubr.bf16.gmra.mrb[0].mxu0 %v512
        %v649 = vpop.f32.mrb[0].mxu0
        %v650 = vadd.f32 %v278, %v649
        %v651 = vpop.f32.mrb[0].mxu0
        %v652 = vadd.f32 %v282, %v651
        %v653 = vpop.f32.mrb[0].mxu0
        %v654 = vadd.f32 %v278, %v653
        %v655 = vpop.f32.mrb[0].mxu0
        %v656 = vadd.f32 %v282, %v655
        %657 = vmatprep.mubr.bf16.mxu0 0
        %658 = vmatmul.mubr.bf16.gmra.mrb[0].mxu0 %v515
        %v659 = vpop.f32.mrb[0].mxu0
        %v660 = vadd.f32 %v278, %v659
        %v661 = vpop.f32.mrb[0].mxu0
        %v662 = vadd.f32 %v282, %v661
        %v663 = vpop.f32.mrb[0].mxu0
        %v664 = vadd.f32 %v278, %v663
        %v665 = vpop.f32.mrb[0].mxu0
        %v666 = vadd.f32 %v282, %v665
        %667 = vmatprep.mubr.bf16.mxu0 0
        %668 = vmatmul.mubr.bf16.gmra.mrb[0].mxu0 %v518
        %v669 = vpop.f32.mrb[0].mxu0
        %v670 = vadd.f32 %v278, %v669
        %v671 = vpop.f32.mrb[0].mxu0
        %v672 = vadd.f32 %v282, %v671
        %v673 = vpop.f32.mrb[0].mxu0
        %v674 = vadd.f32 %v278, %v673
        %v675 = vpop.f32.mrb[0].mxu0
        %v676 = vadd.f32 %v282, %v675
        %677 = vmatprep.mubr.bf16.mxu0 0
        %678 = vmatmul.mubr.bf16.gmra.mrb[0].mxu0 %v521
        %v679 = vpop.f32.mrb[0].mxu0
        %v680 = vadd.f32 %v278, %v679
        %v681 = vpop.f32.mrb[0].mxu0
        %v682 = vadd.f32 %v282, %v681
        %v683 = vpop.f32.mrb[0].mxu0
        %v684 = vadd.f32 %v278, %v683
        %v685 = vpop.f32.mrb[0].mxu0
        %v686 = vadd.f32 %v282, %v685
        %687 = vmatprep.mubr.bf16.mxu0 0
        %688 = vmatmul.mubr.bf16.gmra.mrb[0].mxu0 %v524
        %v689 = vpop.f32.mrb[0].mxu0
        %v690 = vadd.f32 %v278, %v689
        %v691 = vpop.f32.mrb[0].mxu0
        %v692 = vadd.f32 %v282, %v691
        %v693 = vpop.f32.mrb[0].mxu0
        %v694 = vadd.f32 %v278, %v693
        %v695 = vpop.f32.mrb[0].mxu0
        %v696 = vadd.f32 %v282, %v695
        %697 = vmatprep.mubr.bf16.mxu0 0
        %698 = vmatmul.mubr.bf16.gmra.mrb[0].mxu0 %v527
        %v699 = vpop.f32.mrb[0].mxu0
        %v700 = vadd.f32 %v278, %v699
        %v701 = vpop.f32.mrb[0].mxu0
        %v702 = vadd.f32 %v282, %v701
        %v703 = vpop.f32.mrb[0].mxu0
        %v704 = vadd.f32 %v278, %v703
        %v705 = vpop.f32.mrb[0].mxu0
        %v706 = vadd.f32 %v282, %v705
        %707 = vmatprep.mubr.bf16.mxu0 0
        %708 = vmatmul.mubr.bf16.gmra.mrb[0].mxu0 %v530
        %v709 = vpop.f32.mrb[0].mxu0
        %v710 = vadd.f32 %v278, %v709
        %v711 = vpop.f32.mrb[0].mxu0
        %v712 = vadd.f32 %v282, %v711
        %v713 = vpop.f32.mrb[0].mxu0
        %v714 = vadd.f32 %v278, %v713
        %v715 = vpop.f32.mrb[0].mxu0
        %v716 = vadd.f32 %v282, %v715
        %717 = vmatprep.mubr.bf16.mxu0 0
        %718 = vmatmul.mubr.bf16.gmra.mrb[0].mxu0 %v533
        %v719 = vpop.f32.mrb[0].mxu0
        %v720 = vadd.f32 %v278, %v719
        %v721 = vpop.f32.mrb[0].mxu0
        %v722 = vadd.f32 %v282, %v721
        %v723 = vpop.f32.mrb[0].mxu0
        %v724 = vadd.f32 %v278, %v723
        %v725 = vpop.f32.mrb[0].mxu0
        %v726 = vadd.f32 %v282, %v725
        %727 = vmatprep.mubr.bf16.mxu0 0
        %728 = vmatmul.mubr.bf16.gmra.mrb[0].mxu0 %v536
        %v729 = vpop.f32.mrb[0].mxu0
        %v730 = vadd.f32 %v278, %v729
        %v731 = vpop.f32.mrb[0].mxu0
        %v732 = vadd.f32 %v282, %v731
        %v733 = vpop.f32.mrb[0].mxu0
        %v734 = vadd.f32 %v278, %v733
        %v735 = vpop.f32.mrb[0].mxu0
        %v736 = vadd.f32 %v282, %v735
        %737 = vmatprep.mubr.bf16.mxu0 0
        %738 = vmatmul.mubr.bf16.gmra.mrb[0].mxu0 %v539
        %v739 = vpop.f32.mrb[0].mxu0
        %v740 = vadd.f32 %v278, %v739
        %v741 = vpop.f32.mrb[0].mxu0
        %v742 = vadd.f32 %v282, %v741
        %v743 = vpop.f32.mrb[0].mxu0
        %v744 = vadd.f32 %v278, %v743
        %v745 = vpop.f32.mrb[0].mxu0
        %v746 = vadd.f32 %v282, %v745
        %747 = vmatprep.mubr.bf16.mxu0 0
        %748 = vmatmul.mubr.bf16.gmra.mrb[0].mxu0 %v542
        %v749 = vpop.f32.mrb[0].mxu0
        %v750 = vadd.f32 %v278, %v749
        %v751 = vpop.f32.mrb[0].mxu0
        %v752 = vadd.f32 %v282, %v751
        %v753 = vpop.f32.mrb[0].mxu0
        %v754 = vadd.f32 %v278, %v753
        %v755 = vpop.f32.mrb[0].mxu0
        %v756 = vadd.f32 %v282, %v755
        %757 = vmatprep.mubr.bf16.mxu0 0
        %758 = vmatmul.mubr.bf16.gmra.mrb[0].mxu0 %v545
        %v759 = vpop.f32.mrb[0].mxu0
        %v760 = vadd.f32 %v278, %v759
        %v761 = vpop.f32.mrb[0].mxu0
        %v762 = vadd.f32 %v282, %v761
        %v763 = vpop.f32.mrb[0].mxu0
        %v764 = vadd.f32 %v278, %v763
        %v765 = vpop.f32.mrb[0].mxu0
        %v766 = vadd.f32 %v282, %v765
        %767 = vmatprep.mubr.bf16.mxu0 0
        %768 = vmatmul.mubr.bf16.gmra.mrb[0].mxu0 %v548
        %v769 = vpop.f32.mrb[0].mxu0
        %v770 = vadd.f32 %v278, %v769
        %v771 = vpop.f32.mrb[0].mxu0
        %v772 = vadd.f32 %v282, %v771
        %v773 = vpop.f32.mrb[0].mxu0
        %v774 = vadd.f32 %v278, %v773
        %v775 = vpop.f32.mrb[0].mxu0
        %v776 = vadd.f32 %v282, %v775
        %777 = vmatprep.mubr.bf16.mxu0 0
        %778 = vmatmul.mubr.bf16.gmra.mrb[0].mxu0 %v551
        %v779 = vpop.f32.mrb[0].mxu0
        %v780 = vadd.f32 %v278, %v779
        %v781 = vpop.f32.mrb[0].mxu0
        %v782 = vadd.f32 %v282, %v781
        %v783 = vpop.f32.mrb[0].mxu0
        %v784 = vadd.f32 %v278, %v783
        %v785 = vpop.f32.mrb[0].mxu0
        %v786 = vadd.f32 %v282, %v785
        %787 = vmatprep.mubr.bf16.mxu0 0
        %788 = vmatmul.mubr.bf16.gmra.mrb[0].mxu0 %v554
        %v789 = vpop.f32.mrb[0].mxu0
        %v790 = vadd.f32 %v278, %v789
        %v791 = vpop.f32.mrb[0].mxu0
        %v792 = vadd.f32 %v282, %v791
        %v793 = vpop.f32.mrb[0].mxu0
        %v794 = vadd.f32 %v278, %v793
        %v795 = vpop.f32.mrb[0].mxu0
        %v796 = vadd.f32 %v282, %v795
        %797 = vdwg.mxu0
        %798 = vmatprep.subr.bf16.mxu0 %v567
        %799 = vmatpush1.bf16.msra.mxu0 %v564
        %800 = vmatprep.subr.bf16.mxu0 0
        %801 = vmatpush1.bf16.msra.mxu0 0
        %802 = vmatprep.subr.bf16.mxu0 0
        %803 = vmatpush1.bf16.msra.mxu0 0
        %804 = vmatprep.subr.bf16.mxu0 0
        %805 = vmatpush1.bf16.msra.mxu0 0
        %806 = vmatprep.subr.bf16.mxu0 0
        %807 = vmatpush1.bf16.msra.mxu0 0
        %808 = vmatprep.subr.bf16.mxu0 0
        %809 = vmatpush1.bf16.msra.mxu0 0
        %810 = vmatprep.subr.bf16.mxu0 0
        %811 = vmatpush1.bf16.msra.mxu0 0
        %812 = vmatprep.subr.bf16.mxu0 0
        %813 = vmatpush1.bf16.msra.mxu0 0
        %814 = vmatprep.subr.bf16.mxu0 0
        %815 = vmatpush1.bf16.msra.mxu0 0
        %816 = vmatprep.subr.bf16.mxu0 0
        %817 = vmatpush1.bf16.msra.mxu0 0
        %818 = vmatprep.subr.bf16.mxu0 0
        %819 = vmatpush1.bf16.msra.mxu0 0
        %820 = vmatprep.subr.bf16.mxu0 0
        %821 = vmatpush1.bf16.msra.mxu0 0
        %822 = vmatprep.subr.bf16.mxu0 0
        %823 = vmatpush1.bf16.msra.mxu0 0
        %824 = vmatprep.subr.bf16.mxu0 0
        %825 = vmatpush1.bf16.msra.mxu0 0
        %826 = vmatprep.subr.bf16.mxu0 0
        %827 = vmatpush1.bf16.msra.mxu0 0
        %828 = vmatprep.subr.bf16.mxu0 0
        %829 = vmatpush1.bf16.msra.mxu0 0
        %830 = vmatprep.mubr.bf16.mxu0 0
        %831 = vmatmul.mubr.bf16.gmra.mrb[0].mxu0 %v509
        %v832 = vpop.f32.mrb[0].mxu0
        %v833 = vadd.f32 %v286, %v832
        %v834 = vpop.f32.mrb[0].mxu0
        %v835 = vadd.f32 %v290, %v834
        %v836 = vpop.f32.mrb[0].mxu0
        %v837 = vadd.f32 %v286, %v836
        %v838 = vpop.f32.mrb[0].mxu0
        %v839 = vadd.f32 %v290, %v838
        %840 = vmatprep.mubr.bf16.mxu0 0
        %841 = vmatmul.mubr.bf16.gmra.mrb[0].mxu0 %v512
        %v842 = vpop.f32.mrb[0].mxu0
        %v843 = vadd.f32 %v286, %v842
        %v844 = vpop.f32.mrb[0].mxu0
        %v845 = vadd.f32 %v290, %v844
        %v846 = vpop.f32.mrb[0].mxu0
        %v847 = vadd.f32 %v286, %v846
        %v848 = vpop.f32.mrb[0].mxu0
        %v849 = vadd.f32 %v290, %v848
        %850 = vmatprep.mubr.bf16.mxu0 0
        %851 = vmatmul.mubr.bf16.gmra.mrb[0].mxu0 %v515
        %v852 = vpop.f32.mrb[0].mxu0
        %v853 = vadd.f32 %v286, %v852
        %v854 = vpop.f32.mrb[0].mxu0
        %v855 = vadd.f32 %v290, %v854
        %v856 = vpop.f32.mrb[0].mxu0
        %v857 = vadd.f32 %v286, %v856
        %v858 = vpop.f32.mrb[0].mxu0
        %v859 = vadd.f32 %v290, %v858
        %860 = vmatprep.mubr.bf16.mxu0 0
        %861 = vmatmul.mubr.bf16.gmra.mrb[0].mxu0 %v518
        %v862 = vpop.f32.mrb[0].mxu0
        %v863 = vadd.f32 %v286, %v862
        %v864 = vpop.f32.mrb[0].mxu0
        %v865 = vadd.f32 %v290, %v864
        %v866 = vpop.f32.mrb[0].mxu0
        %v867 = vadd.f32 %v286, %v866
        %v868 = vpop.f32.mrb[0].mxu0
        %v869 = vadd.f32 %v290, %v868
        %870 = vmatprep.mubr.bf16.mxu0 0
        %871 = vmatmul.mubr.bf16.gmra.mrb[0].mxu0 %v521
        %v872 = vpop.f32.mrb[0].mxu0
        %v873 = vadd.f32 %v286, %v872
        %v874 = vpop.f32.mrb[0].mxu0
        %v875 = vadd.f32 %v290, %v874
        %v876 = vpop.f32.mrb[0].mxu0
        %v877 = vadd.f32 %v286, %v876
        %v878 = vpop.f32.mrb[0].mxu0
        %v879 = vadd.f32 %v290, %v878
        %880 = vmatprep.mubr.bf16.mxu0 0
        %881 = vmatmul.mubr.bf16.gmra.mrb[0].mxu0 %v524
        %v882 = vpop.f32.mrb[0].mxu0
        %v883 = vadd.f32 %v286, %v882
        %v884 = vpop.f32.mrb[0].mxu0
        %v885 = vadd.f32 %v290, %v884
        %v886 = vpop.f32.mrb[0].mxu0
        %v887 = vadd.f32 %v286, %v886
        %v888 = vpop.f32.mrb[0].mxu0
        %v889 = vadd.f32 %v290, %v888
        %890 = vmatprep.mubr.bf16.mxu0 0
        %891 = vmatmul.mubr.bf16.gmra.mrb[0].mxu0 %v527
        %v892 = vpop.f32.mrb[0].mxu0
        %v893 = vadd.f32 %v286, %v892
        %v894 = vpop.f32.mrb[0].mxu0
        %v895 = vadd.f32 %v290, %v894
        %v896 = vpop.f32.mrb[0].mxu0
        %v897 = vadd.f32 %v286, %v896
        %v898 = vpop.f32.mrb[0].mxu0
        %v899 = vadd.f32 %v290, %v898
        %900 = vmatprep.mubr.bf16.mxu0 0
        %901 = vmatmul.mubr.bf16.gmra.mrb[0].mxu0 %v530
        %v902 = vpop.f32.mrb[0].mxu0
        %v903 = vadd.f32 %v286, %v902
        %v904 = vpop.f32.mrb[0].mxu0
        %v905 = vadd.f32 %v290, %v904
        %v906 = vpop.f32.mrb[0].mxu0
        %v907 = vadd.f32 %v286, %v906
        %v908 = vpop.f32.mrb[0].mxu0
        %v909 = vadd.f32 %v290, %v908
        %910 = vmatprep.mubr.bf16.mxu0 0
        %911 = vmatmul.mubr.bf16.gmra.mrb[0].mxu0 %v533
        %v912 = vpop.f32.mrb[0].mxu0
        %v913 = vadd.f32 %v286, %v912
        %v914 = vpop.f32.mrb[0].mxu0
        %v915 = vadd.f32 %v290, %v914
        %v916 = vpop.f32.mrb[0].mxu0
        %v917 = vadd.f32 %v286, %v916
        %v918 = vpop.f32.mrb[0].mxu0
        %v919 = vadd.f32 %v290, %v918
        %920 = vmatprep.mubr.bf16.mxu0 0
        %921 = vmatmul.mubr.bf16.gmra.mrb[0].mxu0 %v536
        %v922 = vpop.f32.mrb[0].mxu0
        %v923 = vadd.f32 %v286, %v922
        %v924 = vpop.f32.mrb[0].mxu0
        %v925 = vadd.f32 %v290, %v924
        %v926 = vpop.f32.mrb[0].mxu0
        %v927 = vadd.f32 %v286, %v926
        %v928 = vpop.f32.mrb[0].mxu0
        %v929 = vadd.f32 %v290, %v928
        %930 = vmatprep.mubr.bf16.mxu0 0
        %931 = vmatmul.mubr.bf16.gmra.mrb[0].mxu0 %v539
        %v932 = vpop.f32.mrb[0].mxu0
        %v933 = vadd.f32 %v286, %v932
        %v934 = vpop.f32.mrb[0].mxu0
        %v935 = vadd.f32 %v290, %v934
        %v936 = vpop.f32.mrb[0].mxu0
        %v937 = vadd.f32 %v286, %v936
        %v938 = vpop.f32.mrb[0].mxu0
        %v939 = vadd.f32 %v290, %v938
        %940 = vmatprep.mubr.bf16.mxu0 0
        %941 = vmatmul.mubr.bf16.gmra.mrb[0].mxu0 %v542
        %v942 = vpop.f32.mrb[0].mxu0
        %v943 = vadd.f32 %v286, %v942
        %v944 = vpop.f32.mrb[0].mxu0
        %v945 = vadd.f32 %v290, %v944
        %v946 = vpop.f32.mrb[0].mxu0
        %v947 = vadd.f32 %v286, %v946
        %v948 = vpop.f32.mrb[0].mxu0
        %v949 = vadd.f32 %v290, %v948
        %950 = vmatprep.mubr.bf16.mxu0 0
        %951 = vmatmul.mubr.bf16.gmra.mrb[0].mxu0 %v545
        %v952 = vpop.f32.mrb[0].mxu0
        %v953 = vadd.f32 %v286, %v952
        %v954 = vpop.f32.mrb[0].mxu0
        %v955 = vadd.f32 %v290, %v954
        %v956 = vpop.f32.mrb[0].mxu0
        %v957 = vadd.f32 %v286, %v956
        %v958 = vpop.f32.mrb[0].mxu0
        %v959 = vadd.f32 %v290, %v958
        %960 = vmatprep.mubr.bf16.mxu0 0
        %961 = vmatmul.mubr.bf16.gmra.mrb[0].mxu0 %v548
        %v962 = vpop.f32.mrb[0].mxu0
        %v963 = vadd.f32 %v286, %v962
        %v964 = vpop.f32.mrb[0].mxu0
        %v965 = vadd.f32 %v290, %v964
        %v966 = vpop.f32.mrb[0].mxu0
        %v967 = vadd.f32 %v286, %v966
        %v968 = vpop.f32.mrb[0].mxu0
        %v969 = vadd.f32 %v290, %v968
        %970 = vmatprep.mubr.bf16.mxu0 0
        %971 = vmatmul.mubr.bf16.gmra.mrb[0].mxu0 %v551
        %v972 = vpop.f32.mrb[0].mxu0
        %v973 = vadd.f32 %v286, %v972
        %v974 = vpop.f32.mrb[0].mxu0
        %v975 = vadd.f32 %v290, %v974
        %v976 = vpop.f32.mrb[0].mxu0
        %v977 = vadd.f32 %v286, %v976
        %v978 = vpop.f32.mrb[0].mxu0
        %v979 = vadd.f32 %v290, %v978
        %980 = vmatprep.mubr.bf16.mxu0 0
        %981 = vmatmul.mubr.bf16.gmra.mrb[0].mxu0 %v554
        %v982 = vpop.f32.mrb[0].mxu0
        %v983 = vadd.f32 %v286, %v982
        %v984 = vpop.f32.mrb[0].mxu0
        %v985 = vadd.f32 %v290, %v984
        %v986 = vpop.f32.mrb[0].mxu0
        %v987 = vadd.f32 %v286, %v986
        %v988 = vpop.f32.mrb[0].mxu0
        %v989 = vadd.f32 %v290, %v988
        %990 = vdwg.mxu0
        %991 = vmatprep.subr.bf16.mxu0 %v573
        %992 = vmatpush1.bf16.msra.mxu0 %v570
        %993 = vmatprep.subr.bf16.mxu0 0
        %994 = vmatpush1.bf16.msra.mxu0 0
        %995 = vmatprep.subr.bf16.mxu0 0
        %996 = vmatpush1.bf16.msra.mxu0 0
        %997 = vmatprep.subr.bf16.mxu0 0
        %998 = vmatpush1.bf16.msra.mxu0 0
        %999 = vmatprep.subr.bf16.mxu0 0
        %1000 = vmatpush1.bf16.msra.mxu0 0
        %1001 = vmatprep.subr.bf16.mxu0 0
        %1002 = vmatpush1.bf16.msra.mxu0 0
        %1003 = vmatprep.subr.bf16.mxu0 0
        %1004 = vmatpush1.bf16.msra.mxu0 0
        %1005 = vmatprep.subr.bf16.mxu0 0
        %1006 = vmatpush1.bf16.msra.mxu0 0
        %1007 = vmatprep.subr.bf16.mxu0 0
        %1008 = vmatpush1.bf16.msra.mxu0 0
        %1009 = vmatprep.subr.bf16.mxu0 0
        %1010 = vmatpush1.bf16.msra.mxu0 0
        %1011 = vmatprep.subr.bf16.mxu0 0
        %1012 = vmatpush1.bf16.msra.mxu0 0
        %1013 = vmatprep.subr.bf16.mxu0 0
        %1014 = vmatpush1.bf16.msra.mxu0 0
        %1015 = vmatprep.subr.bf16.mxu0 0
        %1016 = vmatpush1.bf16.msra.mxu0 0
        %1017 = vmatprep.subr.bf16.mxu0 0
        %1018 = vmatpush1.bf16.msra.mxu0 0
        %1019 = vmatprep.subr.bf16.mxu0 0
        %1020 = vmatpush1.bf16.msra.mxu0 0
        %1021 = vmatprep.subr.bf16.mxu0 0
        %1022 = vmatpush1.bf16.msra.mxu0 0
        %1023 = vmatprep.mubr.bf16.mxu0 0
        %1024 = vmatmul.mubr.bf16.gmra.mrb[0].mxu0 %v509
        %v1025 = vpop.f32.mrb[0].mxu0
        %v1026 = vadd.f32 %v294, %v1025
        %v1027 = vpop.f32.mrb[0].mxu0
        %v1028 = vadd.f32 %v298, %v1027
        %v1029 = vpop.f32.mrb[0].mxu0
        %v1030 = vadd.f32 %v294, %v1029
        %v1031 = vpop.f32.mrb[0].mxu0
        %v1032 = vadd.f32 %v298, %v1031
        %1033 = vmatprep.mubr.bf16.mxu0 0
        %1034 = vmatmul.mubr.bf16.gmra.mrb[0].mxu0 %v512
        %v1035 = vpop.f32.mrb[0].mxu0
        %v1036 = vadd.f32 %v294, %v1035
        %v1037 = vpop.f32.mrb[0].mxu0
        %v1038 = vadd.f32 %v298, %v1037
        %v1039 = vpop.f32.mrb[0].mxu0
        %v1040 = vadd.f32 %v294, %v1039
        %v1041 = vpop.f32.mrb[0].mxu0
        %v1042 = vadd.f32 %v298, %v1041
        %1043 = vmatprep.mubr.bf16.mxu0 0
        %1044 = vmatmul.mubr.bf16.gmra.mrb[0].mxu0 %v515
        %v1045 = vpop.f32.mrb[0].mxu0
        %v1046 = vadd.f32 %v294, %v1045
        %v1047 = vpop.f32.mrb[0].mxu0
        %v1048 = vadd.f32 %v298, %v1047
        %v1049 = vpop.f32.mrb[0].mxu0
        %v1050 = vadd.f32 %v294, %v1049
        %v1051 = vpop.f32.mrb[0].mxu0
        %v1052 = vadd.f32 %v298, %v1051
        %1053 = vmatprep.mubr.bf16.mxu0 0
        %1054 = vmatmul.mubr.bf16.gmra.mrb[0].mxu0 %v518
        %v1055 = vpop.f32.mrb[0].mxu0
        %v1056 = vadd.f32 %v294, %v1055
        %v1057 = vpop.f32.mrb[0].mxu0
        %v1058 = vadd.f32 %v298, %v1057
        %v1059 = vpop.f32.mrb[0].mxu0
        %v1060 = vadd.f32 %v294, %v1059
        %v1061 = vpop.f32.mrb[0].mxu0
        %v1062 = vadd.f32 %v298, %v1061
        %1063 = vmatprep.mubr.bf16.mxu0 0
        %1064 = vmatmul.mubr.bf16.gmra.mrb[0].mxu0 %v521
        %v1065 = vpop.f32.mrb[0].mxu0
        %v1066 = vadd.f32 %v294, %v1065
        %v1067 = vpop.f32.mrb[0].mxu0
        %v1068 = vadd.f32 %v298, %v1067
        %v1069 = vpop.f32.mrb[0].mxu0
        %v1070 = vadd.f32 %v294, %v1069
        %v1071 = vpop.f32.mrb[0].mxu0
        %v1072 = vadd.f32 %v298, %v1071
        %1073 = vmatprep.mubr.bf16.mxu0 0
        %1074 = vmatmul.mubr.bf16.gmra.mrb[0].mxu0 %v524
        %v1075 = vpop.f32.mrb[0].mxu0
        %v1076 = vadd.f32 %v294, %v1075
        %v1077 = vpop.f32.mrb[0].mxu0
        %v1078 = vadd.f32 %v298, %v1077
        %v1079 = vpop.f32.mrb[0].mxu0
        %v1080 = vadd.f32 %v294, %v1079
        %v1081 = vpop.f32.mrb[0].mxu0
        %v1082 = vadd.f32 %v298, %v1081
        %1083 = vmatprep.mubr.bf16.mxu0 0
        %1084 = vmatmul.mubr.bf16.gmra.mrb[0].mxu0 %v527
        %v1085 = vpop.f32.mrb[0].mxu0
        %v1086 = vadd.f32 %v294, %v1085
        %v1087 = vpop.f32.mrb[0].mxu0
        %v1088 = vadd.f32 %v298, %v1087
        %v1089 = vpop.f32.mrb[0].mxu0
        %v1090 = vadd.f32 %v294, %v1089
        %v1091 = vpop.f32.mrb[0].mxu0
        %v1092 = vadd.f32 %v298, %v1091
        %1093 = vmatprep.mubr.bf16.mxu0 0
        %1094 = vmatmul.mubr.bf16.gmra.mrb[0].mxu0 %v530
        %v1095 = vpop.f32.mrb[0].mxu0
        %v1096 = vadd.f32 %v294, %v1095
        %v1097 = vpop.f32.mrb[0].mxu0
        %v1098 = vadd.f32 %v298, %v1097
        %v1099 = vpop.f32.mrb[0].mxu0
        %v1100 = vadd.f32 %v294, %v1099
        %v1101 = vpop.f32.mrb[0].mxu0
        %v1102 = vadd.f32 %v298, %v1101
        %1103 = vmatprep.mubr.bf16.mxu0 0
        %1104 = vmatmul.mubr.bf16.gmra.mrb[0].mxu0 %v533
        %v1105 = vpop.f32.mrb[0].mxu0
        %v1106 = vadd.f32 %v294, %v1105
        %v1107 = vpop.f32.mrb[0].mxu0
        %v1108 = vadd.f32 %v298, %v1107
        %v1109 = vpop.f32.mrb[0].mxu0
        %v1110 = vadd.f32 %v294, %v1109
        %v1111 = vpop.f32.mrb[0].mxu0
        %v1112 = vadd.f32 %v298, %v1111
        %1113 = vmatprep.mubr.bf16.mxu0 0
        %1114 = vmatmul.mubr.bf16.gmra.mrb[0].mxu0 %v536
        %v1115 = vpop.f32.mrb[0].mxu0
        %v1116 = vadd.f32 %v294, %v1115
        %v1117 = vpop.f32.mrb[0].mxu0
        %v1118 = vadd.f32 %v298, %v1117
        %v1119 = vpop.f32.mrb[0].mxu0
        %v1120 = vadd.f32 %v294, %v1119
        %v1121 = vpop.f32.mrb[0].mxu0
        %v1122 = vadd.f32 %v298, %v1121
        %1123 = vmatprep.mubr.bf16.mxu0 0
        %1124 = vmatmul.mubr.bf16.gmra.mrb[0].mxu0 %v539
        %v1125 = vpop.f32.mrb[0].mxu0
        %v1126 = vadd.f32 %v294, %v1125
        %v1127 = vpop.f32.mrb[0].mxu0
        %v1128 = vadd.f32 %v298, %v1127
        %v1129 = vpop.f32.mrb[0].mxu0
        %v1130 = vadd.f32 %v294, %v1129
        %v1131 = vpop.f32.mrb[0].mxu0
        %v1132 = vadd.f32 %v298, %v1131
        %1133 = vmatprep.mubr.bf16.mxu0 0
        %1134 = vmatmul.mubr.bf16.gmra.mrb[0].mxu0 %v542
        %v1135 = vpop.f32.mrb[0].mxu0
        %v1136 = vadd.f32 %v294, %v1135
        %v1137 = vpop.f32.mrb[0].mxu0
        %v1138 = vadd.f32 %v298, %v1137
        %v1139 = vpop.f32.mrb[0].mxu0
        %v1140 = vadd.f32 %v294, %v1139
        %v1141 = vpop.f32.mrb[0].mxu0
        %v1142 = vadd.f32 %v298, %v1141
        %1143 = vmatprep.mubr.bf16.mxu0 0
        %1144 = vmatmul.mubr.bf16.gmra.mrb[0].mxu0 %v545
        %v1145 = vpop.f32.mrb[0].mxu0
        %v1146 = vadd.f32 %v294, %v1145
        %v1147 = vpop.f32.mrb[0].mxu0
        %v1148 = vadd.f32 %v298, %v1147
        %v1149 = vpop.f32.mrb[0].mxu0
        %v1150 = vadd.f32 %v294, %v1149
        %v1151 = vpop.f32.mrb[0].mxu0
        %v1152 = vadd.f32 %v298, %v1151
        %1153 = vmatprep.mubr.bf16.mxu0 0
        %1154 = vmatmul.mubr.bf16.gmra.mrb[0].mxu0 %v548
        %v1155 = vpop.f32.mrb[0].mxu0
        %v1156 = vadd.f32 %v294, %v1155
        %v1157 = vpop.f32.mrb[0].mxu0
        %v1158 = vadd.f32 %v298, %v1157
        %v1159 = vpop.f32.mrb[0].mxu0
        %v1160 = vadd.f32 %v294, %v1159
        %v1161 = vpop.f32.mrb[0].mxu0
        %v1162 = vadd.f32 %v298, %v1161
        %1163 = vmatprep.mubr.bf16.mxu0 0
        %1164 = vmatmul.mubr.bf16.gmra.mrb[0].mxu0 %v551
        %v1165 = vpop.f32.mrb[0].mxu0
        %v1166 = vadd.f32 %v294, %v1165
        %v1167 = vpop.f32.mrb[0].mxu0
        %v1168 = vadd.f32 %v298, %v1167
        %v1169 = vpop.f32.mrb[0].mxu0
        %v1170 = vadd.f32 %v294, %v1169
        %v1171 = vpop.f32.mrb[0].mxu0
        %v1172 = vadd.f32 %v298, %v1171
        %1173 = vmatprep.mubr.bf16.mxu0 0
        %1174 = vmatmul.mubr.bf16.gmra.mrb[0].mxu0 %v554
        %v1175 = vpop.f32.mrb[0].mxu0
        %v1176 = vadd.f32 %v294, %v1175
        %v1177 = vpop.f32.mrb[0].mxu0
        %v1178 = vadd.f32 %v298, %v1177
        %v1179 = vpop.f32.mrb[0].mxu0
        %v1180 = vadd.f32 %v294, %v1179
        %v1181 = vpop.f32.mrb[0].mxu0
        %v1182 = vadd.f32 %v298, %v1181
        %1183 = vdwg.mxu0
        %1184 = vmatprep.subr.bf16.mxu0 %v579
        %1185 = vmatpush1.bf16.msra.mxu0 %v576
        %1186 = vmatprep.subr.bf16.mxu0 0
        %1187 = vmatpush1.bf16.msra.mxu0 0
        %1188 = vmatprep.subr.bf16.mxu0 0
        %1189 = vmatpush1.bf16.msra.mxu0 0
        %1190 = vmatprep.subr.bf16.mxu0 0
        %1191 = vmatpush1.bf16.msra.mxu0 0
        %1192 = vmatprep.subr.bf16.mxu0 0
        %1193 = vmatpush1.bf16.msra.mxu0 0
        %1194 = vmatprep.subr.bf16.mxu0 0
        %1195 = vmatpush1.bf16.msra.mxu0 0
        %1196 = vmatprep.subr.bf16.mxu0 0
        %1197 = vmatpush1.bf16.msra.mxu0 0
        %1198 = vmatprep.subr.bf16.mxu0 0
        %1199 = vmatpush1.bf16.msra.mxu0 0
        %1200 = vmatprep.subr.bf16.mxu0 0
        %1201 = vmatpush1.bf16.msra.mxu0 0
        %1202 = vmatprep.subr.bf16.mxu0 0
        %1203 = vmatpush1.bf16.msra.mxu0 0
        %1204 = vmatprep.subr.bf16.mxu0 0
        %1205 = vmatpush1.bf16.msra.mxu0 0
        %1206 = vmatprep.subr.bf16.mxu0 0
        %1207 = vmatpush1.bf16.msra.mxu0 0
        %1208 = vmatprep.subr.bf16.mxu0 0
        %1209 = vmatpush1.bf16.msra.mxu0 0
        %1210 = vmatprep.subr.bf16.mxu0 0
        %1211 = vmatpush1.bf16.msra.mxu0 0
        %1212 = vmatprep.subr.bf16.mxu0 0
        %1213 = vmatpush1.bf16.msra.mxu0 0
        %1214 = vmatprep.subr.bf16.mxu0 0
        %1215 = vmatpush1.bf16.msra.mxu0 0
        %1216 = vmatprep.mubr.bf16.mxu0 0
        %1217 = vmatmul.mubr.bf16.gmra.mrb[0].mxu0 %v509
        %v1218 = vpop.f32.mrb[0].mxu0
        %v1219 = vadd.f32 %v302, %v1218
        %v1220 = vpop.f32.mrb[0].mxu0
        %v1221 = vadd.f32 %v306, %v1220
        %v1222 = vpop.f32.mrb[0].mxu0
        %v1223 = vadd.f32 %v302, %v1222
        %v1224 = vpop.f32.mrb[0].mxu0
        %v1225 = vadd.f32 %v306, %v1224
        %1226 = vmatprep.mubr.bf16.mxu0 0
        %1227 = vmatmul.mubr.bf16.gmra.mrb[0].mxu0 %v512
        %v1228 = vpop.f32.mrb[0].mxu0
        %v1229 = vadd.f32 %v302, %v1228
        %v1230 = vpop.f32.mrb[0].mxu0
        %v1231 = vadd.f32 %v306, %v1230
        %v1232 = vpop.f32.mrb[0].mxu0
        %v1233 = vadd.f32 %v302, %v1232
        %v1234 = vpop.f32.mrb[0].mxu0
        %v1235 = vadd.f32 %v306, %v1234
        %1236 = vmatprep.mubr.bf16.mxu0 0
        %1237 = vmatmul.mubr.bf16.gmra.mrb[0].mxu0 %v515
        %v1238 = vpop.f32.mrb[0].mxu0
        %v1239 = vadd.f32 %v302, %v1238
        %v1240 = vpop.f32.mrb[0].mxu0
        %v1241 = vadd.f32 %v306, %v1240
        %v1242 = vpop.f32.mrb[0].mxu0
        %v1243 = vadd.f32 %v302, %v1242
        %v1244 = vpop.f32.mrb[0].mxu0
        %v1245 = vadd.f32 %v306, %v1244
        %1246 = vmatprep.mubr.bf16.mxu0 0
        %1247 = vmatmul.mubr.bf16.gmra.mrb[0].mxu0 %v518
        %v1248 = vpop.f32.mrb[0].mxu0
        %v1249 = vadd.f32 %v302, %v1248
        %v1250 = vpop.f32.mrb[0].mxu0
        %v1251 = vadd.f32 %v306, %v1250
        %v1252 = vpop.f32.mrb[0].mxu0
        %v1253 = vadd.f32 %v302, %v1252
        %v1254 = vpop.f32.mrb[0].mxu0
        %v1255 = vadd.f32 %v306, %v1254
        %1256 = vmatprep.mubr.bf16.mxu0 0
        %1257 = vmatmul.mubr.bf16.gmra.mrb[0].mxu0 %v521
        %v1258 = vpop.f32.mrb[0].mxu0
        %v1259 = vadd.f32 %v302, %v1258
        %v1260 = vpop.f32.mrb[0].mxu0
        %v1261 = vadd.f32 %v306, %v1260
        %v1262 = vpop.f32.mrb[0].mxu0
        %v1263 = vadd.f32 %v302, %v1262
        %v1264 = vpop.f32.mrb[0].mxu0
        %v1265 = vadd.f32 %v306, %v1264
        %1266 = vmatprep.mubr.bf16.mxu0 0
        %1267 = vmatmul.mubr.bf16.gmra.mrb[0].mxu0 %v524
        %v1268 = vpop.f32.mrb[0].mxu0
        %v1269 = vadd.f32 %v302, %v1268
        %v1270 = vpop.f32.mrb[0].mxu0
        %v1271 = vadd.f32 %v306, %v1270
        %v1272 = vpop.f32.mrb[0].mxu0
        %v1273 = vadd.f32 %v302, %v1272
        %v1274 = vpop.f32.mrb[0].mxu0
        %v1275 = vadd.f32 %v306, %v1274
        %1276 = vmatprep.mubr.bf16.mxu0 0
        %1277 = vmatmul.mubr.bf16.gmra.mrb[0].mxu0 %v527
        %v1278 = vpop.f32.mrb[0].mxu0
        %v1279 = vadd.f32 %v302, %v1278
        %v1280 = vpop.f32.mrb[0].mxu0
        %v1281 = vadd.f32 %v306, %v1280
        %v1282 = vpop.f32.mrb[0].mxu0
        %v1283 = vadd.f32 %v302, %v1282
        %v1284 = vpop.f32.mrb[0].mxu0
        %v1285 = vadd.f32 %v306, %v1284
        %1286 = vmatprep.mubr.bf16.mxu0 0
        %1287 = vmatmul.mubr.bf16.gmra.mrb[0].mxu0 %v530
        %v1288 = vpop.f32.mrb[0].mxu0
        %v1289 = vadd.f32 %v302, %v1288
        %v1290 = vpop.f32.mrb[0].mxu0
        %v1291 = vadd.f32 %v306, %v1290
        %v1292 = vpop.f32.mrb[0].mxu0
        %v1293 = vadd.f32 %v302, %v1292
        %v1294 = vpop.f32.mrb[0].mxu0
        %v1295 = vadd.f32 %v306, %v1294
        %1296 = vmatprep.mubr.bf16.mxu0 0
        %1297 = vmatmul.mubr.bf16.gmra.mrb[0].mxu0 %v533
        %v1298 = vpop.f32.mrb[0].mxu0
        %v1299 = vadd.f32 %v302, %v1298
        %v1300 = vpop.f32.mrb[0].mxu0
        %v1301 = vadd.f32 %v306, %v1300
        %v1302 = vpop.f32.mrb[0].mxu0
        %v1303 = vadd.f32 %v302, %v1302
        %v1304 = vpop.f32.mrb[0].mxu0
        %v1305 = vadd.f32 %v306, %v1304
        %1306 = vmatprep.mubr.bf16.mxu0 0
        %1307 = vmatmul.mubr.bf16.gmra.mrb[0].mxu0 %v536
        %v1308 = vpop.f32.mrb[0].mxu0
        %v1309 = vadd.f32 %v302, %v1308
        %v1310 = vpop.f32.mrb[0].mxu0
        %v1311 = vadd.f32 %v306, %v1310
        %v1312 = vpop.f32.mrb[0].mxu0
        %v1313 = vadd.f32 %v302, %v1312
        %v1314 = vpop.f32.mrb[0].mxu0
        %v1315 = vadd.f32 %v306, %v1314
        %1316 = vmatprep.mubr.bf16.mxu0 0
        %1317 = vmatmul.mubr.bf16.gmra.mrb[0].mxu0 %v539
        %v1318 = vpop.f32.mrb[0].mxu0
        %v1319 = vadd.f32 %v302, %v1318
        %v1320 = vpop.f32.mrb[0].mxu0
        %v1321 = vadd.f32 %v306, %v1320
        %v1322 = vpop.f32.mrb[0].mxu0
        %v1323 = vadd.f32 %v302, %v1322
        %v1324 = vpop.f32.mrb[0].mxu0
        %v1325 = vadd.f32 %v306, %v1324
        %1326 = vmatprep.mubr.bf16.mxu0 0
        %1327 = vmatmul.mubr.bf16.gmra.mrb[0].mxu0 %v542
        %v1328 = vpop.f32.mrb[0].mxu0
        %v1329 = vadd.f32 %v302, %v1328
        %v1330 = vpop.f32.mrb[0].mxu0
        %v1331 = vadd.f32 %v306, %v1330
        %v1332 = vpop.f32.mrb[0].mxu0
        %v1333 = vadd.f32 %v302, %v1332
        %v1334 = vpop.f32.mrb[0].mxu0
        %v1335 = vadd.f32 %v306, %v1334
        %1336 = vmatprep.mubr.bf16.mxu0 0
        %1337 = vmatmul.mubr.bf16.gmra.mrb[0].mxu0 %v545
        %v1338 = vpop.f32.mrb[0].mxu0
        %v1339 = vadd.f32 %v302, %v1338
        %v1340 = vpop.f32.mrb[0].mxu0
        %v1341 = vadd.f32 %v306, %v1340
        %v1342 = vpop.f32.mrb[0].mxu0
        %v1343 = vadd.f32 %v302, %v1342
        %v1344 = vpop.f32.mrb[0].mxu0
        %v1345 = vadd.f32 %v306, %v1344
        %1346 = vmatprep.mubr.bf16.mxu0 0
        %1347 = vmatmul.mubr.bf16.gmra.mrb[0].mxu0 %v548
        %v1348 = vpop.f32.mrb[0].mxu0
        %v1349 = vadd.f32 %v302, %v1348
        %v1350 = vpop.f32.mrb[0].mxu0
        %v1351 = vadd.f32 %v306, %v1350
        %v1352 = vpop.f32.mrb[0].mxu0
        %v1353 = vadd.f32 %v302, %v1352
        %v1354 = vpop.f32.mrb[0].mxu0
        %v1355 = vadd.f32 %v306, %v1354
        %1356 = vmatprep.mubr.bf16.mxu0 0
        %1357 = vmatmul.mubr.bf16.gmra.mrb[0].mxu0 %v551
        %v1358 = vpop.f32.mrb[0].mxu0
        %v1359 = vadd.f32 %v302, %v1358
        %v1360 = vpop.f32.mrb[0].mxu0
        %v1361 = vadd.f32 %v306, %v1360
        %v1362 = vpop.f32.mrb[0].mxu0
        %v1363 = vadd.f32 %v302, %v1362
        %v1364 = vpop.f32.mrb[0].mxu0
        %v1365 = vadd.f32 %v306, %v1364
        %1366 = vmatprep.mubr.bf16.mxu0 0
        %1367 = vmatmul.mubr.bf16.gmra.mrb[0].mxu0 %v554
        %v1368 = vpop.f32.mrb[0].mxu0
        %v1369 = vadd.f32 %v302, %v1368
        %v1370 = vpop.f32.mrb[0].mxu0
        %v1371 = vadd.f32 %v306, %v1370
        %v1372 = vpop.f32.mrb[0].mxu0
        %v1373 = vadd.f32 %v302, %v1372
        %v1374 = vpop.f32.mrb[0].mxu0
        %v1375 = vadd.f32 %v306, %v1374
        %1376 = vdwg.mxu0
        %1377 = vmatprep.subr.bf16.mxu0 %v585
        %1378 = vmatpush1.bf16.msra.mxu0 %v582
        %1379 = vmatprep.subr.bf16.mxu0 0
        %1380 = vmatpush1.bf16.msra.mxu0 0
        %1381 = vmatprep.subr.bf16.mxu0 0
        %1382 = vmatpush1.bf16.msra.mxu0 0
        %1383 = vmatprep.subr.bf16.mxu0 0
        %1384 = vmatpush1.bf16.msra.mxu0 0
        %1385 = vmatprep.subr.bf16.mxu0 0
        %1386 = vmatpush1.bf16.msra.mxu0 0
        %1387 = vmatprep.subr.bf16.mxu0 0
        %1388 = vmatpush1.bf16.msra.mxu0 0
        %1389 = vmatprep.subr.bf16.mxu0 0
        %1390 = vmatpush1.bf16.msra.mxu0 0
        %1391 = vmatprep.subr.bf16.mxu0 0
        %1392 = vmatpush1.bf16.msra.mxu0 0
        %1393 = vmatprep.subr.bf16.mxu0 0
        %1394 = vmatpush1.bf16.msra.mxu0 0
        %1395 = vmatprep.subr.bf16.mxu0 0
        %1396 = vmatpush1.bf16.msra.mxu0 0
        %1397 = vmatprep.subr.bf16.mxu0 0
        %1398 = vmatpush1.bf16.msra.mxu0 0
        %1399 = vmatprep.subr.bf16.mxu0 0
        %1400 = vmatpush1.bf16.msra.mxu0 0
        %1401 = vmatprep.subr.bf16.mxu0 0
        %1402 = vmatpush1.bf16.msra.mxu0 0
        %1403 = vmatprep.subr.bf16.mxu0 0
        %1404 = vmatpush1.bf16.msra.mxu0 0
        %1405 = vmatprep.subr.bf16.mxu0 0
        %1406 = vmatpush1.bf16.msra.mxu0 0
        %1407 = vmatprep.subr.bf16.mxu0 0
        %1408 = vmatpush1.bf16.msra.mxu0 0
        %1409 = vmatprep.mubr.bf16.mxu0 0
        %1410 = vmatmul.mubr.bf16.gmra.mrb[0].mxu0 %v509
        %v1411 = vpop.f32.mrb[0].mxu0
        %v1412 = vadd.f32 %v310, %v1411
        %v1413 = vpop.f32.mrb[0].mxu0
        %v1414 = vadd.f32 %v314, %v1413
        %v1415 = vpop.f32.mrb[0].mxu0
        %v1416 = vadd.f32 %v310, %v1415
        %v1417 = vpop.f32.mrb[0].mxu0
        %v1418 = vadd.f32 %v314, %v1417
        %1419 = vmatprep.mubr.bf16.mxu0 0
        %1420 = vmatmul.mubr.bf16.gmra.mrb[0].mxu0 %v512
        %v1421 = vpop.f32.mrb[0].mxu0
        %v1422 = vadd.f32 %v310, %v1421
        %v1423 = vpop.f32.mrb[0].mxu0
        %v1424 = vadd.f32 %v314, %v1423
        %v1425 = vpop.f32.mrb[0].mxu0
        %v1426 = vadd.f32 %v310, %v1425
        %v1427 = vpop.f32.mrb[0].mxu0
        %v1428 = vadd.f32 %v314, %v1427
        %1429 = vmatprep.mubr.bf16.mxu0 0
        %1430 = vmatmul.mubr.bf16.gmra.mrb[0].mxu0 %v515
        %v1431 = vpop.f32.mrb[0].mxu0
        %v1432 = vadd.f32 %v310, %v1431
        %v1433 = vpop.f32.mrb[0].mxu0
        %v1434 = vadd.f32 %v314, %v1433
        %v1435 = vpop.f32.mrb[0].mxu0
        %v1436 = vadd.f32 %v310, %v1435
        %v1437 = vpop.f32.mrb[0].mxu0
        %v1438 = vadd.f32 %v314, %v1437
        %1439 = vmatprep.mubr.bf16.mxu0 0
        %1440 = vmatmul.mubr.bf16.gmra.mrb[0].mxu0 %v518
        %v1441 = vpop.f32.mrb[0].mxu0
        %v1442 = vadd.f32 %v310, %v1441
        %v1443 = vpop.f32.mrb[0].mxu0
        %v1444 = vadd.f32 %v314, %v1443
        %v1445 = vpop.f32.mrb[0].mxu0
        %v1446 = vadd.f32 %v310, %v1445
        %v1447 = vpop.f32.mrb[0].mxu0
        %v1448 = vadd.f32 %v314, %v1447
        %1449 = vmatprep.mubr.bf16.mxu0 0
        %1450 = vmatmul.mubr.bf16.gmra.mrb[0].mxu0 %v521
        %v1451 = vpop.f32.mrb[0].mxu0
        %v1452 = vadd.f32 %v310, %v1451
        %v1453 = vpop.f32.mrb[0].mxu0
        %v1454 = vadd.f32 %v314, %v1453
        %v1455 = vpop.f32.mrb[0].mxu0
        %v1456 = vadd.f32 %v310, %v1455
        %v1457 = vpop.f32.mrb[0].mxu0
        %v1458 = vadd.f32 %v314, %v1457
        %1459 = vmatprep.mubr.bf16.mxu0 0
        %1460 = vmatmul.mubr.bf16.gmra.mrb[0].mxu0 %v524
        %v1461 = vpop.f32.mrb[0].mxu0
        %v1462 = vadd.f32 %v310, %v1461
        %v1463 = vpop.f32.mrb[0].mxu0
        %v1464 = vadd.f32 %v314, %v1463
        %v1465 = vpop.f32.mrb[0].mxu0
        %v1466 = vadd.f32 %v310, %v1465
        %v1467 = vpop.f32.mrb[0].mxu0
        %v1468 = vadd.f32 %v314, %v1467
        %1469 = vmatprep.mubr.bf16.mxu0 0
        %1470 = vmatmul.mubr.bf16.gmra.mrb[0].mxu0 %v527
        %v1471 = vpop.f32.mrb[0].mxu0
        %v1472 = vadd.f32 %v310, %v1471
        %v1473 = vpop.f32.mrb[0].mxu0
        %v1474 = vadd.f32 %v314, %v1473
        %v1475 = vpop.f32.mrb[0].mxu0
        %v1476 = vadd.f32 %v310, %v1475
        %v1477 = vpop.f32.mrb[0].mxu0
        %v1478 = vadd.f32 %v314, %v1477
        %1479 = vmatprep.mubr.bf16.mxu0 0
        %1480 = vmatmul.mubr.bf16.gmra.mrb[0].mxu0 %v530
        %v1481 = vpop.f32.mrb[0].mxu0
        %v1482 = vadd.f32 %v310, %v1481
        %v1483 = vpop.f32.mrb[0].mxu0
        %v1484 = vadd.f32 %v314, %v1483
        %v1485 = vpop.f32.mrb[0].mxu0
        %v1486 = vadd.f32 %v310, %v1485
        %v1487 = vpop.f32.mrb[0].mxu0
        %v1488 = vadd.f32 %v314, %v1487
        %1489 = vmatprep.mubr.bf16.mxu0 0
        %1490 = vmatmul.mubr.bf16.gmra.mrb[0].mxu0 %v533
        %v1491 = vpop.f32.mrb[0].mxu0
        %v1492 = vadd.f32 %v310, %v1491
        %v1493 = vpop.f32.mrb[0].mxu0
        %v1494 = vadd.f32 %v314, %v1493
        %v1495 = vpop.f32.mrb[0].mxu0
        %v1496 = vadd.f32 %v310, %v1495
        %v1497 = vpop.f32.mrb[0].mxu0
        %v1498 = vadd.f32 %v314, %v1497
        %1499 = vmatprep.mubr.bf16.mxu0 0
        %1500 = vmatmul.mubr.bf16.gmra.mrb[0].mxu0 %v536
        %v1501 = vpop.f32.mrb[0].mxu0
        %v1502 = vadd.f32 %v310, %v1501
        %v1503 = vpop.f32.mrb[0].mxu0
        %v1504 = vadd.f32 %v314, %v1503
        %v1505 = vpop.f32.mrb[0].mxu0
        %v1506 = vadd.f32 %v310, %v1505
        %v1507 = vpop.f32.mrb[0].mxu0
        %v1508 = vadd.f32 %v314, %v1507
        %1509 = vmatprep.mubr.bf16.mxu0 0
        %1510 = vmatmul.mubr.bf16.gmra.mrb[0].mxu0 %v539
        %v1511 = vpop.f32.mrb[0].mxu0
        %v1512 = vadd.f32 %v310, %v1511
        %v1513 = vpop.f32.mrb[0].mxu0
        %v1514 = vadd.f32 %v314, %v1513
        %v1515 = vpop.f32.mrb[0].mxu0
        %v1516 = vadd.f32 %v310, %v1515
        %v1517 = vpop.f32.mrb[0].mxu0
        %v1518 = vadd.f32 %v314, %v1517
        %1519 = vmatprep.mubr.bf16.mxu0 0
        %1520 = vmatmul.mubr.bf16.gmra.mrb[0].mxu0 %v542
        %v1521 = vpop.f32.mrb[0].mxu0
        %v1522 = vadd.f32 %v310, %v1521
        %v1523 = vpop.f32.mrb[0].mxu0
        %v1524 = vadd.f32 %v314, %v1523
        %v1525 = vpop.f32.mrb[0].mxu0
        %v1526 = vadd.f32 %v310, %v1525
        %v1527 = vpop.f32.mrb[0].mxu0
        %v1528 = vadd.f32 %v314, %v1527
        %1529 = vmatprep.mubr.bf16.mxu0 0
        %1530 = vmatmul.mubr.bf16.gmra.mrb[0].mxu0 %v545
        %v1531 = vpop.f32.mrb[0].mxu0
        %v1532 = vadd.f32 %v310, %v1531
        %v1533 = vpop.f32.mrb[0].mxu0
        %v1534 = vadd.f32 %v314, %v1533
        %v1535 = vpop.f32.mrb[0].mxu0
        %v1536 = vadd.f32 %v310, %v1535
        %v1537 = vpop.f32.mrb[0].mxu0
        %v1538 = vadd.f32 %v314, %v1537
        %1539 = vmatprep.mubr.bf16.mxu0 0
        %1540 = vmatmul.mubr.bf16.gmra.mrb[0].mxu0 %v548
        %v1541 = vpop.f32.mrb[0].mxu0
        %v1542 = vadd.f32 %v310, %v1541
        %v1543 = vpop.f32.mrb[0].mxu0
        %v1544 = vadd.f32 %v314, %v1543
        %v1545 = vpop.f32.mrb[0].mxu0
        %v1546 = vadd.f32 %v310, %v1545
        %v1547 = vpop.f32.mrb[0].mxu0
        %v1548 = vadd.f32 %v314, %v1547
        %1549 = vmatprep.mubr.bf16.mxu0 0
        %1550 = vmatmul.mubr.bf16.gmra.mrb[0].mxu0 %v551
        %v1551 = vpop.f32.mrb[0].mxu0
        %v1552 = vadd.f32 %v310, %v1551
        %v1553 = vpop.f32.mrb[0].mxu0
        %v1554 = vadd.f32 %v314, %v1553
        %v1555 = vpop.f32.mrb[0].mxu0
        %v1556 = vadd.f32 %v310, %v1555
        %v1557 = vpop.f32.mrb[0].mxu0
        %v1558 = vadd.f32 %v314, %v1557
        %1559 = vmatprep.mubr.bf16.mxu0 0
        %1560 = vmatmul.mubr.bf16.gmra.mrb[0].mxu0 %v554
        %v1561 = vpop.f32.mrb[0].mxu0
        %v1562 = vadd.f32 %v310, %v1561
        %v1563 = vpop.f32.mrb[0].mxu0
        %v1564 = vadd.f32 %v314, %v1563
        %v1565 = vpop.f32.mrb[0].mxu0
        %v1566 = vadd.f32 %v310, %v1565
        %v1567 = vpop.f32.mrb[0].mxu0
        %v1568 = vadd.f32 %v314, %v1567
        %1569 = vdwg.mxu0
        %1570 = vmatprep.subr.bf16.mxu0 %v591
        %1571 = vmatpush1.bf16.msra.mxu0 %v588
        %1572 = vmatprep.subr.bf16.mxu0 0
        %1573 = vmatpush1.bf16.msra.mxu0 0
        %1574 = vmatprep.subr.bf16.mxu0 0
        %1575 = vmatpush1.bf16.msra.mxu0 0
        %1576 = vmatprep.subr.bf16.mxu0 0
        %1577 = vmatpush1.bf16.msra.mxu0 0
        %1578 = vmatprep.subr.bf16.mxu0 0
        %1579 = vmatpush1.bf16.msra.mxu0 0
        %1580 = vmatprep.subr.bf16.mxu0 0
        %1581 = vmatpush1.bf16.msra.mxu0 0
        %1582 = vmatprep.subr.bf16.mxu0 0
        %1583 = vmatpush1.bf16.msra.mxu0 0
        %1584 = vmatprep.subr.bf16.mxu0 0
        %1585 = vmatpush1.bf16.msra.mxu0 0
        %1586 = vmatprep.subr.bf16.mxu0 0
        %1587 = vmatpush1.bf16.msra.mxu0 0
        %1588 = vmatprep.subr.bf16.mxu0 0
        %1589 = vmatpush1.bf16.msra.mxu0 0
        %1590 = vmatprep.subr.bf16.mxu0 0
        %1591 = vmatpush1.bf16.msra.mxu0 0
        %1592 = vmatprep.subr.bf16.mxu0 0
        %1593 = vmatpush1.bf16.msra.mxu0 0
        %1594 = vmatprep.subr.bf16.mxu0 0
        %1595 = vmatpush1.bf16.msra.mxu0 0
        %1596 = vmatprep.subr.bf16.mxu0 0
        %1597 = vmatpush1.bf16.msra.mxu0 0
        %1598 = vmatprep.subr.bf16.mxu0 0
        %1599 = vmatpush1.bf16.msra.mxu0 0
        %1600 = vmatprep.subr.bf16.mxu0 0
        %1601 = vmatpush1.bf16.msra.mxu0 0
        %1602 = vmatprep.mubr.bf16.mxu0 0
        %1603 = vmatmul.mubr.bf16.gmra.mrb[0].mxu0 %v509
        %v1604 = vpop.f32.mrb[0].mxu0
        %v1605 = vadd.f32 %v318, %v1604
        %v1606 = vpop.f32.mrb[0].mxu0
        %v1607 = vadd.f32 %v322, %v1606
        %v1608 = vpop.f32.mrb[0].mxu0
        %v1609 = vadd.f32 %v318, %v1608
        %v1610 = vpop.f32.mrb[0].mxu0
        %v1611 = vadd.f32 %v322, %v1610
        %1612 = vmatprep.mubr.bf16.mxu0 0
        %1613 = vmatmul.mubr.bf16.gmra.mrb[0].mxu0 %v512
        %v1614 = vpop.f32.mrb[0].mxu0
        %v1615 = vadd.f32 %v318, %v1614
        %v1616 = vpop.f32.mrb[0].mxu0
        %v1617 = vadd.f32 %v322, %v1616
        %v1618 = vpop.f32.mrb[0].mxu0
        %v1619 = vadd.f32 %v318, %v1618
        %v1620 = vpop.f32.mrb[0].mxu0
        %v1621 = vadd.f32 %v322, %v1620
        %1622 = vmatprep.mubr.bf16.mxu0 0
        %1623 = vmatmul.mubr.bf16.gmra.mrb[0].mxu0 %v515
        %v1624 = vpop.f32.mrb[0].mxu0
        %v1625 = vadd.f32 %v318, %v1624
        %v1626 = vpop.f32.mrb[0].mxu0
        %v1627 = vadd.f32 %v322, %v1626
        %v1628 = vpop.f32.mrb[0].mxu0
        %v1629 = vadd.f32 %v318, %v1628
        %v1630 = vpop.f32.mrb[0].mxu0
        %v1631 = vadd.f32 %v322, %v1630
        %1632 = vmatprep.mubr.bf16.mxu0 0
        %1633 = vmatmul.mubr.bf16.gmra.mrb[0].mxu0 %v518
        %v1634 = vpop.f32.mrb[0].mxu0
        %v1635 = vadd.f32 %v318, %v1634
        %v1636 = vpop.f32.mrb[0].mxu0
        %v1637 = vadd.f32 %v322, %v1636
        %v1638 = vpop.f32.mrb[0].mxu0
        %v1639 = vadd.f32 %v318, %v1638
        %v1640 = vpop.f32.mrb[0].mxu0
        %v1641 = vadd.f32 %v322, %v1640
        %1642 = vmatprep.mubr.bf16.mxu0 0
        %1643 = vmatmul.mubr.bf16.gmra.mrb[0].mxu0 %v521
        %v1644 = vpop.f32.mrb[0].mxu0
        %v1645 = vadd.f32 %v318, %v1644
        %v1646 = vpop.f32.mrb[0].mxu0
        %v1647 = vadd.f32 %v322, %v1646
        %v1648 = vpop.f32.mrb[0].mxu0
        %v1649 = vadd.f32 %v318, %v1648
        %v1650 = vpop.f32.mrb[0].mxu0
        %v1651 = vadd.f32 %v322, %v1650
        %1652 = vmatprep.mubr.bf16.mxu0 0
        %1653 = vmatmul.mubr.bf16.gmra.mrb[0].mxu0 %v524
        %v1654 = vpop.f32.mrb[0].mxu0
        %v1655 = vadd.f32 %v318, %v1654
        %v1656 = vpop.f32.mrb[0].mxu0
        %v1657 = vadd.f32 %v322, %v1656
        %v1658 = vpop.f32.mrb[0].mxu0
        %v1659 = vadd.f32 %v318, %v1658
        %v1660 = vpop.f32.mrb[0].mxu0
        %v1661 = vadd.f32 %v322, %v1660
        %1662 = vmatprep.mubr.bf16.mxu0 0
        %1663 = vmatmul.mubr.bf16.gmra.mrb[0].mxu0 %v527
        %v1664 = vpop.f32.mrb[0].mxu0
        %v1665 = vadd.f32 %v318, %v1664
        %v1666 = vpop.f32.mrb[0].mxu0
        %v1667 = vadd.f32 %v322, %v1666
        %v1668 = vpop.f32.mrb[0].mxu0
        %v1669 = vadd.f32 %v318, %v1668
        %v1670 = vpop.f32.mrb[0].mxu0
        %v1671 = vadd.f32 %v322, %v1670
        %1672 = vmatprep.mubr.bf16.mxu0 0
        %1673 = vmatmul.mubr.bf16.gmra.mrb[0].mxu0 %v530
        %v1674 = vpop.f32.mrb[0].mxu0
        %v1675 = vadd.f32 %v318, %v1674
        %v1676 = vpop.f32.mrb[0].mxu0
        %v1677 = vadd.f32 %v322, %v1676
        %v1678 = vpop.f32.mrb[0].mxu0
        %v1679 = vadd.f32 %v318, %v1678
        %v1680 = vpop.f32.mrb[0].mxu0
        %v1681 = vadd.f32 %v322, %v1680
        %1682 = vmatprep.mubr.bf16.mxu0 0
        %1683 = vmatmul.mubr.bf16.gmra.mrb[0].mxu0 %v533
        %v1684 = vpop.f32.mrb[0].mxu0
        %v1685 = vadd.f32 %v318, %v1684
        %v1686 = vpop.f32.mrb[0].mxu0
        %v1687 = vadd.f32 %v322, %v1686
        %v1688 = vpop.f32.mrb[0].mxu0
        %v1689 = vadd.f32 %v318, %v1688
        %v1690 = vpop.f32.mrb[0].mxu0
        %v1691 = vadd.f32 %v322, %v1690
        %1692 = vmatprep.mubr.bf16.mxu0 0
        %1693 = vmatmul.mubr.bf16.gmra.mrb[0].mxu0 %v536
        %v1694 = vpop.f32.mrb[0].mxu0
        %v1695 = vadd.f32 %v318, %v1694
        %v1696 = vpop.f32.mrb[0].mxu0
        %v1697 = vadd.f32 %v322, %v1696
        %v1698 = vpop.f32.mrb[0].mxu0
        %v1699 = vadd.f32 %v318, %v1698
        %v1700 = vpop.f32.mrb[0].mxu0
        %v1701 = vadd.f32 %v322, %v1700
        %1702 = vmatprep.mubr.bf16.mxu0 0
        %1703 = vmatmul.mubr.bf16.gmra.mrb[0].mxu0 %v539
        %v1704 = vpop.f32.mrb[0].mxu0
        %v1705 = vadd.f32 %v318, %v1704
        %v1706 = vpop.f32.mrb[0].mxu0
        %v1707 = vadd.f32 %v322, %v1706
        %v1708 = vpop.f32.mrb[0].mxu0
        %v1709 = vadd.f32 %v318, %v1708
        %v1710 = vpop.f32.mrb[0].mxu0
        %v1711 = vadd.f32 %v322, %v1710
        %1712 = vmatprep.mubr.bf16.mxu0 0
        %1713 = vmatmul.mubr.bf16.gmra.mrb[0].mxu0 %v542
        %v1714 = vpop.f32.mrb[0].mxu0
        %v1715 = vadd.f32 %v318, %v1714
        %v1716 = vpop.f32.mrb[0].mxu0
        %v1717 = vadd.f32 %v322, %v1716
        %v1718 = vpop.f32.mrb[0].mxu0
        %v1719 = vadd.f32 %v318, %v1718
        %v1720 = vpop.f32.mrb[0].mxu0
        %v1721 = vadd.f32 %v322, %v1720
        %1722 = vmatprep.mubr.bf16.mxu0 0
        %1723 = vmatmul.mubr.bf16.gmra.mrb[0].mxu0 %v545
        %v1724 = vpop.f32.mrb[0].mxu0
        %v1725 = vadd.f32 %v318, %v1724
        %v1726 = vpop.f32.mrb[0].mxu0
        %v1727 = vadd.f32 %v322, %v1726
        %v1728 = vpop.f32.mrb[0].mxu0
        %v1729 = vadd.f32 %v318, %v1728
        %v1730 = vpop.f32.mrb[0].mxu0
        %v1731 = vadd.f32 %v322, %v1730
        %1732 = vmatprep.mubr.bf16.mxu0 0
        %1733 = vmatmul.mubr.bf16.gmra.mrb[0].mxu0 %v548
        %v1734 = vpop.f32.mrb[0].mxu0
        %v1735 = vadd.f32 %v318, %v1734
        %v1736 = vpop.f32.mrb[0].mxu0
        %v1737 = vadd.f32 %v322, %v1736
        %v1738 = vpop.f32.mrb[0].mxu0
        %v1739 = vadd.f32 %v318, %v1738
        %v1740 = vpop.f32.mrb[0].mxu0
        %v1741 = vadd.f32 %v322, %v1740
        %1742 = vmatprep.mubr.bf16.mxu0 0
        %1743 = vmatmul.mubr.bf16.gmra.mrb[0].mxu0 %v551
        %v1744 = vpop.f32.mrb[0].mxu0
        %v1745 = vadd.f32 %v318, %v1744
        %v1746 = vpop.f32.mrb[0].mxu0
        %v1747 = vadd.f32 %v322, %v1746
        %v1748 = vpop.f32.mrb[0].mxu0
        %v1749 = vadd.f32 %v318, %v1748
        %v1750 = vpop.f32.mrb[0].mxu0
        %v1751 = vadd.f32 %v322, %v1750
        %1752 = vmatprep.mubr.bf16.mxu0 0
        %1753 = vmatmul.mubr.bf16.gmra.mrb[0].mxu0 %v554
        %v1754 = vpop.f32.mrb[0].mxu0
        %v1755 = vadd.f32 %v318, %v1754
        %v1756 = vpop.f32.mrb[0].mxu0
        %v1757 = vadd.f32 %v322, %v1756
        %v1758 = vpop.f32.mrb[0].mxu0
        %v1759 = vadd.f32 %v318, %v1758
        %v1760 = vpop.f32.mrb[0].mxu0
        %v1761 = vadd.f32 %v322, %v1760
        %1762 = vdwg.mxu0
        %1763 = vmatprep.subr.bf16.mxu0 %v597
        %1764 = vmatpush1.bf16.msra.mxu0 %v594
        %1765 = vmatprep.subr.bf16.mxu0 0
        %1766 = vmatpush1.bf16.msra.mxu0 0
        %1767 = vmatprep.subr.bf16.mxu0 0
        %1768 = vmatpush1.bf16.msra.mxu0 0
        %1769 = vmatprep.subr.bf16.mxu0 0
        %1770 = vmatpush1.bf16.msra.mxu0 0
        %1771 = vmatprep.subr.bf16.mxu0 0
        %1772 = vmatpush1.bf16.msra.mxu0 0
        %1773 = vmatprep.subr.bf16.mxu0 0
        %1774 = vmatpush1.bf16.msra.mxu0 0
        %1775 = vmatprep.subr.bf16.mxu0 0
        %1776 = vmatpush1.bf16.msra.mxu0 0
        %1777 = vmatprep.subr.bf16.mxu0 0
        %1778 = vmatpush1.bf16.msra.mxu0 0
        %1779 = vmatprep.subr.bf16.mxu0 0
        %1780 = vmatpush1.bf16.msra.mxu0 0
        %1781 = vmatprep.subr.bf16.mxu0 0
        %1782 = vmatpush1.bf16.msra.mxu0 0
        %1783 = vmatprep.subr.bf16.mxu0 0
        %1784 = vmatpush1.bf16.msra.mxu0 0
        %1785 = vmatprep.subr.bf16.mxu0 0
        %1786 = vmatpush1.bf16.msra.mxu0 0
        %1787 = vmatprep.subr.bf16.mxu0 0
        %1788 = vmatpush1.bf16.msra.mxu0 0
        %1789 = vmatprep.subr.bf16.mxu0 0
        %1790 = vmatpush1.bf16.msra.mxu0 0
        %1791 = vmatprep.subr.bf16.mxu0 0
        %1792 = vmatpush1.bf16.msra.mxu0 0
        %1793 = vmatprep.subr.bf16.mxu0 0
        %1794 = vmatpush1.bf16.msra.mxu0 0
        %1795 = vmatprep.mubr.bf16.mxu0 0
        %1796 = vmatmul.mubr.bf16.gmra.mrb[0].mxu0 %v509
        %v1797 = vpop.f32.mrb[0].mxu0
        %v1798 = vadd.f32 %v326, %v1797
        %v1799 = vpop.f32.mrb[0].mxu0
        %v1800 = vadd.f32 %v330, %v1799
        %v1801 = vpop.f32.mrb[0].mxu0
        %v1802 = vadd.f32 %v326, %v1801
        %v1803 = vpop.f32.mrb[0].mxu0
        %v1804 = vadd.f32 %v330, %v1803
        %1805 = vmatprep.mubr.bf16.mxu0 0
        %1806 = vmatmul.mubr.bf16.gmra.mrb[0].mxu0 %v512
        %v1807 = vpop.f32.mrb[0].mxu0
        %v1808 = vadd.f32 %v326, %v1807
        %v1809 = vpop.f32.mrb[0].mxu0
        %v1810 = vadd.f32 %v330, %v1809
        %v1811 = vpop.f32.mrb[0].mxu0
        %v1812 = vadd.f32 %v326, %v1811
        %v1813 = vpop.f32.mrb[0].mxu0
        %v1814 = vadd.f32 %v330, %v1813
        %1815 = vmatprep.mubr.bf16.mxu0 0
        %1816 = vmatmul.mubr.bf16.gmra.mrb[0].mxu0 %v515
        %v1817 = vpop.f32.mrb[0].mxu0
        %v1818 = vadd.f32 %v326, %v1817
        %v1819 = vpop.f32.mrb[0].mxu0
        %v1820 = vadd.f32 %v330, %v1819
        %v1821 = vpop.f32.mrb[0].mxu0
        %v1822 = vadd.f32 %v326, %v1821
        %v1823 = vpop.f32.mrb[0].mxu0
        %v1824 = vadd.f32 %v330, %v1823
        %1825 = vmatprep.mubr.bf16.mxu0 0
        %1826 = vmatmul.mubr.bf16.gmra.mrb[0].mxu0 %v518
        %v1827 = vpop.f32.mrb[0].mxu0
        %v1828 = vadd.f32 %v326, %v1827
        %v1829 = vpop.f32.mrb[0].mxu0
        %v1830 = vadd.f32 %v330, %v1829
        %v1831 = vpop.f32.mrb[0].mxu0
        %v1832 = vadd.f32 %v326, %v1831
        %v1833 = vpop.f32.mrb[0].mxu0
        %v1834 = vadd.f32 %v330, %v1833
        %1835 = vmatprep.mubr.bf16.mxu0 0
        %1836 = vmatmul.mubr.bf16.gmra.mrb[0].mxu0 %v521
        %v1837 = vpop.f32.mrb[0].mxu0
        %v1838 = vadd.f32 %v326, %v1837
        %v1839 = vpop.f32.mrb[0].mxu0
        %v1840 = vadd.f32 %v330, %v1839
        %v1841 = vpop.f32.mrb[0].mxu0
        %v1842 = vadd.f32 %v326, %v1841
        %v1843 = vpop.f32.mrb[0].mxu0
        %v1844 = vadd.f32 %v330, %v1843
        %1845 = vmatprep.mubr.bf16.mxu0 0
        %1846 = vmatmul.mubr.bf16.gmra.mrb[0].mxu0 %v524
        %v1847 = vpop.f32.mrb[0].mxu0
        %v1848 = vadd.f32 %v326, %v1847
        %v1849 = vpop.f32.mrb[0].mxu0
        %v1850 = vadd.f32 %v330, %v1849
        %v1851 = vpop.f32.mrb[0].mxu0
        %v1852 = vadd.f32 %v326, %v1851
        %v1853 = vpop.f32.mrb[0].mxu0
        %v1854 = vadd.f32 %v330, %v1853
        %1855 = vmatprep.mubr.bf16.mxu0 0
        %1856 = vmatmul.mubr.bf16.gmra.mrb[0].mxu0 %v527
        %v1857 = vpop.f32.mrb[0].mxu0
        %v1858 = vadd.f32 %v326, %v1857
        %v1859 = vpop.f32.mrb[0].mxu0
        %v1860 = vadd.f32 %v330, %v1859
        %v1861 = vpop.f32.mrb[0].mxu0
        %v1862 = vadd.f32 %v326, %v1861
        %v1863 = vpop.f32.mrb[0].mxu0
        %v1864 = vadd.f32 %v330, %v1863
        %1865 = vmatprep.mubr.bf16.mxu0 0
        %1866 = vmatmul.mubr.bf16.gmra.mrb[0].mxu0 %v530
        %v1867 = vpop.f32.mrb[0].mxu0
        %v1868 = vadd.f32 %v326, %v1867
        %v1869 = vpop.f32.mrb[0].mxu0
        %v1870 = vadd.f32 %v330, %v1869
        %v1871 = vpop.f32.mrb[0].mxu0
        %v1872 = vadd.f32 %v326, %v1871
        %v1873 = vpop.f32.mrb[0].mxu0
        %v1874 = vadd.f32 %v330, %v1873
        %1875 = vmatprep.mubr.bf16.mxu0 0
        %1876 = vmatmul.mubr.bf16.gmra.mrb[0].mxu0 %v533
        %v1877 = vpop.f32.mrb[0].mxu0
        %v1878 = vadd.f32 %v326, %v1877
        %v1879 = vpop.f32.mrb[0].mxu0
        %v1880 = vadd.f32 %v330, %v1879
        %v1881 = vpop.f32.mrb[0].mxu0
        %v1882 = vadd.f32 %v326, %v1881
        %v1883 = vpop.f32.mrb[0].mxu0
        %v1884 = vadd.f32 %v330, %v1883
        %1885 = vmatprep.mubr.bf16.mxu0 0
        %1886 = vmatmul.mubr.bf16.gmra.mrb[0].mxu0 %v536
        %v1887 = vpop.f32.mrb[0].mxu0
        %v1888 = vadd.f32 %v326, %v1887
        %v1889 = vpop.f32.mrb[0].mxu0
        %v1890 = vadd.f32 %v330, %v1889
        %v1891 = vpop.f32.mrb[0].mxu0
        %v1892 = vadd.f32 %v326, %v1891
        %v1893 = vpop.f32.mrb[0].mxu0
        %v1894 = vadd.f32 %v330, %v1893
        %1895 = vmatprep.mubr.bf16.mxu0 0
        %1896 = vmatmul.mubr.bf16.gmra.mrb[0].mxu0 %v539
        %v1897 = vpop.f32.mrb[0].mxu0
        %v1898 = vadd.f32 %v326, %v1897
        %v1899 = vpop.f32.mrb[0].mxu0
        %v1900 = vadd.f32 %v330, %v1899
        %v1901 = vpop.f32.mrb[0].mxu0
        %v1902 = vadd.f32 %v326, %v1901
        %v1903 = vpop.f32.mrb[0].mxu0
        %v1904 = vadd.f32 %v330, %v1903
        %1905 = vmatprep.mubr.bf16.mxu0 0
        %1906 = vmatmul.mubr.bf16.gmra.mrb[0].mxu0 %v542
        %v1907 = vpop.f32.mrb[0].mxu0
        %v1908 = vadd.f32 %v326, %v1907
        %v1909 = vpop.f32.mrb[0].mxu0
        %v1910 = vadd.f32 %v330, %v1909
        %v1911 = vpop.f32.mrb[0].mxu0
        %v1912 = vadd.f32 %v326, %v1911
        %v1913 = vpop.f32.mrb[0].mxu0
        %v1914 = vadd.f32 %v330, %v1913
        %1915 = vmatprep.mubr.bf16.mxu0 0
        %1916 = vmatmul.mubr.bf16.gmra.mrb[0].mxu0 %v545
        %v1917 = vpop.f32.mrb[0].mxu0
        %v1918 = vadd.f32 %v326, %v1917
        %v1919 = vpop.f32.mrb[0].mxu0
        %v1920 = vadd.f32 %v330, %v1919
        %v1921 = vpop.f32.mrb[0].mxu0
        %v1922 = vadd.f32 %v326, %v1921
        %v1923 = vpop.f32.mrb[0].mxu0
        %v1924 = vadd.f32 %v330, %v1923
        %1925 = vmatprep.mubr.bf16.mxu0 0
        %1926 = vmatmul.mubr.bf16.gmra.mrb[0].mxu0 %v548
        %v1927 = vpop.f32.mrb[0].mxu0
        %v1928 = vadd.f32 %v326, %v1927
        %v1929 = vpop.f32.mrb[0].mxu0
        %v1930 = vadd.f32 %v330, %v1929
        %v1931 = vpop.f32.mrb[0].mxu0
        %v1932 = vadd.f32 %v326, %v1931
        %v1933 = vpop.f32.mrb[0].mxu0
        %v1934 = vadd.f32 %v330, %v1933
        %1935 = vmatprep.mubr.bf16.mxu0 0
        %1936 = vmatmul.mubr.bf16.gmra.mrb[0].mxu0 %v551
        %v1937 = vpop.f32.mrb[0].mxu0
        %v1938 = vadd.f32 %v326, %v1937
        %v1939 = vpop.f32.mrb[0].mxu0
        %v1940 = vadd.f32 %v330, %v1939
        %v1941 = vpop.f32.mrb[0].mxu0
        %v1942 = vadd.f32 %v326, %v1941
        %v1943 = vpop.f32.mrb[0].mxu0
        %v1944 = vadd.f32 %v330, %v1943
        %1945 = vmatprep.mubr.bf16.mxu0 0
        %1946 = vmatmul.mubr.bf16.gmra.mrb[0].mxu0 %v554
        %v1947 = vpop.f32.mrb[0].mxu0
        %v1948 = vadd.f32 %v326, %v1947
        %v1949 = vpop.f32.mrb[0].mxu0
        %v1950 = vadd.f32 %v330, %v1949
        %v1951 = vpop.f32.mrb[0].mxu0
        %v1952 = vadd.f32 %v326, %v1951
        %v1953 = vpop.f32.mrb[0].mxu0
        %v1954 = vadd.f32 %v330, %v1953
        %1955 = vdwg.mxu0
        %1956 = vmatprep.subr.bf16.mxu0 %v603
        %1957 = vmatpush1.bf16.msra.mxu0 %v600
        %1958 = vmatprep.subr.bf16.mxu0 0
        %1959 = vmatpush1.bf16.msra.mxu0 0
        %1960 = vmatprep.subr.bf16.mxu0 0
        %1961 = vmatpush1.bf16.msra.mxu0 0
        %1962 = vmatprep.subr.bf16.mxu0 0
        %1963 = vmatpush1.bf16.msra.mxu0 0
        %1964 = vmatprep.subr.bf16.mxu0 0
        %1965 = vmatpush1.bf16.msra.mxu0 0
        %1966 = vmatprep.subr.bf16.mxu0 0
        %1967 = vmatpush1.bf16.msra.mxu0 0
        %1968 = vmatprep.subr.bf16.mxu0 0
        %1969 = vmatpush1.bf16.msra.mxu0 0
        %1970 = vmatprep.subr.bf16.mxu0 0
        %1971 = vmatpush1.bf16.msra.mxu0 0
        %1972 = vmatprep.subr.bf16.mxu0 0
        %1973 = vmatpush1.bf16.msra.mxu0 0
        %1974 = vmatprep.subr.bf16.mxu0 0
        %1975 = vmatpush1.bf16.msra.mxu0 0
        %1976 = vmatprep.subr.bf16.mxu0 0
        %1977 = vmatpush1.bf16.msra.mxu0 0
        %1978 = vmatprep.subr.bf16.mxu0 0
        %1979 = vmatpush1.bf16.msra.mxu0 0
        %1980 = vmatprep.subr.bf16.mxu0 0
        %1981 = vmatpush1.bf16.msra.mxu0 0
        %1982 = vmatprep.subr.bf16.mxu0 0
        %1983 = vmatpush1.bf16.msra.mxu0 0
        %1984 = vmatprep.subr.bf16.mxu0 0
        %1985 = vmatpush1.bf16.msra.mxu0 0
        %1986 = vmatprep.subr.bf16.mxu0 0
        %1987 = vmatpush1.bf16.msra.mxu0 0
        %1988 = vmatprep.mubr.bf16.mxu0 0
        %1989 = vmatmul.mubr.bf16.gmra.mrb[0].mxu0 %v509
        %v1990 = vpop.f32.mrb[0].mxu0
        %v1991 = vadd.f32 %v334, %v1990
        %v1992 = vpop.f32.mrb[0].mxu0
        %v1993 = vadd.f32 %v338, %v1992
        %v1994 = vpop.f32.mrb[0].mxu0
        %v1995 = vadd.f32 %v334, %v1994
        %v1996 = vpop.f32.mrb[0].mxu0
        %v1997 = vadd.f32 %v338, %v1996
        %1998 = vmatprep.mubr.bf16.mxu0 0
        %1999 = vmatmul.mubr.bf16.gmra.mrb[0].mxu0 %v512
        %v2000 = vpop.f32.mrb[0].mxu0
        %v2001 = vadd.f32 %v334, %v2000
        %v2002 = vpop.f32.mrb[0].mxu0
        %v2003 = vadd.f32 %v338, %v2002
        %v2004 = vpop.f32.mrb[0].mxu0
        %v2005 = vadd.f32 %v334, %v2004
        %v2006 = vpop.f32.mrb[0].mxu0
        %v2007 = vadd.f32 %v338, %v2006
        %2008 = vmatprep.mubr.bf16.mxu0 0
        %2009 = vmatmul.mubr.bf16.gmra.mrb[0].mxu0 %v515
        %v2010 = vpop.f32.mrb[0].mxu0
        %v2011 = vadd.f32 %v334, %v2010
        %v2012 = vpop.f32.mrb[0].mxu0
        %v2013 = vadd.f32 %v338, %v2012
        %v2014 = vpop.f32.mrb[0].mxu0
        %v2015 = vadd.f32 %v334, %v2014
        %v2016 = vpop.f32.mrb[0].mxu0
        %v2017 = vadd.f32 %v338, %v2016
        %2018 = vmatprep.mubr.bf16.mxu0 0
        %2019 = vmatmul.mubr.bf16.gmra.mrb[0].mxu0 %v518
        %v2020 = vpop.f32.mrb[0].mxu0
        %v2021 = vadd.f32 %v334, %v2020
        %v2022 = vpop.f32.mrb[0].mxu0
        %v2023 = vadd.f32 %v338, %v2022
        %v2024 = vpop.f32.mrb[0].mxu0
        %v2025 = vadd.f32 %v334, %v2024
        %v2026 = vpop.f32.mrb[0].mxu0
        %v2027 = vadd.f32 %v338, %v2026
        %2028 = vmatprep.mubr.bf16.mxu0 0
        %2029 = vmatmul.mubr.bf16.gmra.mrb[0].mxu0 %v521
        %v2030 = vpop.f32.mrb[0].mxu0
        %v2031 = vadd.f32 %v334, %v2030
        %v2032 = vpop.f32.mrb[0].mxu0
        %v2033 = vadd.f32 %v338, %v2032
        %v2034 = vpop.f32.mrb[0].mxu0
        %v2035 = vadd.f32 %v334, %v2034
        %v2036 = vpop.f32.mrb[0].mxu0
        %v2037 = vadd.f32 %v338, %v2036
        %2038 = vmatprep.mubr.bf16.mxu0 0
        %2039 = vmatmul.mubr.bf16.gmra.mrb[0].mxu0 %v524
        %v2040 = vpop.f32.mrb[0].mxu0
        %v2041 = vadd.f32 %v334, %v2040
        %v2042 = vpop.f32.mrb[0].mxu0
        %v2043 = vadd.f32 %v338, %v2042
        %v2044 = vpop.f32.mrb[0].mxu0
        %v2045 = vadd.f32 %v334, %v2044
        %v2046 = vpop.f32.mrb[0].mxu0
        %v2047 = vadd.f32 %v338, %v2046
        %2048 = vmatprep.mubr.bf16.mxu0 0
        %2049 = vmatmul.mubr.bf16.gmra.mrb[0].mxu0 %v527
        %v2050 = vpop.f32.mrb[0].mxu0
        %v2051 = vadd.f32 %v334, %v2050
        %v2052 = vpop.f32.mrb[0].mxu0
        %v2053 = vadd.f32 %v338, %v2052
        %v2054 = vpop.f32.mrb[0].mxu0
        %v2055 = vadd.f32 %v334, %v2054
        %v2056 = vpop.f32.mrb[0].mxu0
        %v2057 = vadd.f32 %v338, %v2056
        %2058 = vmatprep.mubr.bf16.mxu0 0
        %2059 = vmatmul.mubr.bf16.gmra.mrb[0].mxu0 %v530
        %v2060 = vpop.f32.mrb[0].mxu0
        %v2061 = vadd.f32 %v334, %v2060
        %v2062 = vpop.f32.mrb[0].mxu0
        %v2063 = vadd.f32 %v338, %v2062
        %v2064 = vpop.f32.mrb[0].mxu0
        %v2065 = vadd.f32 %v334, %v2064
        %v2066 = vpop.f32.mrb[0].mxu0
        %v2067 = vadd.f32 %v338, %v2066
        %2068 = vmatprep.mubr.bf16.mxu0 0
        %2069 = vmatmul.mubr.bf16.gmra.mrb[0].mxu0 %v533
        %v2070 = vpop.f32.mrb[0].mxu0
        %v2071 = vadd.f32 %v334, %v2070
        %v2072 = vpop.f32.mrb[0].mxu0
        %v2073 = vadd.f32 %v338, %v2072
        %v2074 = vpop.f32.mrb[0].mxu0
        %v2075 = vadd.f32 %v334, %v2074
        %v2076 = vpop.f32.mrb[0].mxu0
        %v2077 = vadd.f32 %v338, %v2076
        %2078 = vmatprep.mubr.bf16.mxu0 0
        %2079 = vmatmul.mubr.bf16.gmra.mrb[0].mxu0 %v536
        %v2080 = vpop.f32.mrb[0].mxu0
        %v2081 = vadd.f32 %v334, %v2080
        %v2082 = vpop.f32.mrb[0].mxu0
        %v2083 = vadd.f32 %v338, %v2082
        %v2084 = vpop.f32.mrb[0].mxu0
        %v2085 = vadd.f32 %v334, %v2084
        %v2086 = vpop.f32.mrb[0].mxu0
        %v2087 = vadd.f32 %v338, %v2086
        %2088 = vmatprep.mubr.bf16.mxu0 0
        %2089 = vmatmul.mubr.bf16.gmra.mrb[0].mxu0 %v539
        %v2090 = vpop.f32.mrb[0].mxu0
        %v2091 = vadd.f32 %v334, %v2090
        %v2092 = vpop.f32.mrb[0].mxu0
        %v2093 = vadd.f32 %v338, %v2092
        %v2094 = vpop.f32.mrb[0].mxu0
        %v2095 = vadd.f32 %v334, %v2094
        %v2096 = vpop.f32.mrb[0].mxu0
        %v2097 = vadd.f32 %v338, %v2096
        %2098 = vmatprep.mubr.bf16.mxu0 0
        %2099 = vmatmul.mubr.bf16.gmra.mrb[0].mxu0 %v542
        %v2100 = vpop.f32.mrb[0].mxu0
        %v2101 = vadd.f32 %v334, %v2100
        %v2102 = vpop.f32.mrb[0].mxu0
        %v2103 = vadd.f32 %v338, %v2102
        %v2104 = vpop.f32.mrb[0].mxu0
        %v2105 = vadd.f32 %v334, %v2104
        %v2106 = vpop.f32.mrb[0].mxu0
        %v2107 = vadd.f32 %v338, %v2106
        %2108 = vmatprep.mubr.bf16.mxu0 0
        %2109 = vmatmul.mubr.bf16.gmra.mrb[0].mxu0 %v545
        %v2110 = vpop.f32.mrb[0].mxu0
        %v2111 = vadd.f32 %v334, %v2110
        %v2112 = vpop.f32.mrb[0].mxu0
        %v2113 = vadd.f32 %v338, %v2112
        %v2114 = vpop.f32.mrb[0].mxu0
        %v2115 = vadd.f32 %v334, %v2114
        %v2116 = vpop.f32.mrb[0].mxu0
        %v2117 = vadd.f32 %v338, %v2116
        %2118 = vmatprep.mubr.bf16.mxu0 0
        %2119 = vmatmul.mubr.bf16.gmra.mrb[0].mxu0 %v548
        %v2120 = vpop.f32.mrb[0].mxu0
        %v2121 = vadd.f32 %v334, %v2120
        %v2122 = vpop.f32.mrb[0].mxu0
        %v2123 = vadd.f32 %v338, %v2122
        %v2124 = vpop.f32.mrb[0].mxu0
        %v2125 = vadd.f32 %v334, %v2124
        %v2126 = vpop.f32.mrb[0].mxu0
        %v2127 = vadd.f32 %v338, %v2126
        %2128 = vmatprep.mubr.bf16.mxu0 0
        %2129 = vmatmul.mubr.bf16.gmra.mrb[0].mxu0 %v551
        %v2130 = vpop.f32.mrb[0].mxu0
        %v2131 = vadd.f32 %v334, %v2130
        %v2132 = vpop.f32.mrb[0].mxu0
        %v2133 = vadd.f32 %v338, %v2132
        %v2134 = vpop.f32.mrb[0].mxu0
        %v2135 = vadd.f32 %v334, %v2134
        %v2136 = vpop.f32.mrb[0].mxu0
        %v2137 = vadd.f32 %v338, %v2136
        %2138 = vmatprep.mubr.bf16.mxu0 0
        %2139 = vmatmul.mubr.bf16.gmra.mrb[0].mxu0 %v554
        %v2140 = vpop.f32.mrb[0].mxu0
        %v2141 = vadd.f32 %v334, %v2140
        %v2142 = vpop.f32.mrb[0].mxu0
        %v2143 = vadd.f32 %v338, %v2142
        %v2144 = vpop.f32.mrb[0].mxu0
        %v2145 = vadd.f32 %v334, %v2144
        %v2146 = vpop.f32.mrb[0].mxu0
        %v2147 = vadd.f32 %v338, %v2146
        %2148 = vdwg.mxu0
        %v2149 = vmax.f32 %v640, 0.0
        %v2150 = vmax.f32 %v642, 0.0
        %v2151 = vmax.f32 %v833, 0.0
        %v2152 = vmax.f32 %v835, 0.0
        %v2153 = vmax.f32 %v1026, 0.0
        %v2154 = vmax.f32 %v1028, 0.0
        %v2155 = vmax.f32 %v1219, 0.0
        %v2156 = vmax.f32 %v1221, 0.0
        %v2157 = vmax.f32 %v1412, 0.0
        %v2158 = vmax.f32 %v1414, 0.0
        %v2159 = vmax.f32 %v1605, 0.0
        %v2160 = vmax.f32 %v1607, 0.0
        %v2161 = vmax.f32 %v1798, 0.0
        %v2162 = vmax.f32 %v1800, 0.0
        %v2163 = vmax.f32 %v1991, 0.0
        %v2164 = vmax.f32 %v1993, 0.0
        %v2165 = vmax.f32 %v644, 0.0
        %v2166 = vmax.f32 %v646, 0.0
        %v2167 = vmax.f32 %v837, 0.0
        %v2168 = vmax.f32 %v839, 0.0
        %v2169 = vmax.f32 %v1030, 0.0
        %v2170 = vmax.f32 %v1032, 0.0
        %v2171 = vmax.f32 %v1223, 0.0
        %v2172 = vmax.f32 %v1225, 0.0
        %v2173 = vmax.f32 %v1416, 0.0
        %v2174 = vmax.f32 %v1418, 0.0
        %v2175 = vmax.f32 %v1609, 0.0
        %v2176 = vmax.f32 %v1611, 0.0
        %v2177 = vmax.f32 %v1802, 0.0
        %v2178 = vmax.f32 %v1804, 0.0
        %v2179 = vmax.f32 %v1995, 0.0
        %v2180 = vmax.f32 %v1997, 0.0
        %v2181 = vmax.f32 %v650, 0.0
        %v2182 = vmax.f32 %v652, 0.0
        %v2183 = vmax.f32 %v843, 0.0
        %v2184 = vmax.f32 %v845, 0.0
        %v2185 = vmax.f32 %v1036, 0.0
        %v2186 = vmax.f32 %v1038, 0.0
        %v2187 = vmax.f32 %v1229, 0.0
        %v2188 = vmax.f32 %v1231, 0.0
        %v2189 = vmax.f32 %v1422, 0.0
        %v2190 = vmax.f32 %v1424, 0.0
        %v2191 = vmax.f32 %v1615, 0.0
        %v2192 = vmax.f32 %v1617, 0.0
        %v2193 = vmax.f32 %v1808, 0.0
        %v2194 = vmax.f32 %v1810, 0.0
        %v2195 = vmax.f32 %v2001, 0.0
        %v2196 = vmax.f32 %v2003, 0.0
        %v2197 = vmax.f32 %v654, 0.0
        %v2198 = vmax.f32 %v656, 0.0
        %v2199 = vmax.f32 %v847, 0.0
        %v2200 = vmax.f32 %v849, 0.0
        %v2201 = vmax.f32 %v1040, 0.0
        %v2202 = vmax.f32 %v1042, 0.0
        %v2203 = vmax.f32 %v1233, 0.0
        %v2204 = vmax.f32 %v1235, 0.0
        %v2205 = vmax.f32 %v1426, 0.0
        %v2206 = vmax.f32 %v1428, 0.0
        %v2207 = vmax.f32 %v1619, 0.0
        %v2208 = vmax.f32 %v1621, 0.0
        %v2209 = vmax.f32 %v1812, 0.0
        %v2210 = vmax.f32 %v1814, 0.0
        %v2211 = vmax.f32 %v2005, 0.0
        %v2212 = vmax.f32 %v2007, 0.0
        %v2213 = vmax.f32 %v660, 0.0
        %v2214 = vmax.f32 %v662, 0.0
        %v2215 = vmax.f32 %v853, 0.0
        %v2216 = vmax.f32 %v855, 0.0
        %v2217 = vmax.f32 %v1046, 0.0
        %v2218 = vmax.f32 %v1048, 0.0
        %v2219 = vmax.f32 %v1239, 0.0
        %v2220 = vmax.f32 %v1241, 0.0
        %v2221 = vmax.f32 %v1432, 0.0
        %v2222 = vmax.f32 %v1434, 0.0
        %v2223 = vmax.f32 %v1625, 0.0
        %v2224 = vmax.f32 %v1627, 0.0
        %v2225 = vmax.f32 %v1818, 0.0
        %v2226 = vmax.f32 %v1820, 0.0
        %v2227 = vmax.f32 %v2011, 0.0
        %v2228 = vmax.f32 %v2013, 0.0
        %v2229 = vmax.f32 %v664, 0.0
        %v2230 = vmax.f32 %v666, 0.0
        %v2231 = vmax.f32 %v857, 0.0
        %v2232 = vmax.f32 %v859, 0.0
        %v2233 = vmax.f32 %v1050, 0.0
        %v2234 = vmax.f32 %v1052, 0.0
        %v2235 = vmax.f32 %v1243, 0.0
        %v2236 = vmax.f32 %v1245, 0.0
        %v2237 = vmax.f32 %v1436, 0.0
        %v2238 = vmax.f32 %v1438, 0.0
        %v2239 = vmax.f32 %v1629, 0.0
        %v2240 = vmax.f32 %v1631, 0.0
        %v2241 = vmax.f32 %v1822, 0.0
        %v2242 = vmax.f32 %v1824, 0.0
        %v2243 = vmax.f32 %v2015, 0.0
        %v2244 = vmax.f32 %v2017, 0.0
        %v2245 = vmax.f32 %v670, 0.0
        %v2246 = vmax.f32 %v672, 0.0
        %v2247 = vmax.f32 %v863, 0.0
        %v2248 = vmax.f32 %v865, 0.0
        %v2249 = vmax.f32 %v1056, 0.0
        %v2250 = vmax.f32 %v1058, 0.0
        %v2251 = vmax.f32 %v1249, 0.0
        %v2252 = vmax.f32 %v1251, 0.0
        %v2253 = vmax.f32 %v1442, 0.0
        %v2254 = vmax.f32 %v1444, 0.0
        %v2255 = vmax.f32 %v1635, 0.0
        %v2256 = vmax.f32 %v1637, 0.0
        %v2257 = vmax.f32 %v1828, 0.0
        %v2258 = vmax.f32 %v1830, 0.0
        %v2259 = vmax.f32 %v2021, 0.0
        %v2260 = vmax.f32 %v2023, 0.0
        %v2261 = vmax.f32 %v674, 0.0
        %v2262 = vmax.f32 %v676, 0.0
        %v2263 = vmax.f32 %v867, 0.0
        %v2264 = vmax.f32 %v869, 0.0
        %v2265 = vmax.f32 %v1060, 0.0
        %v2266 = vmax.f32 %v1062, 0.0
        %v2267 = vmax.f32 %v1253, 0.0
        %v2268 = vmax.f32 %v1255, 0.0
        %v2269 = vmax.f32 %v1446, 0.0
        %v2270 = vmax.f32 %v1448, 0.0
        %v2271 = vmax.f32 %v1639, 0.0
        %v2272 = vmax.f32 %v1641, 0.0
        %v2273 = vmax.f32 %v1832, 0.0
        %v2274 = vmax.f32 %v1834, 0.0
        %v2275 = vmax.f32 %v2025, 0.0
        %v2276 = vmax.f32 %v2027, 0.0
        %v2277 = vmax.f32 %v680, 0.0
        %v2278 = vmax.f32 %v682, 0.0
        %v2279 = vmax.f32 %v873, 0.0
        %v2280 = vmax.f32 %v875, 0.0
        %v2281 = vmax.f32 %v1066, 0.0
        %v2282 = vmax.f32 %v1068, 0.0
        %v2283 = vmax.f32 %v1259, 0.0
        %v2284 = vmax.f32 %v1261, 0.0
        %v2285 = vmax.f32 %v1452, 0.0
        %v2286 = vmax.f32 %v1454, 0.0
        %v2287 = vmax.f32 %v1645, 0.0
        %v2288 = vmax.f32 %v1647, 0.0
        %v2289 = vmax.f32 %v1838, 0.0
        %v2290 = vmax.f32 %v1840, 0.0
        %v2291 = vmax.f32 %v2031, 0.0
        %v2292 = vmax.f32 %v2033, 0.0
        %v2293 = vmax.f32 %v684, 0.0
        %v2294 = vmax.f32 %v686, 0.0
        %v2295 = vmax.f32 %v877, 0.0
        %v2296 = vmax.f32 %v879, 0.0
        %v2297 = vmax.f32 %v1070, 0.0
        %v2298 = vmax.f32 %v1072, 0.0
        %v2299 = vmax.f32 %v1263, 0.0
        %v2300 = vmax.f32 %v1265, 0.0
        %v2301 = vmax.f32 %v1456, 0.0
        %v2302 = vmax.f32 %v1458, 0.0
        %v2303 = vmax.f32 %v1649, 0.0
        %v2304 = vmax.f32 %v1651, 0.0
        %v2305 = vmax.f32 %v1842, 0.0
        %v2306 = vmax.f32 %v1844, 0.0
        %v2307 = vmax.f32 %v2035, 0.0
        %v2308 = vmax.f32 %v2037, 0.0
        %v2309 = vmax.f32 %v690, 0.0
        %v2310 = vmax.f32 %v692, 0.0
        %v2311 = vmax.f32 %v883, 0.0
        %v2312 = vmax.f32 %v885, 0.0
        %v2313 = vmax.f32 %v1076, 0.0
        %v2314 = vmax.f32 %v1078, 0.0
        %v2315 = vmax.f32 %v1269, 0.0
        %v2316 = vmax.f32 %v1271, 0.0
        %v2317 = vmax.f32 %v1462, 0.0
        %v2318 = vmax.f32 %v1464, 0.0
        %v2319 = vmax.f32 %v1655, 0.0
        %v2320 = vmax.f32 %v1657, 0.0
        %v2321 = vmax.f32 %v1848, 0.0
        %v2322 = vmax.f32 %v1850, 0.0
        %v2323 = vmax.f32 %v2041, 0.0
        %v2324 = vmax.f32 %v2043, 0.0
        %v2325 = vmax.f32 %v694, 0.0
        %v2326 = vmax.f32 %v696, 0.0
        %v2327 = vmax.f32 %v887, 0.0
        %v2328 = vmax.f32 %v889, 0.0
        %v2329 = vmax.f32 %v1080, 0.0
        %v2330 = vmax.f32 %v1082, 0.0
        %v2331 = vmax.f32 %v1273, 0.0
        %v2332 = vmax.f32 %v1275, 0.0
        %v2333 = vmax.f32 %v1466, 0.0
        %v2334 = vmax.f32 %v1468, 0.0
        %v2335 = vmax.f32 %v1659, 0.0
        %v2336 = vmax.f32 %v1661, 0.0
        %v2337 = vmax.f32 %v1852, 0.0
        %v2338 = vmax.f32 %v1854, 0.0
        %v2339 = vmax.f32 %v2045, 0.0
        %v2340 = vmax.f32 %v2047, 0.0
        %v2341 = vmax.f32 %v700, 0.0
        %v2342 = vmax.f32 %v702, 0.0
        %v2343 = vmax.f32 %v893, 0.0
        %v2344 = vmax.f32 %v895, 0.0
        %v2345 = vmax.f32 %v1086, 0.0
        %v2346 = vmax.f32 %v1088, 0.0
        %v2347 = vmax.f32 %v1279, 0.0
        %v2348 = vmax.f32 %v1281, 0.0
        %v2349 = vmax.f32 %v1472, 0.0
        %v2350 = vmax.f32 %v1474, 0.0
        %v2351 = vmax.f32 %v1665, 0.0
        %v2352 = vmax.f32 %v1667, 0.0
        %v2353 = vmax.f32 %v1858, 0.0
        %v2354 = vmax.f32 %v1860, 0.0
        %v2355 = vmax.f32 %v2051, 0.0
        %v2356 = vmax.f32 %v2053, 0.0
        %v2357 = vmax.f32 %v704, 0.0
        %v2358 = vmax.f32 %v706, 0.0
        %v2359 = vmax.f32 %v897, 0.0
        %v2360 = vmax.f32 %v899, 0.0
        %v2361 = vmax.f32 %v1090, 0.0
        %v2362 = vmax.f32 %v1092, 0.0
        %v2363 = vmax.f32 %v1283, 0.0
        %v2364 = vmax.f32 %v1285, 0.0
        %v2365 = vmax.f32 %v1476, 0.0
        %v2366 = vmax.f32 %v1478, 0.0
        %v2367 = vmax.f32 %v1669, 0.0
        %v2368 = vmax.f32 %v1671, 0.0
        %v2369 = vmax.f32 %v1862, 0.0
        %v2370 = vmax.f32 %v1864, 0.0
        %v2371 = vmax.f32 %v2055, 0.0
        %v2372 = vmax.f32 %v2057, 0.0
        %v2373 = vmax.f32 %v710, 0.0
        %v2374 = vmax.f32 %v712, 0.0
        %v2375 = vmax.f32 %v903, 0.0
        %v2376 = vmax.f32 %v905, 0.0
        %v2377 = vmax.f32 %v1096, 0.0
        %v2378 = vmax.f32 %v1098, 0.0
        %v2379 = vmax.f32 %v1289, 0.0
        %v2380 = vmax.f32 %v1291, 0.0
        %v2381 = vmax.f32 %v1482, 0.0
        %v2382 = vmax.f32 %v1484, 0.0
        %v2383 = vmax.f32 %v1675, 0.0
        %v2384 = vmax.f32 %v1677, 0.0
        %v2385 = vmax.f32 %v1868, 0.0
        %v2386 = vmax.f32 %v1870, 0.0
        %v2387 = vmax.f32 %v2061, 0.0
        %v2388 = vmax.f32 %v2063, 0.0
        %v2389 = vmax.f32 %v714, 0.0
        %v2390 = vmax.f32 %v716, 0.0
        %v2391 = vmax.f32 %v907, 0.0
        %v2392 = vmax.f32 %v909, 0.0
        %v2393 = vmax.f32 %v1100, 0.0
        %v2394 = vmax.f32 %v1102, 0.0
        %v2395 = vmax.f32 %v1293, 0.0
        %v2396 = vmax.f32 %v1295, 0.0
        %v2397 = vmax.f32 %v1486, 0.0
        %v2398 = vmax.f32 %v1488, 0.0
        %v2399 = vmax.f32 %v1679, 0.0
        %v2400 = vmax.f32 %v1681, 0.0
        %v2401 = vmax.f32 %v1872, 0.0
        %v2402 = vmax.f32 %v1874, 0.0
        %v2403 = vmax.f32 %v2065, 0.0
        %v2404 = vmax.f32 %v2067, 0.0
        %v2405 = vmax.f32 %v720, 0.0
        %v2406 = vmax.f32 %v722, 0.0
        %v2407 = vmax.f32 %v913, 0.0
        %v2408 = vmax.f32 %v915, 0.0
        %v2409 = vmax.f32 %v1106, 0.0
        %v2410 = vmax.f32 %v1108, 0.0
        %v2411 = vmax.f32 %v1299, 0.0
        %v2412 = vmax.f32 %v1301, 0.0
        %v2413 = vmax.f32 %v1492, 0.0
        %v2414 = vmax.f32 %v1494, 0.0
        %v2415 = vmax.f32 %v1685, 0.0
        %v2416 = vmax.f32 %v1687, 0.0
        %v2417 = vmax.f32 %v1878, 0.0
        %v2418 = vmax.f32 %v1880, 0.0
        %v2419 = vmax.f32 %v2071, 0.0
        %v2420 = vmax.f32 %v2073, 0.0
        %v2421 = vmax.f32 %v724, 0.0
        %v2422 = vmax.f32 %v726, 0.0
        %v2423 = vmax.f32 %v917, 0.0
        %v2424 = vmax.f32 %v919, 0.0
        %v2425 = vmax.f32 %v1110, 0.0
        %v2426 = vmax.f32 %v1112, 0.0
        %v2427 = vmax.f32 %v1303, 0.0
        %v2428 = vmax.f32 %v1305, 0.0
        %v2429 = vmax.f32 %v1496, 0.0
        %v2430 = vmax.f32 %v1498, 0.0
        %v2431 = vmax.f32 %v1689, 0.0
        %v2432 = vmax.f32 %v1691, 0.0
        %v2433 = vmax.f32 %v1882, 0.0
        %v2434 = vmax.f32 %v1884, 0.0
        %v2435 = vmax.f32 %v2075, 0.0
        %v2436 = vmax.f32 %v2077, 0.0
        %v2437 = vmax.f32 %v730, 0.0
        %v2438 = vmax.f32 %v732, 0.0
        %v2439 = vmax.f32 %v923, 0.0
        %v2440 = vmax.f32 %v925, 0.0
        %v2441 = vmax.f32 %v1116, 0.0
        %v2442 = vmax.f32 %v1118, 0.0
        %v2443 = vmax.f32 %v1309, 0.0
        %v2444 = vmax.f32 %v1311, 0.0
        %v2445 = vmax.f32 %v1502, 0.0
        %v2446 = vmax.f32 %v1504, 0.0
        %v2447 = vmax.f32 %v1695, 0.0
        %v2448 = vmax.f32 %v1697, 0.0
        %v2449 = vmax.f32 %v1888, 0.0
        %v2450 = vmax.f32 %v1890, 0.0
        %v2451 = vmax.f32 %v2081, 0.0
        %v2452 = vmax.f32 %v2083, 0.0
        %v2453 = vmax.f32 %v734, 0.0
        %v2454 = vmax.f32 %v736, 0.0
        %v2455 = vmax.f32 %v927, 0.0
        %v2456 = vmax.f32 %v929, 0.0
        %v2457 = vmax.f32 %v1120, 0.0
        %v2458 = vmax.f32 %v1122, 0.0
        %v2459 = vmax.f32 %v1313, 0.0
        %v2460 = vmax.f32 %v1315, 0.0
        %v2461 = vmax.f32 %v1506, 0.0
        %v2462 = vmax.f32 %v1508, 0.0
        %v2463 = vmax.f32 %v1699, 0.0
        %v2464 = vmax.f32 %v1701, 0.0
        %v2465 = vmax.f32 %v1892, 0.0
        %v2466 = vmax.f32 %v1894, 0.0
        %v2467 = vmax.f32 %v2085, 0.0
        %v2468 = vmax.f32 %v2087, 0.0
        %v2469 = vmax.f32 %v740, 0.0
        %v2470 = vmax.f32 %v742, 0.0
        %v2471 = vmax.f32 %v933, 0.0
        %v2472 = vmax.f32 %v935, 0.0
        %v2473 = vmax.f32 %v1126, 0.0
        %v2474 = vmax.f32 %v1128, 0.0
        %v2475 = vmax.f32 %v1319, 0.0
        %v2476 = vmax.f32 %v1321, 0.0
        %v2477 = vmax.f32 %v1512, 0.0
        %v2478 = vmax.f32 %v1514, 0.0
        %v2479 = vmax.f32 %v1705, 0.0
        %v2480 = vmax.f32 %v1707, 0.0
        %v2481 = vmax.f32 %v1898, 0.0
        %v2482 = vmax.f32 %v1900, 0.0
        %v2483 = vmax.f32 %v2091, 0.0
        %v2484 = vmax.f32 %v2093, 0.0
        %v2485 = vmax.f32 %v744, 0.0
        %v2486 = vmax.f32 %v746, 0.0
        %v2487 = vmax.f32 %v937, 0.0
        %v2488 = vmax.f32 %v939, 0.0
        %v2489 = vmax.f32 %v1130, 0.0
        %v2490 = vmax.f32 %v1132, 0.0
        %v2491 = vmax.f32 %v1323, 0.0
        %v2492 = vmax.f32 %v1325, 0.0
        %v2493 = vmax.f32 %v1516, 0.0
        %v2494 = vmax.f32 %v1518, 0.0
        %v2495 = vmax.f32 %v1709, 0.0
        %v2496 = vmax.f32 %v1711, 0.0
        %v2497 = vmax.f32 %v1902, 0.0
        %v2498 = vmax.f32 %v1904, 0.0
        %v2499 = vmax.f32 %v2095, 0.0
        %v2500 = vmax.f32 %v2097, 0.0
        %v2501 = vmax.f32 %v750, 0.0
        %v2502 = vmax.f32 %v752, 0.0
        %v2503 = vmax.f32 %v943, 0.0
        %v2504 = vmax.f32 %v945, 0.0
        %v2505 = vmax.f32 %v1136, 0.0
        %v2506 = vmax.f32 %v1138, 0.0
        %v2507 = vmax.f32 %v1329, 0.0
        %v2508 = vmax.f32 %v1331, 0.0
        %v2509 = vmax.f32 %v1522, 0.0
        %v2510 = vmax.f32 %v1524, 0.0
        %v2511 = vmax.f32 %v1715, 0.0
        %v2512 = vmax.f32 %v1717, 0.0
        %v2513 = vmax.f32 %v1908, 0.0
        %v2514 = vmax.f32 %v1910, 0.0
        %v2515 = vmax.f32 %v2101, 0.0
        %v2516 = vmax.f32 %v2103, 0.0
        %v2517 = vmax.f32 %v754, 0.0
        %v2518 = vmax.f32 %v756, 0.0
        %v2519 = vmax.f32 %v947, 0.0
        %v2520 = vmax.f32 %v949, 0.0
        %v2521 = vmax.f32 %v1140, 0.0
        %v2522 = vmax.f32 %v1142, 0.0
        %v2523 = vmax.f32 %v1333, 0.0
        %v2524 = vmax.f32 %v1335, 0.0
        %v2525 = vmax.f32 %v1526, 0.0
        %v2526 = vmax.f32 %v1528, 0.0
        %v2527 = vmax.f32 %v1719, 0.0
        %v2528 = vmax.f32 %v1721, 0.0
        %v2529 = vmax.f32 %v1912, 0.0
        %v2530 = vmax.f32 %v1914, 0.0
        %v2531 = vmax.f32 %v2105, 0.0
        %v2532 = vmax.f32 %v2107, 0.0
        %v2533 = vmax.f32 %v760, 0.0
        %v2534 = vmax.f32 %v762, 0.0
        %v2535 = vmax.f32 %v953, 0.0
        %v2536 = vmax.f32 %v955, 0.0
        %v2537 = vmax.f32 %v1146, 0.0
        %v2538 = vmax.f32 %v1148, 0.0
        %v2539 = vmax.f32 %v1339, 0.0
        %v2540 = vmax.f32 %v1341, 0.0
        %v2541 = vmax.f32 %v1532, 0.0
        %v2542 = vmax.f32 %v1534, 0.0
        %v2543 = vmax.f32 %v1725, 0.0
        %v2544 = vmax.f32 %v1727, 0.0
        %v2545 = vmax.f32 %v1918, 0.0
        %v2546 = vmax.f32 %v1920, 0.0
        %v2547 = vmax.f32 %v2111, 0.0
        %v2548 = vmax.f32 %v2113, 0.0
        %v2549 = vmax.f32 %v764, 0.0
        %v2550 = vmax.f32 %v766, 0.0
        %v2551 = vmax.f32 %v957, 0.0
        %v2552 = vmax.f32 %v959, 0.0
        %v2553 = vmax.f32 %v1150, 0.0
        %v2554 = vmax.f32 %v1152, 0.0
        %v2555 = vmax.f32 %v1343, 0.0
        %v2556 = vmax.f32 %v1345, 0.0
        %v2557 = vmax.f32 %v1536, 0.0
        %v2558 = vmax.f32 %v1538, 0.0
        %v2559 = vmax.f32 %v1729, 0.0
        %v2560 = vmax.f32 %v1731, 0.0
        %v2561 = vmax.f32 %v1922, 0.0
        %v2562 = vmax.f32 %v1924, 0.0
        %v2563 = vmax.f32 %v2115, 0.0
        %v2564 = vmax.f32 %v2117, 0.0
        %v2565 = vmax.f32 %v770, 0.0
        %v2566 = vmax.f32 %v772, 0.0
        %v2567 = vmax.f32 %v963, 0.0
        %v2568 = vmax.f32 %v965, 0.0
        %v2569 = vmax.f32 %v1156, 0.0
        %v2570 = vmax.f32 %v1158, 0.0
        %v2571 = vmax.f32 %v1349, 0.0
        %v2572 = vmax.f32 %v1351, 0.0
        %v2573 = vmax.f32 %v1542, 0.0
        %v2574 = vmax.f32 %v1544, 0.0
        %v2575 = vmax.f32 %v1735, 0.0
        %v2576 = vmax.f32 %v1737, 0.0
        %v2577 = vmax.f32 %v1928, 0.0
        %v2578 = vmax.f32 %v1930, 0.0
        %v2579 = vmax.f32 %v2121, 0.0
        %v2580 = vmax.f32 %v2123, 0.0
        %v2581 = vmax.f32 %v774, 0.0
        %v2582 = vmax.f32 %v776, 0.0
        %v2583 = vmax.f32 %v967, 0.0
        %v2584 = vmax.f32 %v969, 0.0
        %v2585 = vmax.f32 %v1160, 0.0
        %v2586 = vmax.f32 %v1162, 0.0
        %v2587 = vmax.f32 %v1353, 0.0
        %v2588 = vmax.f32 %v1355, 0.0
        %v2589 = vmax.f32 %v1546, 0.0
        %v2590 = vmax.f32 %v1548, 0.0
        %v2591 = vmax.f32 %v1739, 0.0
        %v2592 = vmax.f32 %v1741, 0.0
        %v2593 = vmax.f32 %v1932, 0.0
        %v2594 = vmax.f32 %v1934, 0.0
        %v2595 = vmax.f32 %v2125, 0.0
        %v2596 = vmax.f32 %v2127, 0.0
        %v2597 = vmax.f32 %v780, 0.0
        %v2598 = vmax.f32 %v782, 0.0
        %v2599 = vmax.f32 %v973, 0.0
        %v2600 = vmax.f32 %v975, 0.0
        %v2601 = vmax.f32 %v1166, 0.0
        %v2602 = vmax.f32 %v1168, 0.0
        %v2603 = vmax.f32 %v1359, 0.0
        %v2604 = vmax.f32 %v1361, 0.0
        %v2605 = vmax.f32 %v1552, 0.0
        %v2606 = vmax.f32 %v1554, 0.0
        %v2607 = vmax.f32 %v1745, 0.0
        %v2608 = vmax.f32 %v1747, 0.0
        %v2609 = vmax.f32 %v1938, 0.0
        %v2610 = vmax.f32 %v1940, 0.0
        %v2611 = vmax.f32 %v2131, 0.0
        %v2612 = vmax.f32 %v2133, 0.0
        %v2613 = vmax.f32 %v784, 0.0
        %v2614 = vmax.f32 %v786, 0.0
        %v2615 = vmax.f32 %v977, 0.0
        %v2616 = vmax.f32 %v979, 0.0
        %v2617 = vmax.f32 %v1170, 0.0
        %v2618 = vmax.f32 %v1172, 0.0
        %v2619 = vmax.f32 %v1363, 0.0
        %v2620 = vmax.f32 %v1365, 0.0
        %v2621 = vmax.f32 %v1556, 0.0
        %v2622 = vmax.f32 %v1558, 0.0
        %v2623 = vmax.f32 %v1749, 0.0
        %v2624 = vmax.f32 %v1751, 0.0
        %v2625 = vmax.f32 %v1942, 0.0
        %v2626 = vmax.f32 %v1944, 0.0
        %v2627 = vmax.f32 %v2135, 0.0
        %v2628 = vmax.f32 %v2137, 0.0
        %v2629 = vmax.f32 %v790, 0.0
        %v2630 = vmax.f32 %v792, 0.0
        %v2631 = vmax.f32 %v983, 0.0
        %v2632 = vmax.f32 %v985, 0.0
        %v2633 = vmax.f32 %v1176, 0.0
        %v2634 = vmax.f32 %v1178, 0.0
        %v2635 = vmax.f32 %v1369, 0.0
        %v2636 = vmax.f32 %v1371, 0.0
        %v2637 = vmax.f32 %v1562, 0.0
        %v2638 = vmax.f32 %v1564, 0.0
        %v2639 = vmax.f32 %v1755, 0.0
        %v2640 = vmax.f32 %v1757, 0.0
        %v2641 = vmax.f32 %v1948, 0.0
        %v2642 = vmax.f32 %v1950, 0.0
        %v2643 = vmax.f32 %v2141, 0.0
        %v2644 = vmax.f32 %v2143, 0.0
        %v2645 = vmax.f32 %v794, 0.0
        %v2646 = vmax.f32 %v796, 0.0
        %v2647 = vmax.f32 %v987, 0.0
        %v2648 = vmax.f32 %v989, 0.0
        %v2649 = vmax.f32 %v1180, 0.0
        %v2650 = vmax.f32 %v1182, 0.0
        %v2651 = vmax.f32 %v1373, 0.0
        %v2652 = vmax.f32 %v1375, 0.0
        %v2653 = vmax.f32 %v1566, 0.0
        %v2654 = vmax.f32 %v1568, 0.0
        %v2655 = vmax.f32 %v1759, 0.0
        %v2656 = vmax.f32 %v1761, 0.0
        %v2657 = vmax.f32 %v1952, 0.0
        %v2658 = vmax.f32 %v1954, 0.0
        %v2659 = vmax.f32 %v2145, 0.0
        %v2660 = vmax.f32 %v2147, 0.0
        %v2661 = vadd.f32 %v2149, %v2165
        %v2662 = vadd.f32 %v2661, %v2181
        %v2663 = vadd.f32 %v2662, %v2197
        %v2664 = vadd.f32 %v2663, %v2213
        %v2665 = vadd.f32 %v2664, %v2229
        %v2666 = vadd.f32 %v2665, %v2245
        %v2667 = vadd.f32 %v2666, %v2261
        %v2668 = vadd.f32 %v2667, %v2277
        %v2669 = vadd.f32 %v2668, %v2293
        %v2670 = vadd.f32 %v2669, %v2309
        %v2671 = vadd.f32 %v2670, %v2325
        %v2672 = vadd.f32 %v2671, %v2341
        %v2673 = vadd.f32 %v2672, %v2357
        %v2674 = vadd.f32 %v2673, %v2373
        %v2675 = vadd.f32 %v2674, %v2389
        %v2676 = vadd.f32 %v2675, %v2405
        %v2677 = vadd.f32 %v2676, %v2421
        %v2678 = vadd.f32 %v2677, %v2437
        %v2679 = vadd.f32 %v2678, %v2453
        %v2680 = vadd.f32 %v2679, %v2469
        %v2681 = vadd.f32 %v2680, %v2485
        %v2682 = vadd.f32 %v2681, %v2501
        %v2683 = vadd.f32 %v2682, %v2517
        %v2684 = vadd.f32 %v2683, %v2533
        %v2685 = vadd.f32 %v2684, %v2549
        %v2686 = vadd.f32 %v2685, %v2565
        %v2687 = vadd.f32 %v2686, %v2581
        %v2688 = vadd.f32 %v2687, %v2597
        %v2689 = vadd.f32 %v2688, %v2613
        %v2690 = vadd.f32 %v2689, %v2629
        %v2691 = vadd.f32 %v2690, %v2645
        %v2692 = vrot.slane %v2691, 4
        %v2693 = vadd.f32 %v2691, %v2692
        %v2694 = vrot.slane %v2693, 2
        %v2695 = vadd.f32 %v2693, %v2694
        %v2696 = vrot.slane %v2695, 1
        %v2697 = vadd.f32 %v2695, %v2696
        %v2698 = vadd.f32 %v2150, %v2166
        %v2699 = vadd.f32 %v2698, %v2182
        %v2700 = vadd.f32 %v2699, %v2198
        %v2701 = vadd.f32 %v2700, %v2214
        %v2702 = vadd.f32 %v2701, %v2230
        %v2703 = vadd.f32 %v2702, %v2246
        %v2704 = vadd.f32 %v2703, %v2262
        %v2705 = vadd.f32 %v2704, %v2278
        %v2706 = vadd.f32 %v2705, %v2294
        %v2707 = vadd.f32 %v2706, %v2310
        %v2708 = vadd.f32 %v2707, %v2326
        %v2709 = vadd.f32 %v2708, %v2342
        %v2710 = vadd.f32 %v2709, %v2358
        %v2711 = vadd.f32 %v2710, %v2374
        %v2712 = vadd.f32 %v2711, %v2390
        %v2713 = vadd.f32 %v2712, %v2406
        %v2714 = vadd.f32 %v2713, %v2422
        %v2715 = vadd.f32 %v2714, %v2438
        %v2716 = vadd.f32 %v2715, %v2454
        %v2717 = vadd.f32 %v2716, %v2470
        %v2718 = vadd.f32 %v2717, %v2486
        %v2719 = vadd.f32 %v2718, %v2502
        %v2720 = vadd.f32 %v2719, %v2518
        %v2721 = vadd.f32 %v2720, %v2534
        %v2722 = vadd.f32 %v2721, %v2550
        %v2723 = vadd.f32 %v2722, %v2566
        %v2724 = vadd.f32 %v2723, %v2582
        %v2725 = vadd.f32 %v2724, %v2598
        %v2726 = vadd.f32 %v2725, %v2614
        %v2727 = vadd.f32 %v2726, %v2630
        %v2728 = vadd.f32 %v2727, %v2646
        %v2729 = vrot.slane %v2728, 4
        %v2730 = vadd.f32 %v2728, %v2729
        %v2731 = vrot.slane %v2730, 2
        %v2732 = vadd.f32 %v2730, %v2731
        %v2733 = vrot.slane %v2732, 1
        %v2734 = vadd.f32 %v2732, %v2733
        %v2735 = vadd.f32 %v2151, %v2167
        %v2736 = vadd.f32 %v2735, %v2183
        %v2737 = vadd.f32 %v2736, %v2199
        %v2738 = vadd.f32 %v2737, %v2215
        %v2739 = vadd.f32 %v2738, %v2231
        %v2740 = vadd.f32 %v2739, %v2247
        %v2741 = vadd.f32 %v2740, %v2263
        %v2742 = vadd.f32 %v2741, %v2279
        %v2743 = vadd.f32 %v2742, %v2295
        %v2744 = vadd.f32 %v2743, %v2311
        %v2745 = vadd.f32 %v2744, %v2327
        %v2746 = vadd.f32 %v2745, %v2343
        %v2747 = vadd.f32 %v2746, %v2359
        %v2748 = vadd.f32 %v2747, %v2375
        %v2749 = vadd.f32 %v2748, %v2391
        %v2750 = vadd.f32 %v2749, %v2407
        %v2751 = vadd.f32 %v2750, %v2423
        %v2752 = vadd.f32 %v2751, %v2439
        %v2753 = vadd.f32 %v2752, %v2455
        %v2754 = vadd.f32 %v2753, %v2471
        %v2755 = vadd.f32 %v2754, %v2487
        %v2756 = vadd.f32 %v2755, %v2503
        %v2757 = vadd.f32 %v2756, %v2519
        %v2758 = vadd.f32 %v2757, %v2535
        %v2759 = vadd.f32 %v2758, %v2551
        %v2760 = vadd.f32 %v2759, %v2567
        %v2761 = vadd.f32 %v2760, %v2583
        %v2762 = vadd.f32 %v2761, %v2599
        %v2763 = vadd.f32 %v2762, %v2615
        %v2764 = vadd.f32 %v2763, %v2631
        %v2765 = vadd.f32 %v2764, %v2647
        %v2766 = vrot.slane %v2765, 4
        %v2767 = vadd.f32 %v2765, %v2766
        %v2768 = vrot.slane %v2767, 2
        %v2769 = vadd.f32 %v2767, %v2768
        %v2770 = vrot.slane %v2769, 1
        %v2771 = vadd.f32 %v2769, %v2770
        %v2772 = vadd.f32 %v2152, %v2168
        %v2773 = vadd.f32 %v2772, %v2184
        %v2774 = vadd.f32 %v2773, %v2200
        %v2775 = vadd.f32 %v2774, %v2216
        %v2776 = vadd.f32 %v2775, %v2232
        %v2777 = vadd.f32 %v2776, %v2248
        %v2778 = vadd.f32 %v2777, %v2264
        %v2779 = vadd.f32 %v2778, %v2280
        %v2780 = vadd.f32 %v2779, %v2296
        %v2781 = vadd.f32 %v2780, %v2312
        %v2782 = vadd.f32 %v2781, %v2328
        %v2783 = vadd.f32 %v2782, %v2344
        %v2784 = vadd.f32 %v2783, %v2360
        %v2785 = vadd.f32 %v2784, %v2376
        %v2786 = vadd.f32 %v2785, %v2392
        %v2787 = vadd.f32 %v2786, %v2408
        %v2788 = vadd.f32 %v2787, %v2424
        %v2789 = vadd.f32 %v2788, %v2440
        %v2790 = vadd.f32 %v2789, %v2456
        %v2791 = vadd.f32 %v2790, %v2472
        %v2792 = vadd.f32 %v2791, %v2488
        %v2793 = vadd.f32 %v2792, %v2504
        %v2794 = vadd.f32 %v2793, %v2520
        %v2795 = vadd.f32 %v2794, %v2536
        %v2796 = vadd.f32 %v2795, %v2552
        %v2797 = vadd.f32 %v2796, %v2568
        %v2798 = vadd.f32 %v2797, %v2584
        %v2799 = vadd.f32 %v2798, %v2600
        %v2800 = vadd.f32 %v2799, %v2616
        %v2801 = vadd.f32 %v2800, %v2632
        %v2802 = vadd.f32 %v2801, %v2648
        %v2803 = vrot.slane %v2802, 4
        %v2804 = vadd.f32 %v2802, %v2803
        %v2805 = vrot.slane %v2804, 2
        %v2806 = vadd.f32 %v2804, %v2805
        %v2807 = vrot.slane %v2806, 1
        %v2808 = vadd.f32 %v2806, %v2807
        %v2809 = vadd.f32 %v2153, %v2169
        %v2810 = vadd.f32 %v2809, %v2185
        %v2811 = vadd.f32 %v2810, %v2201
        %v2812 = vadd.f32 %v2811, %v2217
        %v2813 = vadd.f32 %v2812, %v2233
        %v2814 = vadd.f32 %v2813, %v2249
        %v2815 = vadd.f32 %v2814, %v2265
        %v2816 = vadd.f32 %v2815, %v2281
        %v2817 = vadd.f32 %v2816, %v2297
        %v2818 = vadd.f32 %v2817, %v2313
        %v2819 = vadd.f32 %v2818, %v2329
        %v2820 = vadd.f32 %v2819, %v2345
        %v2821 = vadd.f32 %v2820, %v2361
        %v2822 = vadd.f32 %v2821, %v2377
        %v2823 = vadd.f32 %v2822, %v2393
        %v2824 = vadd.f32 %v2823, %v2409
        %v2825 = vadd.f32 %v2824, %v2425
        %v2826 = vadd.f32 %v2825, %v2441
        %v2827 = vadd.f32 %v2826, %v2457
        %v2828 = vadd.f32 %v2827, %v2473
        %v2829 = vadd.f32 %v2828, %v2489
        %v2830 = vadd.f32 %v2829, %v2505
        %v2831 = vadd.f32 %v2830, %v2521
        %v2832 = vadd.f32 %v2831, %v2537
        %v2833 = vadd.f32 %v2832, %v2553
        %v2834 = vadd.f32 %v2833, %v2569
        %v2835 = vadd.f32 %v2834, %v2585
        %v2836 = vadd.f32 %v2835, %v2601
        %v2837 = vadd.f32 %v2836, %v2617
        %v2838 = vadd.f32 %v2837, %v2633
        %v2839 = vadd.f32 %v2838, %v2649
        %v2840 = vrot.slane %v2839, 4
        %v2841 = vadd.f32 %v2839, %v2840
        %v2842 = vrot.slane %v2841, 2
        %v2843 = vadd.f32 %v2841, %v2842
        %v2844 = vrot.slane %v2843, 1
        %v2845 = vadd.f32 %v2843, %v2844
        %v2846 = vadd.f32 %v2154, %v2170
        %v2847 = vadd.f32 %v2846, %v2186
        %v2848 = vadd.f32 %v2847, %v2202
        %v2849 = vadd.f32 %v2848, %v2218
        %v2850 = vadd.f32 %v2849, %v2234
        %v2851 = vadd.f32 %v2850, %v2250
        %v2852 = vadd.f32 %v2851, %v2266
        %v2853 = vadd.f32 %v2852, %v2282
        %v2854 = vadd.f32 %v2853, %v2298
        %v2855 = vadd.f32 %v2854, %v2314
        %v2856 = vadd.f32 %v2855, %v2330
        %v2857 = vadd.f32 %v2856, %v2346
        %v2858 = vadd.f32 %v2857, %v2362
        %v2859 = vadd.f32 %v2858, %v2378
        %v2860 = vadd.f32 %v2859, %v2394
        %v2861 = vadd.f32 %v2860, %v2410
        %v2862 = vadd.f32 %v2861, %v2426
        %v2863 = vadd.f32 %v2862, %v2442
        %v2864 = vadd.f32 %v2863, %v2458
        %v2865 = vadd.f32 %v2864, %v2474
        %v2866 = vadd.f32 %v2865, %v2490
        %v2867 = vadd.f32 %v2866, %v2506
        %v2868 = vadd.f32 %v2867, %v2522
        %v2869 = vadd.f32 %v2868, %v2538
        %v2870 = vadd.f32 %v2869, %v2554
        %v2871 = vadd.f32 %v2870, %v2570
        %v2872 = vadd.f32 %v2871, %v2586
        %v2873 = vadd.f32 %v2872, %v2602
        %v2874 = vadd.f32 %v2873, %v2618
        %v2875 = vadd.f32 %v2874, %v2634
        %v2876 = vadd.f32 %v2875, %v2650
        %v2877 = vrot.slane %v2876, 4
        %v2878 = vadd.f32 %v2876, %v2877
        %v2879 = vrot.slane %v2878, 2
        %v2880 = vadd.f32 %v2878, %v2879
        %v2881 = vrot.slane %v2880, 1
        %v2882 = vadd.f32 %v2880, %v2881
        %v2883 = vadd.f32 %v2155, %v2171
        %v2884 = vadd.f32 %v2883, %v2187
        %v2885 = vadd.f32 %v2884, %v2203
        %v2886 = vadd.f32 %v2885, %v2219
        %v2887 = vadd.f32 %v2886, %v2235
        %v2888 = vadd.f32 %v2887, %v2251
        %v2889 = vadd.f32 %v2888, %v2267
        %v2890 = vadd.f32 %v2889, %v2283
        %v2891 = vadd.f32 %v2890, %v2299
        %v2892 = vadd.f32 %v2891, %v2315
        %v2893 = vadd.f32 %v2892, %v2331
        %v2894 = vadd.f32 %v2893, %v2347
        %v2895 = vadd.f32 %v2894, %v2363
        %v2896 = vadd.f32 %v2895, %v2379
        %v2897 = vadd.f32 %v2896, %v2395
        %v2898 = vadd.f32 %v2897, %v2411
        %v2899 = vadd.f32 %v2898, %v2427
        %v2900 = vadd.f32 %v2899, %v2443
        %v2901 = vadd.f32 %v2900, %v2459
        %v2902 = vadd.f32 %v2901, %v2475
        %v2903 = vadd.f32 %v2902, %v2491
        %v2904 = vadd.f32 %v2903, %v2507
        %v2905 = vadd.f32 %v2904, %v2523
        %v2906 = vadd.f32 %v2905, %v2539
        %v2907 = vadd.f32 %v2906, %v2555
        %v2908 = vadd.f32 %v2907, %v2571
        %v2909 = vadd.f32 %v2908, %v2587
        %v2910 = vadd.f32 %v2909, %v2603
        %v2911 = vadd.f32 %v2910, %v2619
        %v2912 = vadd.f32 %v2911, %v2635
        %v2913 = vadd.f32 %v2912, %v2651
        %v2914 = vrot.slane %v2913, 4
        %v2915 = vadd.f32 %v2913, %v2914
        %v2916 = vrot.slane %v2915, 2
        %v2917 = vadd.f32 %v2915, %v2916
        %v2918 = vrot.slane %v2917, 1
        %v2919 = vadd.f32 %v2917, %v2918
        %v2920 = vadd.f32 %v2156, %v2172
        %v2921 = vadd.f32 %v2920, %v2188
        %v2922 = vadd.f32 %v2921, %v2204
        %v2923 = vadd.f32 %v2922, %v2220
        %v2924 = vadd.f32 %v2923, %v2236
        %v2925 = vadd.f32 %v2924, %v2252
        %v2926 = vadd.f32 %v2925, %v2268
        %v2927 = vadd.f32 %v2926, %v2284
        %v2928 = vadd.f32 %v2927, %v2300
        %v2929 = vadd.f32 %v2928, %v2316
        %v2930 = vadd.f32 %v2929, %v2332
        %v2931 = vadd.f32 %v2930, %v2348
        %v2932 = vadd.f32 %v2931, %v2364
        %v2933 = vadd.f32 %v2932, %v2380
        %v2934 = vadd.f32 %v2933, %v2396
        %v2935 = vadd.f32 %v2934, %v2412
        %v2936 = vadd.f32 %v2935, %v2428
        %v2937 = vadd.f32 %v2936, %v2444
        %v2938 = vadd.f32 %v2937, %v2460
        %v2939 = vadd.f32 %v2938, %v2476
        %v2940 = vadd.f32 %v2939, %v2492
        %v2941 = vadd.f32 %v2940, %v2508
        %v2942 = vadd.f32 %v2941, %v2524
        %v2943 = vadd.f32 %v2942, %v2540
        %v2944 = vadd.f32 %v2943, %v2556
        %v2945 = vadd.f32 %v2944, %v2572
        %v2946 = vadd.f32 %v2945, %v2588
        %v2947 = vadd.f32 %v2946, %v2604
        %v2948 = vadd.f32 %v2947, %v2620
        %v2949 = vadd.f32 %v2948, %v2636
        %v2950 = vadd.f32 %v2949, %v2652
        %v2951 = vrot.slane %v2950, 4
        %v2952 = vadd.f32 %v2950, %v2951
        %v2953 = vrot.slane %v2952, 2
        %v2954 = vadd.f32 %v2952, %v2953
        %v2955 = vrot.slane %v2954, 1
        %v2956 = vadd.f32 %v2954, %v2955
        %v2957 = vadd.f32 %v2157, %v2173
        %v2958 = vadd.f32 %v2957, %v2189
        %v2959 = vadd.f32 %v2958, %v2205
        %v2960 = vadd.f32 %v2959, %v2221
        %v2961 = vadd.f32 %v2960, %v2237
        %v2962 = vadd.f32 %v2961, %v2253
        %v2963 = vadd.f32 %v2962, %v2269
        %v2964 = vadd.f32 %v2963, %v2285
        %v2965 = vadd.f32 %v2964, %v2301
        %v2966 = vadd.f32 %v2965, %v2317
        %v2967 = vadd.f32 %v2966, %v2333
        %v2968 = vadd.f32 %v2967, %v2349
        %v2969 = vadd.f32 %v2968, %v2365
        %v2970 = vadd.f32 %v2969, %v2381
        %v2971 = vadd.f32 %v2970, %v2397
        %v2972 = vadd.f32 %v2971, %v2413
        %v2973 = vadd.f32 %v2972, %v2429
        %v2974 = vadd.f32 %v2973, %v2445
        %v2975 = vadd.f32 %v2974, %v2461
        %v2976 = vadd.f32 %v2975, %v2477
        %v2977 = vadd.f32 %v2976, %v2493
        %v2978 = vadd.f32 %v2977, %v2509
        %v2979 = vadd.f32 %v2978, %v2525
        %v2980 = vadd.f32 %v2979, %v2541
        %v2981 = vadd.f32 %v2980, %v2557
        %v2982 = vadd.f32 %v2981, %v2573
        %v2983 = vadd.f32 %v2982, %v2589
        %v2984 = vadd.f32 %v2983, %v2605
        %v2985 = vadd.f32 %v2984, %v2621
        %v2986 = vadd.f32 %v2985, %v2637
        %v2987 = vadd.f32 %v2986, %v2653
        %v2988 = vrot.slane %v2987, 4
        %v2989 = vadd.f32 %v2987, %v2988
        %v2990 = vrot.slane %v2989, 2
        %v2991 = vadd.f32 %v2989, %v2990
        %v2992 = vrot.slane %v2991, 1
        %v2993 = vadd.f32 %v2991, %v2992
        %v2994 = vadd.f32 %v2158, %v2174
        %v2995 = vadd.f32 %v2994, %v2190
        %v2996 = vadd.f32 %v2995, %v2206
        %v2997 = vadd.f32 %v2996, %v2222
        %v2998 = vadd.f32 %v2997, %v2238
        %v2999 = vadd.f32 %v2998, %v2254
        %v3000 = vadd.f32 %v2999, %v2270
        %v3001 = vadd.f32 %v3000, %v2286
        %v3002 = vadd.f32 %v3001, %v2302
        %v3003 = vadd.f32 %v3002, %v2318
        %v3004 = vadd.f32 %v3003, %v2334
        %v3005 = vadd.f32 %v3004, %v2350
        %v3006 = vadd.f32 %v3005, %v2366
        %v3007 = vadd.f32 %v3006, %v2382
        %v3008 = vadd.f32 %v3007, %v2398
        %v3009 = vadd.f32 %v3008, %v2414
        %v3010 = vadd.f32 %v3009, %v2430
        %v3011 = vadd.f32 %v3010, %v2446
        %v3012 = vadd.f32 %v3011, %v2462
        %v3013 = vadd.f32 %v3012, %v2478
        %v3014 = vadd.f32 %v3013, %v2494
        %v3015 = vadd.f32 %v3014, %v2510
        %v3016 = vadd.f32 %v3015, %v2526
        %v3017 = vadd.f32 %v3016, %v2542
        %v3018 = vadd.f32 %v3017, %v2558
        %v3019 = vadd.f32 %v3018, %v2574
        %v3020 = vadd.f32 %v3019, %v2590
        %v3021 = vadd.f32 %v3020, %v2606
        %v3022 = vadd.f32 %v3021, %v2622
        %v3023 = vadd.f32 %v3022, %v2638
        %v3024 = vadd.f32 %v3023, %v2654
        %v3025 = vrot.slane %v3024, 4
        %v3026 = vadd.f32 %v3024, %v3025
        %v3027 = vrot.slane %v3026, 2
        %v3028 = vadd.f32 %v3026, %v3027
        %v3029 = vrot.slane %v3028, 1
        %v3030 = vadd.f32 %v3028, %v3029
        %v3031 = vadd.f32 %v2159, %v2175
        %v3032 = vadd.f32 %v3031, %v2191
        %v3033 = vadd.f32 %v3032, %v2207
        %v3034 = vadd.f32 %v3033, %v2223
        %v3035 = vadd.f32 %v3034, %v2239
        %v3036 = vadd.f32 %v3035, %v2255
        %v3037 = vadd.f32 %v3036, %v2271
        %v3038 = vadd.f32 %v3037, %v2287
        %v3039 = vadd.f32 %v3038, %v2303
        %v3040 = vadd.f32 %v3039, %v2319
        %v3041 = vadd.f32 %v3040, %v2335
        %v3042 = vadd.f32 %v3041, %v2351
        %v3043 = vadd.f32 %v3042, %v2367
        %v3044 = vadd.f32 %v3043, %v2383
        %v3045 = vadd.f32 %v3044, %v2399
        %v3046 = vadd.f32 %v3045, %v2415
        %v3047 = vadd.f32 %v3046, %v2431
        %v3048 = vadd.f32 %v3047, %v2447
        %v3049 = vadd.f32 %v3048, %v2463
        %v3050 = vadd.f32 %v3049, %v2479
        %v3051 = vadd.f32 %v3050, %v2495
        %v3052 = vadd.f32 %v3051, %v2511
        %v3053 = vadd.f32 %v3052, %v2527
        %v3054 = vadd.f32 %v3053, %v2543
        %v3055 = vadd.f32 %v3054, %v2559
        %v3056 = vadd.f32 %v3055, %v2575
        %v3057 = vadd.f32 %v3056, %v2591
        %v3058 = vadd.f32 %v3057, %v2607
        %v3059 = vadd.f32 %v3058, %v2623
        %v3060 = vadd.f32 %v3059, %v2639
        %v3061 = vadd.f32 %v3060, %v2655
        %v3062 = vrot.slane %v3061, 4
        %v3063 = vadd.f32 %v3061, %v3062
        %v3064 = vrot.slane %v3063, 2
        %v3065 = vadd.f32 %v3063, %v3064
        %v3066 = vrot.slane %v3065, 1
        %v3067 = vadd.f32 %v3065, %v3066
        %v3068 = vadd.f32 %v2160, %v2176
        %v3069 = vadd.f32 %v3068, %v2192
        %v3070 = vadd.f32 %v3069, %v2208
        %v3071 = vadd.f32 %v3070, %v2224
        %v3072 = vadd.f32 %v3071, %v2240
        %v3073 = vadd.f32 %v3072, %v2256
        %v3074 = vadd.f32 %v3073, %v2272
        %v3075 = vadd.f32 %v3074, %v2288
        %v3076 = vadd.f32 %v3075, %v2304
        %v3077 = vadd.f32 %v3076, %v2320
        %v3078 = vadd.f32 %v3077, %v2336
        %v3079 = vadd.f32 %v3078, %v2352
        %v3080 = vadd.f32 %v3079, %v2368
        %v3081 = vadd.f32 %v3080, %v2384
        %v3082 = vadd.f32 %v3081, %v2400
        %v3083 = vadd.f32 %v3082, %v2416
        %v3084 = vadd.f32 %v3083, %v2432
        %v3085 = vadd.f32 %v3084, %v2448
        %v3086 = vadd.f32 %v3085, %v2464
        %v3087 = vadd.f32 %v3086, %v2480
        %v3088 = vadd.f32 %v3087, %v2496
        %v3089 = vadd.f32 %v3088, %v2512
        %v3090 = vadd.f32 %v3089, %v2528
        %v3091 = vadd.f32 %v3090, %v2544
        %v3092 = vadd.f32 %v3091, %v2560
        %v3093 = vadd.f32 %v3092, %v2576
        %v3094 = vadd.f32 %v3093, %v2592
        %v3095 = vadd.f32 %v3094, %v2608
        %v3096 = vadd.f32 %v3095, %v2624
        %v3097 = vadd.f32 %v3096, %v2640
        %v3098 = vadd.f32 %v3097, %v2656
        %v3099 = vrot.slane %v3098, 4
        %v3100 = vadd.f32 %v3098, %v3099
        %v3101 = vrot.slane %v3100, 2
        %v3102 = vadd.f32 %v3100, %v3101
        %v3103 = vrot.slane %v3102, 1
        %v3104 = vadd.f32 %v3102, %v3103
        %v3105 = vadd.f32 %v2161, %v2177
        %v3106 = vadd.f32 %v3105, %v2193
        %v3107 = vadd.f32 %v3106, %v2209
        %v3108 = vadd.f32 %v3107, %v2225
        %v3109 = vadd.f32 %v3108, %v2241
        %v3110 = vadd.f32 %v3109, %v2257
        %v3111 = vadd.f32 %v3110, %v2273
        %v3112 = vadd.f32 %v3111, %v2289
        %v3113 = vadd.f32 %v3112, %v2305
        %v3114 = vadd.f32 %v3113, %v2321
        %v3115 = vadd.f32 %v3114, %v2337
        %v3116 = vadd.f32 %v3115, %v2353
        %v3117 = vadd.f32 %v3116, %v2369
        %v3118 = vadd.f32 %v3117, %v2385
        %v3119 = vadd.f32 %v3118, %v2401
        %v3120 = vadd.f32 %v3119, %v2417
        %v3121 = vadd.f32 %v3120, %v2433
        %v3122 = vadd.f32 %v3121, %v2449
        %v3123 = vadd.f32 %v3122, %v2465
        %v3124 = vadd.f32 %v3123, %v2481
        %v3125 = vadd.f32 %v3124, %v2497
        %v3126 = vadd.f32 %v3125, %v2513
        %v3127 = vadd.f32 %v3126, %v2529
        %v3128 = vadd.f32 %v3127, %v2545
        %v3129 = vadd.f32 %v3128, %v2561
        %v3130 = vadd.f32 %v3129, %v2577
        %v3131 = vadd.f32 %v3130, %v2593
        %v3132 = vadd.f32 %v3131, %v2609
        %v3133 = vadd.f32 %v3132, %v2625
        %v3134 = vadd.f32 %v3133, %v2641
        %v3135 = vadd.f32 %v3134, %v2657
        %v3136 = vrot.slane %v3135, 4
        %v3137 = vadd.f32 %v3135, %v3136
        %v3138 = vrot.slane %v3137, 2
        %v3139 = vadd.f32 %v3137, %v3138
        %v3140 = vrot.slane %v3139, 1
        %v3141 = vadd.f32 %v3139, %v3140
        %v3142 = vadd.f32 %v2162, %v2178
        %v3143 = vadd.f32 %v3142, %v2194
        %v3144 = vadd.f32 %v3143, %v2210
        %v3145 = vadd.f32 %v3144, %v2226
        %v3146 = vadd.f32 %v3145, %v2242
        %v3147 = vadd.f32 %v3146, %v2258
        %v3148 = vadd.f32 %v3147, %v2274
        %v3149 = vadd.f32 %v3148, %v2290
        %v3150 = vadd.f32 %v3149, %v2306
        %v3151 = vadd.f32 %v3150, %v2322
        %v3152 = vadd.f32 %v3151, %v2338
        %v3153 = vadd.f32 %v3152, %v2354
        %v3154 = vadd.f32 %v3153, %v2370
        %v3155 = vadd.f32 %v3154, %v2386
        %v3156 = vadd.f32 %v3155, %v2402
        %v3157 = vadd.f32 %v3156, %v2418
        %v3158 = vadd.f32 %v3157, %v2434
        %v3159 = vadd.f32 %v3158, %v2450
        %v3160 = vadd.f32 %v3159, %v2466
        %v3161 = vadd.f32 %v3160, %v2482
        %v3162 = vadd.f32 %v3161, %v2498
        %v3163 = vadd.f32 %v3162, %v2514
        %v3164 = vadd.f32 %v3163, %v2530
        %v3165 = vadd.f32 %v3164, %v2546
        %v3166 = vadd.f32 %v3165, %v2562
        %v3167 = vadd.f32 %v3166, %v2578
        %v3168 = vadd.f32 %v3167, %v2594
        %v3169 = vadd.f32 %v3168, %v2610
        %v3170 = vadd.f32 %v3169, %v2626
        %v3171 = vadd.f32 %v3170, %v2642
        %v3172 = vadd.f32 %v3171, %v2658
        %v3173 = vrot.slane %v3172, 4
        %v3174 = vadd.f32 %v3172, %v3173
        %v3175 = vrot.slane %v3174, 2
        %v3176 = vadd.f32 %v3174, %v3175
        %v3177 = vrot.slane %v3176, 1
        %v3178 = vadd.f32 %v3176, %v3177
        %v3179 = vadd.f32 %v2163, %v2179
        %v3180 = vadd.f32 %v3179, %v2195
        %v3181 = vadd.f32 %v3180, %v2211
        %v3182 = vadd.f32 %v3181, %v2227
        %v3183 = vadd.f32 %v3182, %v2243
        %v3184 = vadd.f32 %v3183, %v2259
        %v3185 = vadd.f32 %v3184, %v2275
        %v3186 = vadd.f32 %v3185, %v2291
        %v3187 = vadd.f32 %v3186, %v2307
        %v3188 = vadd.f32 %v3187, %v2323
        %v3189 = vadd.f32 %v3188, %v2339
        %v3190 = vadd.f32 %v3189, %v2355
        %v3191 = vadd.f32 %v3190, %v2371
        %v3192 = vadd.f32 %v3191, %v2387
        %v3193 = vadd.f32 %v3192, %v2403
        %v3194 = vadd.f32 %v3193, %v2419
        %v3195 = vadd.f32 %v3194, %v2435
        %v3196 = vadd.f32 %v3195, %v2451
        %v3197 = vadd.f32 %v3196, %v2467
        %v3198 = vadd.f32 %v3197, %v2483
        %v3199 = vadd.f32 %v3198, %v2499
        %v3200 = vadd.f32 %v3199, %v2515
        %v3201 = vadd.f32 %v3200, %v2531
        %v3202 = vadd.f32 %v3201, %v2547
        %v3203 = vadd.f32 %v3202, %v2563
        %v3204 = vadd.f32 %v3203, %v2579
        %v3205 = vadd.f32 %v3204, %v2595
        %v3206 = vadd.f32 %v3205, %v2611
        %v3207 = vadd.f32 %v3206, %v2627
        %v3208 = vadd.f32 %v3207, %v2643
        %v3209 = vadd.f32 %v3208, %v2659
        %v3210 = vrot.slane %v3209, 4
        %v3211 = vadd.f32 %v3209, %v3210
        %v3212 = vrot.slane %v3211, 2
        %v3213 = vadd.f32 %v3211, %v3212
        %v3214 = vrot.slane %v3213, 1
        %v3215 = vadd.f32 %v3213, %v3214
        %v3216 = vadd.f32 %v2164, %v2180
        %v3217 = vadd.f32 %v3216, %v2196
        %v3218 = vadd.f32 %v3217, %v2212
        %v3219 = vadd.f32 %v3218, %v2228
        %v3220 = vadd.f32 %v3219, %v2244
        %v3221 = vadd.f32 %v3220, %v2260
        %v3222 = vadd.f32 %v3221, %v2276
        %v3223 = vadd.f32 %v3222, %v2292
        %v3224 = vadd.f32 %v3223, %v2308
        %v3225 = vadd.f32 %v3224, %v2324
        %v3226 = vadd.f32 %v3225, %v2340
        %v3227 = vadd.f32 %v3226, %v2356
        %v3228 = vadd.f32 %v3227, %v2372
        %v3229 = vadd.f32 %v3228, %v2388
        %v3230 = vadd.f32 %v3229, %v2404
        %v3231 = vadd.f32 %v3230, %v2420
        %v3232 = vadd.f32 %v3231, %v2436
        %v3233 = vadd.f32 %v3232, %v2452
        %v3234 = vadd.f32 %v3233, %v2468
        %v3235 = vadd.f32 %v3234, %v2484
        %v3236 = vadd.f32 %v3235, %v2500
        %v3237 = vadd.f32 %v3236, %v2516
        %v3238 = vadd.f32 %v3237, %v2532
        %v3239 = vadd.f32 %v3238, %v2548
        %v3240 = vadd.f32 %v3239, %v2564
        %v3241 = vadd.f32 %v3240, %v2580
        %v3242 = vadd.f32 %v3241, %v2596
        %v3243 = vadd.f32 %v3242, %v2612
        %v3244 = vadd.f32 %v3243, %v2628
        %v3245 = vadd.f32 %v3244, %v2644
        %v3246 = vadd.f32 %v3245, %v2660
        %v3247 = vrot.slane %v3246, 4
        %v3248 = vadd.f32 %v3246, %v3247
        %v3249 = vrot.slane %v3248, 2
        %v3250 = vadd.f32 %v3248, %v3249
        %v3251 = vrot.slane %v3250, 1
        %v3252 = vadd.f32 %v3250, %v3251
        %v3253 = vrcp.pop 256.0
        %v3254 = vmul.f32 %v2697, %v3253
        %v3255 = vmul.f32 %v2734, %v3253
        %v3256 = vmul.f32 %v2771, %v3253
        %v3257 = vmul.f32 %v2808, %v3253
        %v3258 = vmul.f32 %v2845, %v3253
        %v3259 = vmul.f32 %v2882, %v3253
        %v3260 = vmul.f32 %v2919, %v3253
        %v3261 = vmul.f32 %v2956, %v3253
        %v3262 = vmul.f32 %v2993, %v3253
        %v3263 = vmul.f32 %v3030, %v3253
        %v3264 = vmul.f32 %v3067, %v3253
        %v3265 = vmul.f32 %v3104, %v3253
        %v3266 = vmul.f32 %v3141, %v3253
        %v3267 = vmul.f32 %v3178, %v3253
        %v3268 = vmul.f32 %v3215, %v3253
        %v3269 = vmul.f32 %v3252, %v3253
        %v3286 = vcombine.low %v3254, %v3255
        %v3287 = vcombine.low %v3256, %v3257
        %v3288 = vcombine.low %v3258, %v3259
        %v3289 = vcombine.low %v3260, %v3261
        %v3291 = vunpack.c.l.s4 1966171168
        %v3292 = vunpack.c.0.s8 %v3291
        %v3293 = vlaneseq
        %v3294 = vshrl.u32 %v3293, 7
        %v3295 = vsub.s32 %v3292, %v3294
        %v3296 = vrot.slane %v3286, %v3295
        %v3298 = vunpack.c.l.s4 1966171168
        %v3299 = vunpack.c.0.s8 %v3298
        %v3300 = vlaneseq
        %v3301 = vshrl.u32 %v3300, 7
        %v3302 = vsub.s32 %v3299, %v3301
        %v3303 = vrot.slane %v3287, %v3302
        %v3305 = vunpack.c.l.s4 1966171168
        %v3306 = vunpack.c.0.s8 %v3305
        %v3307 = vlaneseq
        %v3308 = vshrl.u32 %v3307, 7
        %v3309 = vsub.s32 %v3306, %v3308
        %v3310 = vrot.slane %v3288, %v3309
        %v3312 = vunpack.c.l.s4 1966171168
        %v3313 = vunpack.c.0.s8 %v3312
        %v3314 = vlaneseq
        %v3315 = vshrl.u32 %v3314, 7
        %v3316 = vsub.s32 %v3313, %v3315
        %v3317 = vrot.slane %v3289, %v3316
        %v3318 = vcombine.low %v3296, %v3303
        %v3319 = vcombine.low %v3310, %v3317
        %v3321 = vunpack.c.l.s4 1966171168
        %v3322 = vunpack.c.0.s8 %v3321
        %v3323 = vlaneseq
        %v3324 = vshrl.u32 %v3323, 7
        %v3325 = vsub.s32 %v3322, %v3324
        %v3326 = vrot.slane %v3318, %v3325
        %v3328 = vunpack.c.l.s4 1966171168
        %v3329 = vunpack.c.0.s8 %v3328
        %v3330 = vlaneseq
        %v3331 = vshrl.u32 %v3330, 7
        %v3332 = vsub.s32 %v3329, %v3331
        %v3333 = vrot.slane %v3319, %v3332
        %v3334 = vcombine.low %v3326, %v3333
        %v3335 = vcombine.low %v3262, %v3263
        %v3336 = vcombine.low %v3264, %v3265
        %v3337 = vcombine.low %v3266, %v3267
        %v3338 = vcombine.low %v3268, %v3269
        %v3340 = vunpack.c.l.s4 1966171168
        %v3341 = vunpack.c.0.s8 %v3340
        %v3342 = vlaneseq
        %v3343 = vshrl.u32 %v3342, 7
        %v3344 = vsub.s32 %v3341, %v3343
        %v3345 = vrot.slane %v3335, %v3344
        %v3347 = vunpack.c.l.s4 1966171168
        %v3348 = vunpack.c.0.s8 %v3347
        %v3349 = vlaneseq
        %v3350 = vshrl.u32 %v3349, 7
        %v3351 = vsub.s32 %v3348, %v3350
        %v3352 = vrot.slane %v3336, %v3351
        %v3354 = vunpack.c.l.s4 1966171168
        %v3355 = vunpack.c.0.s8 %v3354
        %v3356 = vlaneseq
        %v3357 = vshrl.u32 %v3356, 7
        %v3358 = vsub.s32 %v3355, %v3357
        %v3359 = vrot.slane %v3337, %v3358
        %v3361 = vunpack.c.l.s4 1966171168
        %v3362 = vunpack.c.0.s8 %v3361
        %v3363 = vlaneseq
        %v3364 = vshrl.u32 %v3363, 7
        %v3365 = vsub.s32 %v3362, %v3364
        %v3366 = vrot.slane %v3338, %v3365
        %v3367 = vcombine.low %v3345, %v3352
        %v3368 = vcombine.low %v3359, %v3366
        %v3370 = vunpack.c.l.s4 1966171168
        %v3371 = vunpack.c.0.s8 %v3370
        %v3372 = vlaneseq
        %v3373 = vshrl.u32 %v3372, 7
        %v3374 = vsub.s32 %v3371, %v3373
        %v3375 = vrot.slane %v3367, %v3374
        %v3377 = vunpack.c.l.s4 1966171168
        %v3378 = vunpack.c.0.s8 %v3377
        %v3379 = vlaneseq
        %v3380 = vshrl.u32 %v3379, 7
        %v3381 = vsub.s32 %v3378, %v3380
        %v3382 = vrot.slane %v3368, %v3381
        %v3383 = vcombine.low %v3375, %v3382
        %s3386 = sshra.s32 %s227, 3
        %s3387 = sand.u32 %s227, 7
        %s3388 = sshra.s32 %s227, 3
        %s3389 = sand.u32 %s227, 7
        %s3390 = smul.u32 %s3386, 16
        %s3391 = smul.u32 %s3390, 8
        %s3392 = sadd.s32 %s3391, %s3389
        %s3393 = scalar_lea.vmem [#allocation2], %s3392
        %3394 = vst [vmem:[%s3393] ss:$8 sm:$0xf] %v3334
        %3395 = vst [vmem:[%s3393] ss:$8 sm:$0xf0] %v3334
        %s3396 = sadd.s32 %s3390, 8
        %s3397 = smul.u32 %s3396, 8
        %s3398 = sadd.s32 %s3397, %s3389
        %s3399 = scalar_lea.vmem [#allocation2], %s3398
        %3400 = vst [vmem:[%s3399] ss:$8 sm:$0xf] %v3383
        %3401 = vst [vmem:[%s3399] ss:$8 sm:$0xf0] %v3383
      $region45: #{deepfake_detector_forward.2} parent=39 // loop_footer
        %s231 = sadd.s32 1, %s227
      $region46: #{deepfake_detector_forward.2} parent=39 // loop_footer_branch
        %226 = sbr.rel target = $region42
      $region47: #{deepfake_detector_forward.2} parent=39 // loop_exit
        _
      %v3402 = vld [vmem:[#allocation2] sm:$0xff]
      %v3403 = vld [vmem:[#allocation2 + $0x8] sm:$0xff]
      %v3404 = vld [vmem:[#allocation2 + $0x10] sm:$0xff]
      %v3405 = vld [vmem:[#allocation2 + $0x18] sm:$0xff]
      %v3406 = vld [vmem:[#allocation2 + $0x20] sm:$0xff]
      %v3407 = vld [vmem:[#allocation2 + $0x28] sm:$0xff]
      %v3408 = vld [vmem:[#allocation2 + $0x30] sm:$0xff]
      %v3409 = vld [vmem:[#allocation2 + $0x38] sm:$0xff]
      %v3410 = vld [vmem:[#allocation2 + $0x40] sm:$0xff]
      %v3411 = vld [vmem:[#allocation2 + $0x48] sm:$0xff]
      %v3412 = vld [vmem:[#allocation2 + $0x50] sm:$0xff]
      %v3413 = vld [vmem:[#allocation2 + $0x58] sm:$0xff]
      %v3414 = vld [vmem:[#allocation2 + $0x60] sm:$0xff]
      %v3415 = vld [vmem:[#allocation2 + $0x68] sm:$0xff]
      %v3416 = vld [vmem:[#allocation2 + $0x70] sm:$0xff]
      %v3417 = vld [vmem:[#allocation2 + $0x78] sm:$0xff]
      %v3418 = vld [vmem:[%s3] sm:$0xff]
      %v3419 = vld [vmem:[%s3 + $0x8] sm:$0xff]
      %v3420 = vld [vmem:[%s3 + $0x10] sm:$0xff]
      %v3421 = vld [vmem:[%s3 + $0x18] sm:$0xff]
      %v3422 = vld [vmem:[%s3 + $0x20] sm:$0xff]
      %v3423 = vld [vmem:[%s3 + $0x28] sm:$0xff]
      %v3424 = vld [vmem:[%s3 + $0x30] sm:$0xff]
      %v3425 = vld [vmem:[%s3 + $0x38] sm:$0xff]
      %v3426 = vld [vmem:[%s3 + $0x40] sm:$0xff]
      %v3427 = vld [vmem:[%s3 + $0x48] sm:$0xff]
      %v3428 = vld [vmem:[%s3 + $0x50] sm:$0xff]
      %v3429 = vld [vmem:[%s3 + $0x58] sm:$0xff]
      %v3430 = vld [vmem:[%s3 + $0x60] sm:$0xff]
      %v3431 = vld [vmem:[%s3 + $0x68] sm:$0xff]
      %v3432 = vld [vmem:[%s3 + $0x70] sm:$0xff]
      %v3433 = vld [vmem:[%s3 + $0x78] sm:$0xff]
      %v3434 = vld [vmem:[%s3 + $0x80] sm:$0xff]
      %v3435 = vld [vmem:[%s3 + $0x88] sm:$0xff]
      %v3436 = vld [vmem:[%s3 + $0x90] sm:$0xff]
      %v3437 = vld [vmem:[%s3 + $0x98] sm:$0xff]
      %v3438 = vld [vmem:[%s3 + $0xa0] sm:$0xff]
      %v3439 = vld [vmem:[%s3 + $0xa8] sm:$0xff]
      %v3440 = vld [vmem:[%s3 + $0xb0] sm:$0xff]
      %v3441 = vld [vmem:[%s3 + $0xb8] sm:$0xff]
      %v3442 = vld [vmem:[%s3 + $0xc0] sm:$0xff]
      %v3443 = vld [vmem:[%s3 + $0xc8] sm:$0xff]
      %v3444 = vld [vmem:[%s3 + $0xd0] sm:$0xff]
      %v3445 = vld [vmem:[%s3 + $0xd8] sm:$0xff]
      %v3446 = vld [vmem:[%s3 + $0xe0] sm:$0xff]
      %v3447 = vld [vmem:[%s3 + $0xe8] sm:$0xff]
      %v3448 = vld [vmem:[%s3 + $0xf0] sm:$0xff]
      %v3449 = vld [vmem:[%s3 + $0xf8] sm:$0xff]
      %v3450 = vld [vmem:[%s3 + $0x100] sm:$0xff]
      %v3451 = vld [vmem:[%s3 + $0x108] sm:$0xff]
      %v3452 = vld [vmem:[%s3 + $0x110] sm:$0xff]
      %v3453 = vld [vmem:[%s3 + $0x118] sm:$0xff]
      %v3454 = vld [vmem:[%s3 + $0x120] sm:$0xff]
      %v3455 = vld [vmem:[%s3 + $0x128] sm:$0xff]
      %v3456 = vld [vmem:[%s3 + $0x130] sm:$0xff]
      %v3457 = vld [vmem:[%s3 + $0x138] sm:$0xff]
      %v3458 = vld [vmem:[%s3 + $0x140] sm:$0xff]
      %v3459 = vld [vmem:[%s3 + $0x148] sm:$0xff]
      %v3460 = vld [vmem:[%s3 + $0x150] sm:$0xff]
      %v3461 = vld [vmem:[%s3 + $0x158] sm:$0xff]
      %v3462 = vld [vmem:[%s3 + $0x160] sm:$0xff]
      %v3463 = vld [vmem:[%s3 + $0x168] sm:$0xff]
      %v3464 = vld [vmem:[%s3 + $0x170] sm:$0xff]
      %v3465 = vld [vmem:[%s3 + $0x178] sm:$0xff]
      %v3466 = vld [vmem:[%s3 + $0x180] sm:$0xff]
      %v3467 = vld [vmem:[%s3 + $0x188] sm:$0xff]
      %v3468 = vld [vmem:[%s3 + $0x190] sm:$0xff]
      %v3469 = vld [vmem:[%s3 + $0x198] sm:$0xff]
      %v3470 = vld [vmem:[%s3 + $0x1a0] sm:$0xff]
      %v3471 = vld [vmem:[%s3 + $0x1a8] sm:$0xff]
      %v3472 = vld [vmem:[%s3 + $0x1b0] sm:$0xff]
      %v3473 = vld [vmem:[%s3 + $0x1b8] sm:$0xff]
      %v3474 = vld [vmem:[%s3 + $0x1c0] sm:$0xff]
      %v3475 = vld [vmem:[%s3 + $0x1c8] sm:$0xff]
      %v3476 = vld [vmem:[%s3 + $0x1d0] sm:$0xff]
      %v3477 = vld [vmem:[%s3 + $0x1d8] sm:$0xff]
      %v3478 = vld [vmem:[%s3 + $0x1e0] sm:$0xff]
      %v3479 = vld [vmem:[%s3 + $0x1e8] sm:$0xff]
      %v3480 = vld [vmem:[%s3 + $0x1f0] sm:$0xff]
      %v3481 = vld [vmem:[%s3 + $0x1f8] sm:$0xff]
      %v3482 = vld [vmem:[%s3 + $0x200] sm:$0xff]
      %v3483 = vld [vmem:[%s3 + $0x208] sm:$0xff]
      %v3484 = vld [vmem:[%s3 + $0x210] sm:$0xff]
      %v3485 = vld [vmem:[%s3 + $0x218] sm:$0xff]
      %v3486 = vld [vmem:[%s3 + $0x220] sm:$0xff]
      %v3487 = vld [vmem:[%s3 + $0x228] sm:$0xff]
      %v3488 = vld [vmem:[%s3 + $0x230] sm:$0xff]
      %v3489 = vld [vmem:[%s3 + $0x238] sm:$0xff]
      %v3490 = vld [vmem:[%s3 + $0x240] sm:$0xff]
      %v3491 = vld [vmem:[%s3 + $0x248] sm:$0xff]
      %v3492 = vld [vmem:[%s3 + $0x250] sm:$0xff]
      %v3493 = vld [vmem:[%s3 + $0x258] sm:$0xff]
      %v3494 = vld [vmem:[%s3 + $0x260] sm:$0xff]
      %v3495 = vld [vmem:[%s3 + $0x268] sm:$0xff]
      %v3496 = vld [vmem:[%s3 + $0x270] sm:$0xff]
      %v3497 = vld [vmem:[%s3 + $0x278] sm:$0xff]
      %v3498 = vld [vmem:[%s3 + $0x280] sm:$0xff]
      %v3499 = vld [vmem:[%s3 + $0x288] sm:$0xff]
      %v3500 = vld [vmem:[%s3 + $0x290] sm:$0xff]
      %v3501 = vld [vmem:[%s3 + $0x298] sm:$0xff]
      %v3502 = vld [vmem:[%s3 + $0x2a0] sm:$0xff]
      %v3503 = vld [vmem:[%s3 + $0x2a8] sm:$0xff]
      %v3504 = vld [vmem:[%s3 + $0x2b0] sm:$0xff]
      %v3505 = vld [vmem:[%s3 + $0x2b8] sm:$0xff]
      %v3506 = vld [vmem:[%s3 + $0x2c0] sm:$0xff]
      %v3507 = vld [vmem:[%s3 + $0x2c8] sm:$0xff]
      %v3508 = vld [vmem:[%s3 + $0x2d0] sm:$0xff]
      %v3509 = vld [vmem:[%s3 + $0x2d8] sm:$0xff]
      %v3510 = vld [vmem:[%s3 + $0x2e0] sm:$0xff]
      %v3511 = vld [vmem:[%s3 + $0x2e8] sm:$0xff]
      %v3512 = vld [vmem:[%s3 + $0x2f0] sm:$0xff]
      %v3513 = vld [vmem:[%s3 + $0x2f8] sm:$0xff]
      %v3514 = vld [vmem:[%s3 + $0x300] sm:$0xff]
      %v3515 = vld [vmem:[%s3 + $0x308] sm:$0xff]
      %v3516 = vld [vmem:[%s3 + $0x310] sm:$0xff]
      %v3517 = vld [vmem:[%s3 + $0x318] sm:$0xff]
      %v3518 = vld [vmem:[%s3 + $0x320] sm:$0xff]
      %v3519 = vld [vmem:[%s3 + $0x328] sm:$0xff]
      %v3520 = vld [vmem:[%s3 + $0x330] sm:$0xff]
      %v3521 = vld [vmem:[%s3 + $0x338] sm:$0xff]
      %v3522 = vld [vmem:[%s3 + $0x340] sm:$0xff]
      %v3523 = vld [vmem:[%s3 + $0x348] sm:$0xff]
      %v3524 = vld [vmem:[%s3 + $0x350] sm:$0xff]
      %v3525 = vld [vmem:[%s3 + $0x358] sm:$0xff]
      %v3526 = vld [vmem:[%s3 + $0x360] sm:$0xff]
      %v3527 = vld [vmem:[%s3 + $0x368] sm:$0xff]
      %v3528 = vld [vmem:[%s3 + $0x370] sm:$0xff]
      %v3529 = vld [vmem:[%s3 + $0x378] sm:$0xff]
      %v3530 = vld [vmem:[%s3 + $0x380] sm:$0xff]
      %v3531 = vld [vmem:[%s3 + $0x388] sm:$0xff]
      %v3532 = vld [vmem:[%s3 + $0x390] sm:$0xff]
      %v3533 = vld [vmem:[%s3 + $0x398] sm:$0xff]
      %v3534 = vld [vmem:[%s3 + $0x3a0] sm:$0xff]
      %v3535 = vld [vmem:[%s3 + $0x3a8] sm:$0xff]
      %v3536 = vld [vmem:[%s3 + $0x3b0] sm:$0xff]
      %v3537 = vld [vmem:[%s3 + $0x3b8] sm:$0xff]
      %v3538 = vld [vmem:[%s3 + $0x3c0] sm:$0xff]
      %v3539 = vld [vmem:[%s3 + $0x3c8] sm:$0xff]
      %v3540 = vld [vmem:[%s3 + $0x3d0] sm:$0xff]
      %v3541 = vld [vmem:[%s3 + $0x3d8] sm:$0xff]
      %v3542 = vld [vmem:[%s3 + $0x3e0] sm:$0xff]
      %v3543 = vld [vmem:[%s3 + $0x3e8] sm:$0xff]
      %v3544 = vld [vmem:[%s3 + $0x3f0] sm:$0xff]
      %v3545 = vld [vmem:[%s3 + $0x3f8] sm:$0xff]
      %v3546 = vld [vmem:[%s3 + $0x400] sm:$0xff]
      %v3547 = vld [vmem:[%s3 + $0x408] sm:$0xff]
      %v3548 = vld [vmem:[%s3 + $0x410] sm:$0xff]
      %v3549 = vld [vmem:[%s3 + $0x418] sm:$0xff]
      %v3550 = vld [vmem:[%s3 + $0x420] sm:$0xff]
      %v3551 = vld [vmem:[%s3 + $0x428] sm:$0xff]
      %v3552 = vld [vmem:[%s3 + $0x430] sm:$0xff]
      %v3553 = vld [vmem:[%s3 + $0x438] sm:$0xff]
      %v3554 = vld [vmem:[%s3 + $0x440] sm:$0xff]
      %v3555 = vld [vmem:[%s3 + $0x448] sm:$0xff]
      %v3556 = vld [vmem:[%s3 + $0x450] sm:$0xff]
      %v3557 = vld [vmem:[%s3 + $0x458] sm:$0xff]
      %v3558 = vld [vmem:[%s3 + $0x460] sm:$0xff]
      %v3559 = vld [vmem:[%s3 + $0x468] sm:$0xff]
      %v3560 = vld [vmem:[%s3 + $0x470] sm:$0xff]
      %v3561 = vld [vmem:[%s3 + $0x478] sm:$0xff]
      %v3562 = vld [vmem:[%s3 + $0x480] sm:$0xff]
      %v3563 = vld [vmem:[%s3 + $0x488] sm:$0xff]
      %v3564 = vld [vmem:[%s3 + $0x490] sm:$0xff]
      %v3565 = vld [vmem:[%s3 + $0x498] sm:$0xff]
      %v3566 = vld [vmem:[%s3 + $0x4a0] sm:$0xff]
      %v3567 = vld [vmem:[%s3 + $0x4a8] sm:$0xff]
      %v3568 = vld [vmem:[%s3 + $0x4b0] sm:$0xff]
      %v3569 = vld [vmem:[%s3 + $0x4b8] sm:$0xff]
      %v3570 = vld [vmem:[%s3 + $0x4c0] sm:$0xff]
      %v3571 = vld [vmem:[%s3 + $0x4c8] sm:$0xff]
      %v3572 = vld [vmem:[%s3 + $0x4d0] sm:$0xff]
      %v3573 = vld [vmem:[%s3 + $0x4d8] sm:$0xff]
      %v3574 = vld [vmem:[%s3 + $0x4e0] sm:$0xff]
      %v3575 = vld [vmem:[%s3 + $0x4e8] sm:$0xff]
      %v3576 = vld [vmem:[%s3 + $0x4f0] sm:$0xff]
      %v3577 = vld [vmem:[%s3 + $0x4f8] sm:$0xff]
      %v3578 = vld [vmem:[%s3 + $0x500] sm:$0xff]
      %v3579 = vld [vmem:[%s3 + $0x508] sm:$0xff]
      %v3580 = vld [vmem:[%s3 + $0x510] sm:$0xff]
      %v3581 = vld [vmem:[%s3 + $0x518] sm:$0xff]
      %v3582 = vld [vmem:[%s3 + $0x520] sm:$0xff]
      %v3583 = vld [vmem:[%s3 + $0x528] sm:$0xff]
      %v3584 = vld [vmem:[%s3 + $0x530] sm:$0xff]
      %v3585 = vld [vmem:[%s3 + $0x538] sm:$0xff]
      %v3586 = vld [vmem:[%s3 + $0x540] sm:$0xff]
      %v3587 = vld [vmem:[%s3 + $0x548] sm:$0xff]
      %v3588 = vld [vmem:[%s3 + $0x550] sm:$0xff]
      %v3589 = vld [vmem:[%s3 + $0x558] sm:$0xff]
      %v3590 = vld [vmem:[%s3 + $0x560] sm:$0xff]
      %v3591 = vld [vmem:[%s3 + $0x568] sm:$0xff]
      %v3592 = vld [vmem:[%s3 + $0x570] sm:$0xff]
      %v3593 = vld [vmem:[%s3 + $0x578] sm:$0xff]
      %v3594 = vld [vmem:[%s3 + $0x580] sm:$0xff]
      %v3595 = vld [vmem:[%s3 + $0x588] sm:$0xff]
      %v3596 = vld [vmem:[%s3 + $0x590] sm:$0xff]
      %v3597 = vld [vmem:[%s3 + $0x598] sm:$0xff]
      %v3598 = vld [vmem:[%s3 + $0x5a0] sm:$0xff]
      %v3599 = vld [vmem:[%s3 + $0x5a8] sm:$0xff]
      %v3600 = vld [vmem:[%s3 + $0x5b0] sm:$0xff]
      %v3601 = vld [vmem:[%s3 + $0x5b8] sm:$0xff]
      %v3602 = vld [vmem:[%s3 + $0x5c0] sm:$0xff]
      %v3603 = vld [vmem:[%s3 + $0x5c8] sm:$0xff]
      %v3604 = vld [vmem:[%s3 + $0x5d0] sm:$0xff]
      %v3605 = vld [vmem:[%s3 + $0x5d8] sm:$0xff]
      %v3606 = vld [vmem:[%s3 + $0x5e0] sm:$0xff]
      %v3607 = vld [vmem:[%s3 + $0x5e8] sm:$0xff]
      %v3608 = vld [vmem:[%s3 + $0x5f0] sm:$0xff]
      %v3609 = vld [vmem:[%s3 + $0x5f8] sm:$0xff]
      %v3610 = vld [vmem:[%s3 + $0x600] sm:$0xff]
      %v3611 = vld [vmem:[%s3 + $0x608] sm:$0xff]
      %v3612 = vld [vmem:[%s3 + $0x610] sm:$0xff]
      %v3613 = vld [vmem:[%s3 + $0x618] sm:$0xff]
      %v3614 = vld [vmem:[%s3 + $0x620] sm:$0xff]
      %v3615 = vld [vmem:[%s3 + $0x628] sm:$0xff]
      %v3616 = vld [vmem:[%s3 + $0x630] sm:$0xff]
      %v3617 = vld [vmem:[%s3 + $0x638] sm:$0xff]
      %v3618 = vld [vmem:[%s3 + $0x640] sm:$0xff]
      %v3619 = vld [vmem:[%s3 + $0x648] sm:$0xff]
      %v3620 = vld [vmem:[%s3 + $0x650] sm:$0xff]
      %v3621 = vld [vmem:[%s3 + $0x658] sm:$0xff]
      %v3622 = vld [vmem:[%s3 + $0x660] sm:$0xff]
      %v3623 = vld [vmem:[%s3 + $0x668] sm:$0xff]
      %v3624 = vld [vmem:[%s3 + $0x670] sm:$0xff]
      %v3625 = vld [vmem:[%s3 + $0x678] sm:$0xff]
      %v3626 = vld [vmem:[%s3 + $0x680] sm:$0xff]
      %v3627 = vld [vmem:[%s3 + $0x688] sm:$0xff]
      %v3628 = vld [vmem:[%s3 + $0x690] sm:$0xff]
      %v3629 = vld [vmem:[%s3 + $0x698] sm:$0xff]
      %v3630 = vld [vmem:[%s3 + $0x6a0] sm:$0xff]
      %v3631 = vld [vmem:[%s3 + $0x6a8] sm:$0xff]
      %v3632 = vld [vmem:[%s3 + $0x6b0] sm:$0xff]
      %v3633 = vld [vmem:[%s3 + $0x6b8] sm:$0xff]
      %v3634 = vld [vmem:[%s3 + $0x6c0] sm:$0xff]
      %v3635 = vld [vmem:[%s3 + $0x6c8] sm:$0xff]
      %v3636 = vld [vmem:[%s3 + $0x6d0] sm:$0xff]
      %v3637 = vld [vmem:[%s3 + $0x6d8] sm:$0xff]
      %v3638 = vld [vmem:[%s3 + $0x6e0] sm:$0xff]
      %v3639 = vld [vmem:[%s3 + $0x6e8] sm:$0xff]
      %v3640 = vld [vmem:[%s3 + $0x6f0] sm:$0xff]
      %v3641 = vld [vmem:[%s3 + $0x6f8] sm:$0xff]
      %v3642 = vld [vmem:[%s3 + $0x700] sm:$0xff]
      %v3643 = vld [vmem:[%s3 + $0x708] sm:$0xff]
      %v3644 = vld [vmem:[%s3 + $0x710] sm:$0xff]
      %v3645 = vld [vmem:[%s3 + $0x718] sm:$0xff]
      %v3646 = vld [vmem:[%s3 + $0x720] sm:$0xff]
      %v3647 = vld [vmem:[%s3 + $0x728] sm:$0xff]
      %v3648 = vld [vmem:[%s3 + $0x730] sm:$0xff]
      %v3649 = vld [vmem:[%s3 + $0x738] sm:$0xff]
      %v3650 = vld [vmem:[%s3 + $0x740] sm:$0xff]
      %v3651 = vld [vmem:[%s3 + $0x748] sm:$0xff]
      %v3652 = vld [vmem:[%s3 + $0x750] sm:$0xff]
      %v3653 = vld [vmem:[%s3 + $0x758] sm:$0xff]
      %v3654 = vld [vmem:[%s3 + $0x760] sm:$0xff]
      %v3655 = vld [vmem:[%s3 + $0x768] sm:$0xff]
      %v3656 = vld [vmem:[%s3 + $0x770] sm:$0xff]
      %v3657 = vld [vmem:[%s3 + $0x778] sm:$0xff]
      %v3658 = vld [vmem:[%s3 + $0x780] sm:$0xff]
      %v3659 = vld [vmem:[%s3 + $0x788] sm:$0xff]
      %v3660 = vld [vmem:[%s3 + $0x790] sm:$0xff]
      %v3661 = vld [vmem:[%s3 + $0x798] sm:$0xff]
      %v3662 = vld [vmem:[%s3 + $0x7a0] sm:$0xff]
      %v3663 = vld [vmem:[%s3 + $0x7a8] sm:$0xff]
      %v3664 = vld [vmem:[%s3 + $0x7b0] sm:$0xff]
      %v3665 = vld [vmem:[%s3 + $0x7b8] sm:$0xff]
      %v3666 = vld [vmem:[%s3 + $0x7c0] sm:$0xff]
      %v3667 = vld [vmem:[%s3 + $0x7c8] sm:$0xff]
      %v3668 = vld [vmem:[%s3 + $0x7d0] sm:$0xff]
      %v3669 = vld [vmem:[%s3 + $0x7d8] sm:$0xff]
      %v3670 = vld [vmem:[%s3 + $0x7e0] sm:$0xff]
      %v3671 = vld [vmem:[%s3 + $0x7e8] sm:$0xff]
      %v3672 = vld [vmem:[%s3 + $0x7f0] sm:$0xff]
      %v3673 = vld [vmem:[%s3 + $0x7f8] sm:$0xff]
      %v3674 = vld [vmem:[%s3 + $0x800] sm:$0xff]
      %v3675 = vld [vmem:[%s3 + $0x808] sm:$0xff]
      %v3676 = vld [vmem:[%s3 + $0x810] sm:$0xff]
      %v3677 = vld [vmem:[%s3 + $0x818] sm:$0xff]
      %v3678 = vld [vmem:[%s3 + $0x820] sm:$0xff]
      %v3679 = vld [vmem:[%s3 + $0x828] sm:$0xff]
      %v3680 = vld [vmem:[%s3 + $0x830] sm:$0xff]
      %v3681 = vld [vmem:[%s3 + $0x838] sm:$0xff]
      %v3682 = vld [vmem:[%s3 + $0x840] sm:$0xff]
      %v3683 = vld [vmem:[%s3 + $0x848] sm:$0xff]
      %v3684 = vld [vmem:[%s3 + $0x850] sm:$0xff]
      %v3685 = vld [vmem:[%s3 + $0x858] sm:$0xff]
      %v3686 = vld [vmem:[%s3 + $0x860] sm:$0xff]
      %v3687 = vld [vmem:[%s3 + $0x868] sm:$0xff]
      %v3688 = vld [vmem:[%s3 + $0x870] sm:$0xff]
      %v3689 = vld [vmem:[%s3 + $0x878] sm:$0xff]
      %v3690 = vld [vmem:[%s3 + $0x880] sm:$0xff]
      %v3691 = vld [vmem:[%s3 + $0x888] sm:$0xff]
      %v3692 = vld [vmem:[%s3 + $0x890] sm:$0xff]
      %v3693 = vld [vmem:[%s3 + $0x898] sm:$0xff]
      %v3694 = vld [vmem:[%s3 + $0x8a0] sm:$0xff]
      %v3695 = vld [vmem:[%s3 + $0x8a8] sm:$0xff]
      %v3696 = vld [vmem:[%s3 + $0x8b0] sm:$0xff]
      %v3697 = vld [vmem:[%s3 + $0x8b8] sm:$0xff]
      %v3698 = vld [vmem:[%s3 + $0x8c0] sm:$0xff]
      %v3699 = vld [vmem:[%s3 + $0x8c8] sm:$0xff]
      %v3700 = vld [vmem:[%s3 + $0x8d0] sm:$0xff]
      %v3701 = vld [vmem:[%s3 + $0x8d8] sm:$0xff]
      %v3702 = vld [vmem:[%s3 + $0x8e0] sm:$0xff]
      %v3703 = vld [vmem:[%s3 + $0x8e8] sm:$0xff]
      %v3704 = vld [vmem:[%s3 + $0x8f0] sm:$0xff]
      %v3705 = vld [vmem:[%s3 + $0x8f8] sm:$0xff]
      %v3706 = vld [vmem:[%s3 + $0x900] sm:$0xff]
      %v3707 = vld [vmem:[%s3 + $0x908] sm:$0xff]
      %v3708 = vld [vmem:[%s3 + $0x910] sm:$0xff]
      %v3709 = vld [vmem:[%s3 + $0x918] sm:$0xff]
      %v3710 = vld [vmem:[%s3 + $0x920] sm:$0xff]
      %v3711 = vld [vmem:[%s3 + $0x928] sm:$0xff]
      %v3712 = vld [vmem:[%s3 + $0x930] sm:$0xff]
      %v3713 = vld [vmem:[%s3 + $0x938] sm:$0xff]
      %v3714 = vld [vmem:[%s3 + $0x940] sm:$0xff]
      %v3715 = vld [vmem:[%s3 + $0x948] sm:$0xff]
      %v3716 = vld [vmem:[%s3 + $0x950] sm:$0xff]
      %v3717 = vld [vmem:[%s3 + $0x958] sm:$0xff]
      %v3718 = vld [vmem:[%s3 + $0x960] sm:$0xff]
      %v3719 = vld [vmem:[%s3 + $0x968] sm:$0xff]
      %v3720 = vld [vmem:[%s3 + $0x970] sm:$0xff]
      %v3721 = vld [vmem:[%s3 + $0x978] sm:$0xff]
      %v3722 = vld [vmem:[%s3 + $0x980] sm:$0xff]
      %v3723 = vld [vmem:[%s3 + $0x988] sm:$0xff]
      %v3724 = vld [vmem:[%s3 + $0x990] sm:$0xff]
      %v3725 = vld [vmem:[%s3 + $0x998] sm:$0xff]
      %v3726 = vld [vmem:[%s3 + $0x9a0] sm:$0xff]
      %v3727 = vld [vmem:[%s3 + $0x9a8] sm:$0xff]
      %v3728 = vld [vmem:[%s3 + $0x9b0] sm:$0xff]
      %v3729 = vld [vmem:[%s3 + $0x9b8] sm:$0xff]
      %v3730 = vld [vmem:[%s3 + $0x9c0] sm:$0xff]
      %v3731 = vld [vmem:[%s3 + $0x9c8] sm:$0xff]
      %v3732 = vld [vmem:[%s3 + $0x9d0] sm:$0xff]
      %v3733 = vld [vmem:[%s3 + $0x9d8] sm:$0xff]
      %v3734 = vld [vmem:[%s3 + $0x9e0] sm:$0xff]
      %v3735 = vld [vmem:[%s3 + $0x9e8] sm:$0xff]
      %v3736 = vld [vmem:[%s3 + $0x9f0] sm:$0xff]
      %v3737 = vld [vmem:[%s3 + $0x9f8] sm:$0xff]
      %v3738 = vld [vmem:[%s3 + $0xa00] sm:$0xff]
      %v3739 = vld [vmem:[%s3 + $0xa08] sm:$0xff]
      %v3740 = vld [vmem:[%s3 + $0xa10] sm:$0xff]
      %v3741 = vld [vmem:[%s3 + $0xa18] sm:$0xff]
      %v3742 = vld [vmem:[%s3 + $0xa20] sm:$0xff]
      %v3743 = vld [vmem:[%s3 + $0xa28] sm:$0xff]
      %v3744 = vld [vmem:[%s3 + $0xa30] sm:$0xff]
      %v3745 = vld [vmem:[%s3 + $0xa38] sm:$0xff]
      %v3746 = vld [vmem:[%s3 + $0xa40] sm:$0xff]
      %v3747 = vld [vmem:[%s3 + $0xa48] sm:$0xff]
      %v3748 = vld [vmem:[%s3 + $0xa50] sm:$0xff]
      %v3749 = vld [vmem:[%s3 + $0xa58] sm:$0xff]
      %v3750 = vld [vmem:[%s3 + $0xa60] sm:$0xff]
      %v3751 = vld [vmem:[%s3 + $0xa68] sm:$0xff]
      %v3752 = vld [vmem:[%s3 + $0xa70] sm:$0xff]
      %v3753 = vld [vmem:[%s3 + $0xa78] sm:$0xff]
      %v3754 = vld [vmem:[%s3 + $0xa80] sm:$0xff]
      %v3755 = vld [vmem:[%s3 + $0xa88] sm:$0xff]
      %v3756 = vld [vmem:[%s3 + $0xa90] sm:$0xff]
      %v3757 = vld [vmem:[%s3 + $0xa98] sm:$0xff]
      %v3758 = vld [vmem:[%s3 + $0xaa0] sm:$0xff]
      %v3759 = vld [vmem:[%s3 + $0xaa8] sm:$0xff]
      %v3760 = vld [vmem:[%s3 + $0xab0] sm:$0xff]
      %v3761 = vld [vmem:[%s3 + $0xab8] sm:$0xff]
      %v3762 = vld [vmem:[%s3 + $0xac0] sm:$0xff]
      %v3763 = vld [vmem:[%s3 + $0xac8] sm:$0xff]
      %v3764 = vld [vmem:[%s3 + $0xad0] sm:$0xff]
      %v3765 = vld [vmem:[%s3 + $0xad8] sm:$0xff]
      %v3766 = vld [vmem:[%s3 + $0xae0] sm:$0xff]
      %v3767 = vld [vmem:[%s3 + $0xae8] sm:$0xff]
      %v3768 = vld [vmem:[%s3 + $0xaf0] sm:$0xff]
      %v3769 = vld [vmem:[%s3 + $0xaf8] sm:$0xff]
      %v3770 = vld [vmem:[%s3 + $0xb00] sm:$0xff]
      %v3771 = vld [vmem:[%s3 + $0xb08] sm:$0xff]
      %v3772 = vld [vmem:[%s3 + $0xb10] sm:$0xff]
      %v3773 = vld [vmem:[%s3 + $0xb18] sm:$0xff]
      %v3774 = vld [vmem:[%s3 + $0xb20] sm:$0xff]
      %v3775 = vld [vmem:[%s3 + $0xb28] sm:$0xff]
      %v3776 = vld [vmem:[%s3 + $0xb30] sm:$0xff]
      %v3777 = vld [vmem:[%s3 + $0xb38] sm:$0xff]
      %v3778 = vld [vmem:[%s3 + $0xb40] sm:$0xff]
      %v3779 = vld [vmem:[%s3 + $0xb48] sm:$0xff]
      %v3780 = vld [vmem:[%s3 + $0xb50] sm:$0xff]
      %v3781 = vld [vmem:[%s3 + $0xb58] sm:$0xff]
      %v3782 = vld [vmem:[%s3 + $0xb60] sm:$0xff]
      %v3783 = vld [vmem:[%s3 + $0xb68] sm:$0xff]
      %v3784 = vld [vmem:[%s3 + $0xb70] sm:$0xff]
      %v3785 = vld [vmem:[%s3 + $0xb78] sm:$0xff]
      %v3786 = vld [vmem:[%s3 + $0xb80] sm:$0xff]
      %v3787 = vld [vmem:[%s3 + $0xb88] sm:$0xff]
      %v3788 = vld [vmem:[%s3 + $0xb90] sm:$0xff]
      %v3789 = vld [vmem:[%s3 + $0xb98] sm:$0xff]
      %v3790 = vld [vmem:[%s3 + $0xba0] sm:$0xff]
      %v3791 = vld [vmem:[%s3 + $0xba8] sm:$0xff]
      %v3792 = vld [vmem:[%s3 + $0xbb0] sm:$0xff]
      %v3793 = vld [vmem:[%s3 + $0xbb8] sm:$0xff]
      %v3794 = vld [vmem:[%s3 + $0xbc0] sm:$0xff]
      %v3795 = vld [vmem:[%s3 + $0xbc8] sm:$0xff]
      %v3796 = vld [vmem:[%s3 + $0xbd0] sm:$0xff]
      %v3797 = vld [vmem:[%s3 + $0xbd8] sm:$0xff]
      %v3798 = vld [vmem:[%s3 + $0xbe0] sm:$0xff]
      %v3799 = vld [vmem:[%s3 + $0xbe8] sm:$0xff]
      %v3800 = vld [vmem:[%s3 + $0xbf0] sm:$0xff]
      %v3801 = vld [vmem:[%s3 + $0xbf8] sm:$0xff]
      %v3802 = vld [vmem:[%s3 + $0xc00] sm:$0xff]
      %v3803 = vld [vmem:[%s3 + $0xc08] sm:$0xff]
      %v3804 = vld [vmem:[%s3 + $0xc10] sm:$0xff]
      %v3805 = vld [vmem:[%s3 + $0xc18] sm:$0xff]
      %v3806 = vld [vmem:[%s3 + $0xc20] sm:$0xff]
      %v3807 = vld [vmem:[%s3 + $0xc28] sm:$0xff]
      %v3808 = vld [vmem:[%s3 + $0xc30] sm:$0xff]
      %v3809 = vld [vmem:[%s3 + $0xc38] sm:$0xff]
      %v3810 = vld [vmem:[%s3 + $0xc40] sm:$0xff]
      %v3811 = vld [vmem:[%s3 + $0xc48] sm:$0xff]
      %v3812 = vld [vmem:[%s3 + $0xc50] sm:$0xff]
      %v3813 = vld [vmem:[%s3 + $0xc58] sm:$0xff]
      %v3814 = vld [vmem:[%s3 + $0xc60] sm:$0xff]
      %v3815 = vld [vmem:[%s3 + $0xc68] sm:$0xff]
      %v3816 = vld [vmem:[%s3 + $0xc70] sm:$0xff]
      %v3817 = vld [vmem:[%s3 + $0xc78] sm:$0xff]
      %v3818 = vld [vmem:[%s3 + $0xc80] sm:$0xff]
      %v3819 = vld [vmem:[%s3 + $0xc88] sm:$0xff]
      %v3820 = vld [vmem:[%s3 + $0xc90] sm:$0xff]
      %v3821 = vld [vmem:[%s3 + $0xc98] sm:$0xff]
      %v3822 = vld [vmem:[%s3 + $0xca0] sm:$0xff]
      %v3823 = vld [vmem:[%s3 + $0xca8] sm:$0xff]
      %v3824 = vld [vmem:[%s3 + $0xcb0] sm:$0xff]
      %v3825 = vld [vmem:[%s3 + $0xcb8] sm:$0xff]
      %v3826 = vld [vmem:[%s3 + $0xcc0] sm:$0xff]
      %v3827 = vld [vmem:[%s3 + $0xcc8] sm:$0xff]
      %v3828 = vld [vmem:[%s3 + $0xcd0] sm:$0xff]
      %v3829 = vld [vmem:[%s3 + $0xcd8] sm:$0xff]
      %v3830 = vld [vmem:[%s3 + $0xce0] sm:$0xff]
      %v3831 = vld [vmem:[%s3 + $0xce8] sm:$0xff]
      %v3832 = vld [vmem:[%s3 + $0xcf0] sm:$0xff]
      %v3833 = vld [vmem:[%s3 + $0xcf8] sm:$0xff]
      %v3834 = vld [vmem:[%s3 + $0xd00] sm:$0xff]
      %v3835 = vld [vmem:[%s3 + $0xd08] sm:$0xff]
      %v3836 = vld [vmem:[%s3 + $0xd10] sm:$0xff]
      %v3837 = vld [vmem:[%s3 + $0xd18] sm:$0xff]
      %v3838 = vld [vmem:[%s3 + $0xd20] sm:$0xff]
      %v3839 = vld [vmem:[%s3 + $0xd28] sm:$0xff]
      %v3840 = vld [vmem:[%s3 + $0xd30] sm:$0xff]
      %v3841 = vld [vmem:[%s3 + $0xd38] sm:$0xff]
      %v3842 = vld [vmem:[%s3 + $0xd40] sm:$0xff]
      %v3843 = vld [vmem:[%s3 + $0xd48] sm:$0xff]
      %v3844 = vld [vmem:[%s3 + $0xd50] sm:$0xff]
      %v3845 = vld [vmem:[%s3 + $0xd58] sm:$0xff]
      %v3846 = vld [vmem:[%s3 + $0xd60] sm:$0xff]
      %v3847 = vld [vmem:[%s3 + $0xd68] sm:$0xff]
      %v3848 = vld [vmem:[%s3 + $0xd70] sm:$0xff]
      %v3849 = vld [vmem:[%s3 + $0xd78] sm:$0xff]
      %v3850 = vld [vmem:[%s3 + $0xd80] sm:$0xff]
      %v3851 = vld [vmem:[%s3 + $0xd88] sm:$0xff]
      %v3852 = vld [vmem:[%s3 + $0xd90] sm:$0xff]
      %v3853 = vld [vmem:[%s3 + $0xd98] sm:$0xff]
      %v3854 = vld [vmem:[%s3 + $0xda0] sm:$0xff]
      %v3855 = vld [vmem:[%s3 + $0xda8] sm:$0xff]
      %v3856 = vld [vmem:[%s3 + $0xdb0] sm:$0xff]
      %v3857 = vld [vmem:[%s3 + $0xdb8] sm:$0xff]
      %v3858 = vld [vmem:[%s3 + $0xdc0] sm:$0xff]
      %v3859 = vld [vmem:[%s3 + $0xdc8] sm:$0xff]
      %v3860 = vld [vmem:[%s3 + $0xdd0] sm:$0xff]
      %v3861 = vld [vmem:[%s3 + $0xdd8] sm:$0xff]
      %v3862 = vld [vmem:[%s3 + $0xde0] sm:$0xff]
      %v3863 = vld [vmem:[%s3 + $0xde8] sm:$0xff]
      %v3864 = vld [vmem:[%s3 + $0xdf0] sm:$0xff]
      %v3865 = vld [vmem:[%s3 + $0xdf8] sm:$0xff]
      %v3866 = vld [vmem:[%s3 + $0xe00] sm:$0xff]
      %v3867 = vld [vmem:[%s3 + $0xe08] sm:$0xff]
      %v3868 = vld [vmem:[%s3 + $0xe10] sm:$0xff]
      %v3869 = vld [vmem:[%s3 + $0xe18] sm:$0xff]
      %v3870 = vld [vmem:[%s3 + $0xe20] sm:$0xff]
      %v3871 = vld [vmem:[%s3 + $0xe28] sm:$0xff]
      %v3872 = vld [vmem:[%s3 + $0xe30] sm:$0xff]
      %v3873 = vld [vmem:[%s3 + $0xe38] sm:$0xff]
      %v3874 = vld [vmem:[%s3 + $0xe40] sm:$0xff]
      %v3875 = vld [vmem:[%s3 + $0xe48] sm:$0xff]
      %v3876 = vld [vmem:[%s3 + $0xe50] sm:$0xff]
      %v3877 = vld [vmem:[%s3 + $0xe58] sm:$0xff]
      %v3878 = vld [vmem:[%s3 + $0xe60] sm:$0xff]
      %v3879 = vld [vmem:[%s3 + $0xe68] sm:$0xff]
      %v3880 = vld [vmem:[%s3 + $0xe70] sm:$0xff]
      %v3881 = vld [vmem:[%s3 + $0xe78] sm:$0xff]
      %v3882 = vld [vmem:[%s3 + $0xe80] sm:$0xff]
      %v3883 = vld [vmem:[%s3 + $0xe88] sm:$0xff]
      %v3884 = vld [vmem:[%s3 + $0xe90] sm:$0xff]
      %v3885 = vld [vmem:[%s3 + $0xe98] sm:$0xff]
      %v3886 = vld [vmem:[%s3 + $0xea0] sm:$0xff]
      %v3887 = vld [vmem:[%s3 + $0xea8] sm:$0xff]
      %v3888 = vld [vmem:[%s3 + $0xeb0] sm:$0xff]
      %v3889 = vld [vmem:[%s3 + $0xeb8] sm:$0xff]
      %v3890 = vld [vmem:[%s3 + $0xec0] sm:$0xff]
      %v3891 = vld [vmem:[%s3 + $0xec8] sm:$0xff]
      %v3892 = vld [vmem:[%s3 + $0xed0] sm:$0xff]
      %v3893 = vld [vmem:[%s3 + $0xed8] sm:$0xff]
      %v3894 = vld [vmem:[%s3 + $0xee0] sm:$0xff]
      %v3895 = vld [vmem:[%s3 + $0xee8] sm:$0xff]
      %v3896 = vld [vmem:[%s3 + $0xef0] sm:$0xff]
      %v3897 = vld [vmem:[%s3 + $0xef8] sm:$0xff]
      %v3898 = vld [vmem:[%s3 + $0xf00] sm:$0xff]
      %v3899 = vld [vmem:[%s3 + $0xf08] sm:$0xff]
      %v3900 = vld [vmem:[%s3 + $0xf10] sm:$0xff]
      %v3901 = vld [vmem:[%s3 + $0xf18] sm:$0xff]
      %v3902 = vld [vmem:[%s3 + $0xf20] sm:$0xff]
      %v3903 = vld [vmem:[%s3 + $0xf28] sm:$0xff]
      %v3904 = vld [vmem:[%s3 + $0xf30] sm:$0xff]
      %v3905 = vld [vmem:[%s3 + $0xf38] sm:$0xff]
      %v3906 = vld [vmem:[%s3 + $0xf40] sm:$0xff]
      %v3907 = vld [vmem:[%s3 + $0xf48] sm:$0xff]
      %v3908 = vld [vmem:[%s3 + $0xf50] sm:$0xff]
      %v3909 = vld [vmem:[%s3 + $0xf58] sm:$0xff]
      %v3910 = vld [vmem:[%s3 + $0xf60] sm:$0xff]
      %v3911 = vld [vmem:[%s3 + $0xf68] sm:$0xff]
      %v3912 = vld [vmem:[%s3 + $0xf70] sm:$0xff]
      %v3913 = vld [vmem:[%s3 + $0xf78] sm:$0xff]
      %v3914 = vld [vmem:[%s3 + $0xf80] sm:$0xff]
      %v3915 = vld [vmem:[%s3 + $0xf88] sm:$0xff]
      %v3916 = vld [vmem:[%s3 + $0xf90] sm:$0xff]
      %v3917 = vld [vmem:[%s3 + $0xf98] sm:$0xff]
      %v3918 = vld [vmem:[%s3 + $0xfa0] sm:$0xff]
      %v3919 = vld [vmem:[%s3 + $0xfa8] sm:$0xff]
      %v3920 = vld [vmem:[%s3 + $0xfb0] sm:$0xff]
      %v3921 = vld [vmem:[%s3 + $0xfb8] sm:$0xff]
      %v3922 = vld [vmem:[%s3 + $0xfc0] sm:$0xff]
      %v3923 = vld [vmem:[%s3 + $0xfc8] sm:$0xff]
      %v3924 = vld [vmem:[%s3 + $0xfd0] sm:$0xff]
      %v3925 = vld [vmem:[%s3 + $0xfd8] sm:$0xff]
      %v3926 = vld [vmem:[%s3 + $0xfe0] sm:$0xff]
      %v3927 = vld [vmem:[%s3 + $0xfe8] sm:$0xff]
      %v3928 = vld [vmem:[%s3 + $0xff0] sm:$0xff]
      %v3929 = vld [vmem:[%s3 + $0xff8] sm:$0xff]
      %v3930 = vld [vmem:[%s4] sm:$0x3]
      %v3932 = vlaneseq
      %v3933 = vshrl.u32 %v3932, 7
      %v3934 = vsub.s32 0, %v3933
      %v3935 = vrot.slane %v3930, %v3934
      %v3936 = vlaneseq
      %v3937 = vshrl.u32 %v3936, 7
      %v3938 = vsub.s32 1, %v3937
      %v3939 = vrot.slane %v3930, %v3938
      %3942 = vmatprep.subr.mxu0 %v3419
      %3943 = vmatpush1.msra.mxu0 %v3418
      %3944 = vmatprep.subr.mxu0 %v3421
      %3945 = vmatpush1.msra.mxu0 %v3420
      %3946 = vmatprep.subr.mxu0 %v3423
      %3947 = vmatpush1.msra.mxu0 %v3422
      %3948 = vmatprep.subr.mxu0 %v3425
      %3949 = vmatpush1.msra.mxu0 %v3424
      %3950 = vmatprep.subr.mxu0 %v3427
      %3951 = vmatpush1.msra.mxu0 %v3426
      %3952 = vmatprep.subr.mxu0 %v3429
      %3953 = vmatpush1.msra.mxu0 %v3428
      %3954 = vmatprep.subr.mxu0 %v3431
      %3955 = vmatpush1.msra.mxu0 %v3430
      %3956 = vmatprep.subr.mxu0 %v3433
      %3957 = vmatpush1.msra.mxu0 %v3432
      %3958 = vmatprep.subr.mxu0 %v3435
      %3959 = vmatpush1.msra.mxu0 %v3434
      %3960 = vmatprep.subr.mxu0 %v3437
      %3961 = vmatpush1.msra.mxu0 %v3436
      %3962 = vmatprep.subr.mxu0 %v3439
      %3963 = vmatpush1.msra.mxu0 %v3438
      %3964 = vmatprep.subr.mxu0 %v3441
      %3965 = vmatpush1.msra.mxu0 %v3440
      %3966 = vmatprep.subr.mxu0 %v3443
      %3967 = vmatpush1.msra.mxu0 %v3442
      %3968 = vmatprep.subr.mxu0 %v3445
      %3969 = vmatpush1.msra.mxu0 %v3444
      %3970 = vmatprep.subr.mxu0 %v3447
      %3971 = vmatpush1.msra.mxu0 %v3446
      %3972 = vmatprep.subr.mxu0 %v3449
      %3973 = vmatpush1.msra.mxu0 %v3448
      %3974 = vmatprep.subr.mxu0 %v3451
      %3975 = vmatpush1.msra.mxu0 %v3450
      %3976 = vmatprep.subr.mxu0 %v3453
      %3977 = vmatpush1.msra.mxu0 %v3452
      %3978 = vmatprep.subr.mxu0 %v3455
      %3979 = vmatpush1.msra.mxu0 %v3454
      %3980 = vmatprep.subr.mxu0 %v3457
      %3981 = vmatpush1.msra.mxu0 %v3456
      %3982 = vmatprep.subr.mxu0 %v3459
      %3983 = vmatpush1.msra.mxu0 %v3458
      %3984 = vmatprep.subr.mxu0 %v3461
      %3985 = vmatpush1.msra.mxu0 %v3460
      %3986 = vmatprep.subr.mxu0 %v3463
      %3987 = vmatpush1.msra.mxu0 %v3462
      %3988 = vmatprep.subr.mxu0 %v3465
      %3989 = vmatpush1.msra.mxu0 %v3464
      %3990 = vmatprep.subr.mxu0 %v3467
      %3991 = vmatpush1.msra.mxu0 %v3466
      %3992 = vmatprep.subr.mxu0 %v3469
      %3993 = vmatpush1.msra.mxu0 %v3468
      %3994 = vmatprep.subr.mxu0 %v3471
      %3995 = vmatpush1.msra.mxu0 %v3470
      %3996 = vmatprep.subr.mxu0 %v3473
      %3997 = vmatpush1.msra.mxu0 %v3472
      %3998 = vmatprep.subr.mxu0 %v3475
      %3999 = vmatpush1.msra.mxu0 %v3474
      %4000 = vmatprep.subr.mxu0 %v3477
      %4001 = vmatpush1.msra.mxu0 %v3476
      %4002 = vmatprep.subr.mxu0 %v3479
      %4003 = vmatpush1.msra.mxu0 %v3478
      %4004 = vmatprep.subr.mxu0 %v3481
      %4005 = vmatpush1.msra.mxu0 %v3480
      %4006 = vmatprep.mubr.f32.mxu0 %v3403
      %4007 = vmatmul.mubr.f32.gmra.mrb[0].mxu0 %v3402
      %v4008 = vpop.f32.mrb[0].mxu0
      %v4009 = vadd.f32 %v3935, %v4008
      %v4010 = vpop.f32.mrb[0].mxu0
      %v4011 = vadd.f32 %v3939, %v4010
      %4012 = vdwg.mxu0
      %4013 = vmatprep.subr.mxu0 %v3483
      %4014 = vmatpush1.msra.mxu0 %v3482
      %4015 = vmatprep.subr.mxu0 %v3485
      %4016 = vmatpush1.msra.mxu0 %v3484
      %4017 = vmatprep.subr.mxu0 %v3487
      %4018 = vmatpush1.msra.mxu0 %v3486
      %4019 = vmatprep.subr.mxu0 %v3489
      %4020 = vmatpush1.msra.mxu0 %v3488
      %4021 = vmatprep.subr.mxu0 %v3491
      %4022 = vmatpush1.msra.mxu0 %v3490
      %4023 = vmatprep.subr.mxu0 %v3493
      %4024 = vmatpush1.msra.mxu0 %v3492
      %4025 = vmatprep.subr.mxu0 %v3495
      %4026 = vmatpush1.msra.mxu0 %v3494
      %4027 = vmatprep.subr.mxu0 %v3497
      %4028 = vmatpush1.msra.mxu0 %v3496
      %4029 = vmatprep.subr.mxu0 %v3499
      %4030 = vmatpush1.msra.mxu0 %v3498
      %4031 = vmatprep.subr.mxu0 %v3501
      %4032 = vmatpush1.msra.mxu0 %v3500
      %4033 = vmatprep.subr.mxu0 %v3503
      %4034 = vmatpush1.msra.mxu0 %v3502
      %4035 = vmatprep.subr.mxu0 %v3505
      %4036 = vmatpush1.msra.mxu0 %v3504
      %4037 = vmatprep.subr.mxu0 %v3507
      %4038 = vmatpush1.msra.mxu0 %v3506
      %4039 = vmatprep.subr.mxu0 %v3509
      %4040 = vmatpush1.msra.mxu0 %v3508
      %4041 = vmatprep.subr.mxu0 %v3511
      %4042 = vmatpush1.msra.mxu0 %v3510
      %4043 = vmatprep.subr.mxu0 %v3513
      %4044 = vmatpush1.msra.mxu0 %v3512
      %4045 = vmatprep.subr.mxu0 %v3515
      %4046 = vmatpush1.msra.mxu0 %v3514
      %4047 = vmatprep.subr.mxu0 %v3517
      %4048 = vmatpush1.msra.mxu0 %v3516
      %4049 = vmatprep.subr.mxu0 %v3519
      %4050 = vmatpush1.msra.mxu0 %v3518
      %4051 = vmatprep.subr.mxu0 %v3521
      %4052 = vmatpush1.msra.mxu0 %v3520
      %4053 = vmatprep.subr.mxu0 %v3523
      %4054 = vmatpush1.msra.mxu0 %v3522
      %4055 = vmatprep.subr.mxu0 %v3525
      %4056 = vmatpush1.msra.mxu0 %v3524
      %4057 = vmatprep.subr.mxu0 %v3527
      %4058 = vmatpush1.msra.mxu0 %v3526
      %4059 = vmatprep.subr.mxu0 %v3529
      %4060 = vmatpush1.msra.mxu0 %v3528
      %4061 = vmatprep.subr.mxu0 %v3531
      %4062 = vmatpush1.msra.mxu0 %v3530
      %4063 = vmatprep.subr.mxu0 %v3533
      %4064 = vmatpush1.msra.mxu0 %v3532
      %4065 = vmatprep.subr.mxu0 %v3535
      %4066 = vmatpush1.msra.mxu0 %v3534
      %4067 = vmatprep.subr.mxu0 %v3537
      %4068 = vmatpush1.msra.mxu0 %v3536
      %4069 = vmatprep.subr.mxu0 %v3539
      %4070 = vmatpush1.msra.mxu0 %v3538
      %4071 = vmatprep.subr.mxu0 %v3541
      %4072 = vmatpush1.msra.mxu0 %v3540
      %4073 = vmatprep.subr.mxu0 %v3543
      %4074 = vmatpush1.msra.mxu0 %v3542
      %4075 = vmatprep.subr.mxu0 %v3545
      %4076 = vmatpush1.msra.mxu0 %v3544
      %4077 = vmatprep.mubr.f32.mxu0 %v3405
      %4078 = vmatmul.mubr.f32.gmra.mrb[0].mxu0 %v3404
      %v4079 = vpop.f32.mrb[0].mxu0
      %v4080 = vadd.f32 %v4009, %v4079
      %v4081 = vpop.f32.mrb[0].mxu0
      %v4082 = vadd.f32 %v4011, %v4081
      %4083 = vdwg.mxu0
      %4084 = vmatprep.subr.mxu0 %v3547
      %4085 = vmatpush1.msra.mxu0 %v3546
      %4086 = vmatprep.subr.mxu0 %v3549
      %4087 = vmatpush1.msra.mxu0 %v3548
      %4088 = vmatprep.subr.mxu0 %v3551
      %4089 = vmatpush1.msra.mxu0 %v3550
      %4090 = vmatprep.subr.mxu0 %v3553
      %4091 = vmatpush1.msra.mxu0 %v3552
      %4092 = vmatprep.subr.mxu0 %v3555
      %4093 = vmatpush1.msra.mxu0 %v3554
      %4094 = vmatprep.subr.mxu0 %v3557
      %4095 = vmatpush1.msra.mxu0 %v3556
      %4096 = vmatprep.subr.mxu0 %v3559
      %4097 = vmatpush1.msra.mxu0 %v3558
      %4098 = vmatprep.subr.mxu0 %v3561
      %4099 = vmatpush1.msra.mxu0 %v3560
      %4100 = vmatprep.subr.mxu0 %v3563
      %4101 = vmatpush1.msra.mxu0 %v3562
      %4102 = vmatprep.subr.mxu0 %v3565
      %4103 = vmatpush1.msra.mxu0 %v3564
      %4104 = vmatprep.subr.mxu0 %v3567
      %4105 = vmatpush1.msra.mxu0 %v3566
      %4106 = vmatprep.subr.mxu0 %v3569
      %4107 = vmatpush1.msra.mxu0 %v3568
      %4108 = vmatprep.subr.mxu0 %v3571
      %4109 = vmatpush1.msra.mxu0 %v3570
      %4110 = vmatprep.subr.mxu0 %v3573
      %4111 = vmatpush1.msra.mxu0 %v3572
      %4112 = vmatprep.subr.mxu0 %v3575
      %4113 = vmatpush1.msra.mxu0 %v3574
      %4114 = vmatprep.subr.mxu0 %v3577
      %4115 = vmatpush1.msra.mxu0 %v3576
      %4116 = vmatprep.subr.mxu0 %v3579
      %4117 = vmatpush1.msra.mxu0 %v3578
      %4118 = vmatprep.subr.mxu0 %v3581
      %4119 = vmatpush1.msra.mxu0 %v3580
      %4120 = vmatprep.subr.mxu0 %v3583
      %4121 = vmatpush1.msra.mxu0 %v3582
      %4122 = vmatprep.subr.mxu0 %v3585
      %4123 = vmatpush1.msra.mxu0 %v3584
      %4124 = vmatprep.subr.mxu0 %v3587
      %4125 = vmatpush1.msra.mxu0 %v3586
      %4126 = vmatprep.subr.mxu0 %v3589
      %4127 = vmatpush1.msra.mxu0 %v3588
      %4128 = vmatprep.subr.mxu0 %v3591
      %4129 = vmatpush1.msra.mxu0 %v3590
      %4130 = vmatprep.subr.mxu0 %v3593
      %4131 = vmatpush1.msra.mxu0 %v3592
      %4132 = vmatprep.subr.mxu0 %v3595
      %4133 = vmatpush1.msra.mxu0 %v3594
      %4134 = vmatprep.subr.mxu0 %v3597
      %4135 = vmatpush1.msra.mxu0 %v3596
      %4136 = vmatprep.subr.mxu0 %v3599
      %4137 = vmatpush1.msra.mxu0 %v3598
      %4138 = vmatprep.subr.mxu0 %v3601
      %4139 = vmatpush1.msra.mxu0 %v3600
      %4140 = vmatprep.subr.mxu0 %v3603
      %4141 = vmatpush1.msra.mxu0 %v3602
      %4142 = vmatprep.subr.mxu0 %v3605
      %4143 = vmatpush1.msra.mxu0 %v3604
      %4144 = vmatprep.subr.mxu0 %v3607
      %4145 = vmatpush1.msra.mxu0 %v3606
      %4146 = vmatprep.subr.mxu0 %v3609
      %4147 = vmatpush1.msra.mxu0 %v3608
      %4148 = vmatprep.mubr.f32.mxu0 %v3407
      %4149 = vmatmul.mubr.f32.gmra.mrb[0].mxu0 %v3406
      %v4150 = vpop.f32.mrb[0].mxu0
      %v4151 = vadd.f32 %v4080, %v4150
      %v4152 = vpop.f32.mrb[0].mxu0
      %v4153 = vadd.f32 %v4082, %v4152
      %4154 = vdwg.mxu0
      %4155 = vmatprep.subr.mxu0 %v3611
      %4156 = vmatpush1.msra.mxu0 %v3610
      %4157 = vmatprep.subr.mxu0 %v3613
      %4158 = vmatpush1.msra.mxu0 %v3612
      %4159 = vmatprep.subr.mxu0 %v3615
      %4160 = vmatpush1.msra.mxu0 %v3614
      %4161 = vmatprep.subr.mxu0 %v3617
      %4162 = vmatpush1.msra.mxu0 %v3616
      %4163 = vmatprep.subr.mxu0 %v3619
      %4164 = vmatpush1.msra.mxu0 %v3618
      %4165 = vmatprep.subr.mxu0 %v3621
      %4166 = vmatpush1.msra.mxu0 %v3620
      %4167 = vmatprep.subr.mxu0 %v3623
      %4168 = vmatpush1.msra.mxu0 %v3622
      %4169 = vmatprep.subr.mxu0 %v3625
      %4170 = vmatpush1.msra.mxu0 %v3624
      %4171 = vmatprep.subr.mxu0 %v3627
      %4172 = vmatpush1.msra.mxu0 %v3626
      %4173 = vmatprep.subr.mxu0 %v3629
      %4174 = vmatpush1.msra.mxu0 %v3628
      %4175 = vmatprep.subr.mxu0 %v3631
      %4176 = vmatpush1.msra.mxu0 %v3630
      %4177 = vmatprep.subr.mxu0 %v3633
      %4178 = vmatpush1.msra.mxu0 %v3632
      %4179 = vmatprep.subr.mxu0 %v3635
      %4180 = vmatpush1.msra.mxu0 %v3634
      %4181 = vmatprep.subr.mxu0 %v3637
      %4182 = vmatpush1.msra.mxu0 %v3636
      %4183 = vmatprep.subr.mxu0 %v3639
      %4184 = vmatpush1.msra.mxu0 %v3638
      %4185 = vmatprep.subr.mxu0 %v3641
      %4186 = vmatpush1.msra.mxu0 %v3640
      %4187 = vmatprep.subr.mxu0 %v3643
      %4188 = vmatpush1.msra.mxu0 %v3642
      %4189 = vmatprep.subr.mxu0 %v3645
      %4190 = vmatpush1.msra.mxu0 %v3644
      %4191 = vmatprep.subr.mxu0 %v3647
      %4192 = vmatpush1.msra.mxu0 %v3646
      %4193 = vmatprep.subr.mxu0 %v3649
      %4194 = vmatpush1.msra.mxu0 %v3648
      %4195 = vmatprep.subr.mxu0 %v3651
      %4196 = vmatpush1.msra.mxu0 %v3650
      %4197 = vmatprep.subr.mxu0 %v3653
      %4198 = vmatpush1.msra.mxu0 %v3652
      %4199 = vmatprep.subr.mxu0 %v3655
      %4200 = vmatpush1.msra.mxu0 %v3654
      %4201 = vmatprep.subr.mxu0 %v3657
      %4202 = vmatpush1.msra.mxu0 %v3656
      %4203 = vmatprep.subr.mxu0 %v3659
      %4204 = vmatpush1.msra.mxu0 %v3658
      %4205 = vmatprep.subr.mxu0 %v3661
      %4206 = vmatpush1.msra.mxu0 %v3660
      %4207 = vmatprep.subr.mxu0 %v3663
      %4208 = vmatpush1.msra.mxu0 %v3662
      %4209 = vmatprep.subr.mxu0 %v3665
      %4210 = vmatpush1.msra.mxu0 %v3664
      %4211 = vmatprep.subr.mxu0 %v3667
      %4212 = vmatpush1.msra.mxu0 %v3666
      %4213 = vmatprep.subr.mxu0 %v3669
      %4214 = vmatpush1.msra.mxu0 %v3668
      %4215 = vmatprep.subr.mxu0 %v3671
      %4216 = vmatpush1.msra.mxu0 %v3670
      %4217 = vmatprep.subr.mxu0 %v3673
      %4218 = vmatpush1.msra.mxu0 %v3672
      %4219 = vmatprep.mubr.f32.mxu0 %v3409
      %4220 = vmatmul.mubr.f32.gmra.mrb[0].mxu0 %v3408
      %v4221 = vpop.f32.mrb[0].mxu0
      %v4222 = vadd.f32 %v4151, %v4221
      %v4223 = vpop.f32.mrb[0].mxu0
      %v4224 = vadd.f32 %v4153, %v4223
      %4225 = vdwg.mxu0
      %4226 = vmatprep.subr.mxu0 %v3675
      %4227 = vmatpush1.msra.mxu0 %v3674
      %4228 = vmatprep.subr.mxu0 %v3677
      %4229 = vmatpush1.msra.mxu0 %v3676
      %4230 = vmatprep.subr.mxu0 %v3679
      %4231 = vmatpush1.msra.mxu0 %v3678
      %4232 = vmatprep.subr.mxu0 %v3681
      %4233 = vmatpush1.msra.mxu0 %v3680
      %4234 = vmatprep.subr.mxu0 %v3683
      %4235 = vmatpush1.msra.mxu0 %v3682
      %4236 = vmatprep.subr.mxu0 %v3685
      %4237 = vmatpush1.msra.mxu0 %v3684
      %4238 = vmatprep.subr.mxu0 %v3687
      %4239 = vmatpush1.msra.mxu0 %v3686
      %4240 = vmatprep.subr.mxu0 %v3689
      %4241 = vmatpush1.msra.mxu0 %v3688
      %4242 = vmatprep.subr.mxu0 %v3691
      %4243 = vmatpush1.msra.mxu0 %v3690
      %4244 = vmatprep.subr.mxu0 %v3693
      %4245 = vmatpush1.msra.mxu0 %v3692
      %4246 = vmatprep.subr.mxu0 %v3695
      %4247 = vmatpush1.msra.mxu0 %v3694
      %4248 = vmatprep.subr.mxu0 %v3697
      %4249 = vmatpush1.msra.mxu0 %v3696
      %4250 = vmatprep.subr.mxu0 %v3699
      %4251 = vmatpush1.msra.mxu0 %v3698
      %4252 = vmatprep.subr.mxu0 %v3701
      %4253 = vmatpush1.msra.mxu0 %v3700
      %4254 = vmatprep.subr.mxu0 %v3703
      %4255 = vmatpush1.msra.mxu0 %v3702
      %4256 = vmatprep.subr.mxu0 %v3705
      %4257 = vmatpush1.msra.mxu0 %v3704
      %4258 = vmatprep.subr.mxu0 %v3707
      %4259 = vmatpush1.msra.mxu0 %v3706
      %4260 = vmatprep.subr.mxu0 %v3709
      %4261 = vmatpush1.msra.mxu0 %v3708
      %4262 = vmatprep.subr.mxu0 %v3711
      %4263 = vmatpush1.msra.mxu0 %v3710
      %4264 = vmatprep.subr.mxu0 %v3713
      %4265 = vmatpush1.msra.mxu0 %v3712
      %4266 = vmatprep.subr.mxu0 %v3715
      %4267 = vmatpush1.msra.mxu0 %v3714
      %4268 = vmatprep.subr.mxu0 %v3717
      %4269 = vmatpush1.msra.mxu0 %v3716
      %4270 = vmatprep.subr.mxu0 %v3719
      %4271 = vmatpush1.msra.mxu0 %v3718
      %4272 = vmatprep.subr.mxu0 %v3721
      %4273 = vmatpush1.msra.mxu0 %v3720
      %4274 = vmatprep.subr.mxu0 %v3723
      %4275 = vmatpush1.msra.mxu0 %v3722
      %4276 = vmatprep.subr.mxu0 %v3725
      %4277 = vmatpush1.msra.mxu0 %v3724
      %4278 = vmatprep.subr.mxu0 %v3727
      %4279 = vmatpush1.msra.mxu0 %v3726
      %4280 = vmatprep.subr.mxu0 %v3729
      %4281 = vmatpush1.msra.mxu0 %v3728
      %4282 = vmatprep.subr.mxu0 %v3731
      %4283 = vmatpush1.msra.mxu0 %v3730
      %4284 = vmatprep.subr.mxu0 %v3733
      %4285 = vmatpush1.msra.mxu0 %v3732
      %4286 = vmatprep.subr.mxu0 %v3735
      %4287 = vmatpush1.msra.mxu0 %v3734
      %4288 = vmatprep.subr.mxu0 %v3737
      %4289 = vmatpush1.msra.mxu0 %v3736
      %4290 = vmatprep.mubr.f32.mxu0 %v3411
      %4291 = vmatmul.mubr.f32.gmra.mrb[0].mxu0 %v3410
      %v4292 = vpop.f32.mrb[0].mxu0
      %v4293 = vadd.f32 %v4222, %v4292
      %v4294 = vpop.f32.mrb[0].mxu0
      %v4295 = vadd.f32 %v4224, %v4294
      %4296 = vdwg.mxu0
      %4297 = vmatprep.subr.mxu0 %v3739
      %4298 = vmatpush1.msra.mxu0 %v3738
      %4299 = vmatprep.subr.mxu0 %v3741
      %4300 = vmatpush1.msra.mxu0 %v3740
      %4301 = vmatprep.subr.mxu0 %v3743
      %4302 = vmatpush1.msra.mxu0 %v3742
      %4303 = vmatprep.subr.mxu0 %v3745
      %4304 = vmatpush1.msra.mxu0 %v3744
      %4305 = vmatprep.subr.mxu0 %v3747
      %4306 = vmatpush1.msra.mxu0 %v3746
      %4307 = vmatprep.subr.mxu0 %v3749
      %4308 = vmatpush1.msra.mxu0 %v3748
      %4309 = vmatprep.subr.mxu0 %v3751
      %4310 = vmatpush1.msra.mxu0 %v3750
      %4311 = vmatprep.subr.mxu0 %v3753
      %4312 = vmatpush1.msra.mxu0 %v3752
      %4313 = vmatprep.subr.mxu0 %v3755
      %4314 = vmatpush1.msra.mxu0 %v3754
      %4315 = vmatprep.subr.mxu0 %v3757
      %4316 = vmatpush1.msra.mxu0 %v3756
      %4317 = vmatprep.subr.mxu0 %v3759
      %4318 = vmatpush1.msra.mxu0 %v3758
      %4319 = vmatprep.subr.mxu0 %v3761
      %4320 = vmatpush1.msra.mxu0 %v3760
      %4321 = vmatprep.subr.mxu0 %v3763
      %4322 = vmatpush1.msra.mxu0 %v3762
      %4323 = vmatprep.subr.mxu0 %v3765
      %4324 = vmatpush1.msra.mxu0 %v3764
      %4325 = vmatprep.subr.mxu0 %v3767
      %4326 = vmatpush1.msra.mxu0 %v3766
      %4327 = vmatprep.subr.mxu0 %v3769
      %4328 = vmatpush1.msra.mxu0 %v3768
      %4329 = vmatprep.subr.mxu0 %v3771
      %4330 = vmatpush1.msra.mxu0 %v3770
      %4331 = vmatprep.subr.mxu0 %v3773
      %4332 = vmatpush1.msra.mxu0 %v3772
      %4333 = vmatprep.subr.mxu0 %v3775
      %4334 = vmatpush1.msra.mxu0 %v3774
      %4335 = vmatprep.subr.mxu0 %v3777
      %4336 = vmatpush1.msra.mxu0 %v3776
      %4337 = vmatprep.subr.mxu0 %v3779
      %4338 = vmatpush1.msra.mxu0 %v3778
      %4339 = vmatprep.subr.mxu0 %v3781
      %4340 = vmatpush1.msra.mxu0 %v3780
      %4341 = vmatprep.subr.mxu0 %v3783
      %4342 = vmatpush1.msra.mxu0 %v3782
      %4343 = vmatprep.subr.mxu0 %v3785
      %4344 = vmatpush1.msra.mxu0 %v3784
      %4345 = vmatprep.subr.mxu0 %v3787
      %4346 = vmatpush1.msra.mxu0 %v3786
      %4347 = vmatprep.subr.mxu0 %v3789
      %4348 = vmatpush1.msra.mxu0 %v3788
      %4349 = vmatprep.subr.mxu0 %v3791
      %4350 = vmatpush1.msra.mxu0 %v3790
      %4351 = vmatprep.subr.mxu0 %v3793
      %4352 = vmatpush1.msra.mxu0 %v3792
      %4353 = vmatprep.subr.mxu0 %v3795
      %4354 = vmatpush1.msra.mxu0 %v3794
      %4355 = vmatprep.subr.mxu0 %v3797
      %4356 = vmatpush1.msra.mxu0 %v3796
      %4357 = vmatprep.subr.mxu0 %v3799
      %4358 = vmatpush1.msra.mxu0 %v3798
      %4359 = vmatprep.subr.mxu0 %v3801
      %4360 = vmatpush1.msra.mxu0 %v3800
      %4361 = vmatprep.mubr.f32.mxu0 %v3413
      %4362 = vmatmul.mubr.f32.gmra.mrb[0].mxu0 %v3412
      %v4363 = vpop.f32.mrb[0].mxu0
      %v4364 = vadd.f32 %v4293, %v4363
      %v4365 = vpop.f32.mrb[0].mxu0
      %v4366 = vadd.f32 %v4295, %v4365
      %4367 = vdwg.mxu0
      %4368 = vmatprep.subr.mxu0 %v3803
      %4369 = vmatpush1.msra.mxu0 %v3802
      %4370 = vmatprep.subr.mxu0 %v3805
      %4371 = vmatpush1.msra.mxu0 %v3804
      %4372 = vmatprep.subr.mxu0 %v3807
      %4373 = vmatpush1.msra.mxu0 %v3806
      %4374 = vmatprep.subr.mxu0 %v3809
      %4375 = vmatpush1.msra.mxu0 %v3808
      %4376 = vmatprep.subr.mxu0 %v3811
      %4377 = vmatpush1.msra.mxu0 %v3810
      %4378 = vmatprep.subr.mxu0 %v3813
      %4379 = vmatpush1.msra.mxu0 %v3812
      %4380 = vmatprep.subr.mxu0 %v3815
      %4381 = vmatpush1.msra.mxu0 %v3814
      %4382 = vmatprep.subr.mxu0 %v3817
      %4383 = vmatpush1.msra.mxu0 %v3816
      %4384 = vmatprep.subr.mxu0 %v3819
      %4385 = vmatpush1.msra.mxu0 %v3818
      %4386 = vmatprep.subr.mxu0 %v3821
      %4387 = vmatpush1.msra.mxu0 %v3820
      %4388 = vmatprep.subr.mxu0 %v3823
      %4389 = vmatpush1.msra.mxu0 %v3822
      %4390 = vmatprep.subr.mxu0 %v3825
      %4391 = vmatpush1.msra.mxu0 %v3824
      %4392 = vmatprep.subr.mxu0 %v3827
      %4393 = vmatpush1.msra.mxu0 %v3826
      %4394 = vmatprep.subr.mxu0 %v3829
      %4395 = vmatpush1.msra.mxu0 %v3828
      %4396 = vmatprep.subr.mxu0 %v3831
      %4397 = vmatpush1.msra.mxu0 %v3830
      %4398 = vmatprep.subr.mxu0 %v3833
      %4399 = vmatpush1.msra.mxu0 %v3832
      %4400 = vmatprep.subr.mxu0 %v3835
      %4401 = vmatpush1.msra.mxu0 %v3834
      %4402 = vmatprep.subr.mxu0 %v3837
      %4403 = vmatpush1.msra.mxu0 %v3836
      %4404 = vmatprep.subr.mxu0 %v3839
      %4405 = vmatpush1.msra.mxu0 %v3838
      %4406 = vmatprep.subr.mxu0 %v3841
      %4407 = vmatpush1.msra.mxu0 %v3840
      %4408 = vmatprep.subr.mxu0 %v3843
      %4409 = vmatpush1.msra.mxu0 %v3842
      %4410 = vmatprep.subr.mxu0 %v3845
      %4411 = vmatpush1.msra.mxu0 %v3844
      %4412 = vmatprep.subr.mxu0 %v3847
      %4413 = vmatpush1.msra.mxu0 %v3846
      %4414 = vmatprep.subr.mxu0 %v3849
      %4415 = vmatpush1.msra.mxu0 %v3848
      %4416 = vmatprep.subr.mxu0 %v3851
      %4417 = vmatpush1.msra.mxu0 %v3850
      %4418 = vmatprep.subr.mxu0 %v3853
      %4419 = vmatpush1.msra.mxu0 %v3852
      %4420 = vmatprep.subr.mxu0 %v3855
      %4421 = vmatpush1.msra.mxu0 %v3854
      %4422 = vmatprep.subr.mxu0 %v3857
      %4423 = vmatpush1.msra.mxu0 %v3856
      %4424 = vmatprep.subr.mxu0 %v3859
      %4425 = vmatpush1.msra.mxu0 %v3858
      %4426 = vmatprep.subr.mxu0 %v3861
      %4427 = vmatpush1.msra.mxu0 %v3860
      %4428 = vmatprep.subr.mxu0 %v3863
      %4429 = vmatpush1.msra.mxu0 %v3862
      %4430 = vmatprep.subr.mxu0 %v3865
      %4431 = vmatpush1.msra.mxu0 %v3864
      %4432 = vmatprep.mubr.f32.mxu0 %v3415
      %4433 = vmatmul.mubr.f32.gmra.mrb[0].mxu0 %v3414
      %v4434 = vpop.f32.mrb[0].mxu0
      %v4435 = vadd.f32 %v4364, %v4434
      %v4436 = vpop.f32.mrb[0].mxu0
      %v4437 = vadd.f32 %v4366, %v4436
      %4438 = vdwg.mxu0
      %4439 = vmatprep.subr.mxu0 %v3867
      %4440 = vmatpush1.msra.mxu0 %v3866
      %4441 = vmatprep.subr.mxu0 %v3869
      %4442 = vmatpush1.msra.mxu0 %v3868
      %4443 = vmatprep.subr.mxu0 %v3871
      %4444 = vmatpush1.msra.mxu0 %v3870
      %4445 = vmatprep.subr.mxu0 %v3873
      %4446 = vmatpush1.msra.mxu0 %v3872
      %4447 = vmatprep.subr.mxu0 %v3875
      %4448 = vmatpush1.msra.mxu0 %v3874
      %4449 = vmatprep.subr.mxu0 %v3877
      %4450 = vmatpush1.msra.mxu0 %v3876
      %4451 = vmatprep.subr.mxu0 %v3879
      %4452 = vmatpush1.msra.mxu0 %v3878
      %4453 = vmatprep.subr.mxu0 %v3881
      %4454 = vmatpush1.msra.mxu0 %v3880
      %4455 = vmatprep.subr.mxu0 %v3883
      %4456 = vmatpush1.msra.mxu0 %v3882
      %4457 = vmatprep.subr.mxu0 %v3885
      %4458 = vmatpush1.msra.mxu0 %v3884
      %4459 = vmatprep.subr.mxu0 %v3887
      %4460 = vmatpush1.msra.mxu0 %v3886
      %4461 = vmatprep.subr.mxu0 %v3889
      %4462 = vmatpush1.msra.mxu0 %v3888
      %4463 = vmatprep.subr.mxu0 %v3891
      %4464 = vmatpush1.msra.mxu0 %v3890
      %4465 = vmatprep.subr.mxu0 %v3893
      %4466 = vmatpush1.msra.mxu0 %v3892
      %4467 = vmatprep.subr.mxu0 %v3895
      %4468 = vmatpush1.msra.mxu0 %v3894
      %4469 = vmatprep.subr.mxu0 %v3897
      %4470 = vmatpush1.msra.mxu0 %v3896
      %4471 = vmatprep.subr.mxu0 %v3899
      %4472 = vmatpush1.msra.mxu0 %v3898
      %4473 = vmatprep.subr.mxu0 %v3901
      %4474 = vmatpush1.msra.mxu0 %v3900
      %4475 = vmatprep.subr.mxu0 %v3903
      %4476 = vmatpush1.msra.mxu0 %v3902
      %4477 = vmatprep.subr.mxu0 %v3905
      %4478 = vmatpush1.msra.mxu0 %v3904
      %4479 = vmatprep.subr.mxu0 %v3907
      %4480 = vmatpush1.msra.mxu0 %v3906
      %4481 = vmatprep.subr.mxu0 %v3909
      %4482 = vmatpush1.msra.mxu0 %v3908
      %4483 = vmatprep.subr.mxu0 %v3911
      %4484 = vmatpush1.msra.mxu0 %v3910
      %4485 = vmatprep.subr.mxu0 %v3913
      %4486 = vmatpush1.msra.mxu0 %v3912
      %4487 = vmatprep.subr.mxu0 %v3915
      %4488 = vmatpush1.msra.mxu0 %v3914
      %4489 = vmatprep.subr.mxu0 %v3917
      %4490 = vmatpush1.msra.mxu0 %v3916
      %4491 = vmatprep.subr.mxu0 %v3919
      %4492 = vmatpush1.msra.mxu0 %v3918
      %4493 = vmatprep.subr.mxu0 %v3921
      %4494 = vmatpush1.msra.mxu0 %v3920
      %4495 = vmatprep.subr.mxu0 %v3923
      %4496 = vmatpush1.msra.mxu0 %v3922
      %4497 = vmatprep.subr.mxu0 %v3925
      %4498 = vmatpush1.msra.mxu0 %v3924
      %4499 = vmatprep.subr.mxu0 %v3927
      %4500 = vmatpush1.msra.mxu0 %v3926
      %4501 = vmatprep.subr.mxu0 %v3929
      %4502 = vmatpush1.msra.mxu0 %v3928
      %4503 = vmatprep.mubr.f32.mxu0 %v3417
      %4504 = vmatmul.mubr.f32.gmra.mrb[0].mxu0 %v3416
      %v4505 = vpop.f32.mrb[0].mxu0
      %v4506 = vadd.f32 %v4435, %v4505
      %v4507 = vpop.f32.mrb[0].mxu0
      %v4508 = vadd.f32 %v4437, %v4507
      %4509 = vdwg.mxu0
      %4510 = vst [vmem:[%s224] sm:$0xff] %v4506
      %4511 = vst [vmem:[%s224 + $0x8] sm:$0xff] %v4508
      %p4512 = scmp.lt.s32.totalorder %s16, 1
      %s4513 = scalar_select %p4512, %s16, 1
      %s4514 = smul.addr %s4513, 2
      %s4515 = smul.addr %s4514, 8
      %s4516 = scalar_lea.vmem %s5, %s4515
      // Predicated region
      $region48: #{deepfake_detector_forward.2} parent=39 // pred_check
        %p4517 = pneg %p144
      $region49: #{deepfake_detector_forward.2} parent=39 // pred_check_branch
        %4519 = sbr.rel (%p4517) target = $region51
      $region50: #{deepfake_detector_forward.2} parent=39 // pred_region
        _
      $region51: #{deepfake_detector_forward.2} parent=39 // pred_fallthru
        _
    $region40: #{deepfake_detector_forward.2} parent=5 // pred_fallthru
      _
    %p4520 = scmp.le.s32.totalorder 2, %s11
    // Predicated region
    $region52: #{deepfake_detector_forward.2} parent=5 // pred_check
      %p4521 = pneg %p4520
    $region53: #{deepfake_detector_forward.2} parent=5 // pred_check_branch
      %4523 = sbr.rel (%p4521) target = $region55
    $region54: #{deepfake_detector_forward.2} parent=5 // pred_region
      %s4524 = ssub.s32 %s11, 2
      // Predicated region
      $region56: #{deepfake_detector_forward.2} parent=54 // pred_check
        %p4525 = pneg %p150
      $region57: #{deepfake_detector_forward.2} parent=54 // pred_check_branch
        %4527 = sbr.rel (%p4525) target = $region59
      $region58: #{deepfake_detector_forward.2} parent=54 // pred_region
        %p4528 = scmp.lt.s32.totalorder %s17, 1
        %s4529 = scalar_select %p4528, %s17, 1
        %s4530 = smul.addr %s4529, 2
        %s4531 = smul.addr %s4530, 8
        %s4532 = scalar_lea.vmem %s5, %s4531
      $region59: #{deepfake_detector_forward.2} parent=54 // pred_fallthru
        _
    $region55: #{deepfake_detector_forward.2} parent=5 // pred_fallthru
      _
  $region6: #{deepfake_detector_forward.2} parent=0 // loop_footer
    %s15 = sadd.s32 1, %s11
  $region7: #{deepfake_detector_forward.2} parent=0 // loop_footer_branch
    %10 = sbr.rel target = $region3
  $region8: #{deepfake_detector_forward.2} parent=0 // loop_exit
    _

</llo_original>
